<compile_context>
chip_gen: v7x
topology: tpu7x:2x2x1
jax: 0.10.0
libtpu: 0.0.40
codegen_flags: <defaults>
</compile_context>

<pallas_src>
import functools

import numpy as np
import jax
import jax.numpy as jnp
from jax import lax
from jax.experimental import pallas as pl
from jax.experimental.pallas import tpu as pltpu

CLOUD_ENC_DIM = 128
INIT_DIM = 32
PLANES = (32, 64, 128, 128)
STRIDES = (1, 1, 1, 2)
DILATIONS = (1, 2, 4, 8)
BN_EPS = 1e-5

MAX_ROW_TILE = 512
VMEM_LIMIT_BYTES = 48 * 1024 * 1024


def _round_up(x, m):
    return (x + m - 1) // m * m


def _row_pad(n):
    """Padded row count: multiple of 128 (lane-dense one-hot), tile-multiple if larger."""
    n128 = _round_up(max(n, 128), 128)
    if n128 <= MAX_ROW_TILE:
        return n128
    return _round_up(n128, MAX_ROW_TILE)


def _row_tile(np_pad):
    """Row tile: <= MAX_ROW_TILE and guaranteeing >= 2 grid steps (v7x megacore)."""
    tile = min(np_pad, MAX_ROW_TILE)
    if np_pad // tile < 2:
        tile = max(tile // 2, 8)
    assert np_pad % tile == 0 and tile % 8 == 0
    return tile


def _compiler_params():
    return pltpu.CompilerParams(
        dimension_semantics=("parallel",),
        vmem_limit_bytes=VMEM_LIMIT_BYTES)


# ---------------------------------------------------------------------------
# Pallas kernels
# ---------------------------------------------------------------------------

def _gather_conv_kernel(k_vol, c_in, apply_relu, has_residual, *refs):
    """Sparse conv: in-kernel one-hot row gather against the VMEM-resident feature
    table, (tile, K*Cin) slab built in VMEM scratch, then one deep MXU contraction.
    BN scale is pre-folded into the weights; epilogue adds bias (+residual) (+ReLU)."""
    if has_residual:
        nbr_ref, x_ref, w_ref, b_ref, res_ref, out_ref, slab_ref = refs
    else:
        nbr_ref, x_ref, w_ref, b_ref, out_ref, slab_ref = refs

    x = x_ref[...]                                   # (N_in_pad, Cin) bf16, resident
    nbr = nbr_ref[...]                               # (tile, K) int32, -1 = missing
    n_in = x.shape[0]
    iota = lax.broadcasted_iota(jnp.int32, (1, n_in), 1)

    for k in range(k_vol):
        # one-hot row selection; missing neighbors (-1) select nothing -> zero row
        sel = jnp.where(nbr[:, k:k + 1] == iota, 1.0, 0.0).astype(jnp.bfloat16)
        g = jnp.dot(sel, x, preferred_element_type=jnp.float32)       # (tile, Cin)
        slab_ref[:, k * c_in:(k + 1) * c_in] = g.astype(jnp.bfloat16)

    y = jnp.dot(slab_ref[...], w_ref[...], preferred_element_type=jnp.float32)
    y = y + b_ref[...]
    if has_residual:
        y = y + res_ref[...].astype(jnp.float32)
    if apply_relu:
        y = jnp.maximum(y, 0.0)
    out_ref[...] = y.astype(out_ref.dtype)


def _dense_conv_kernel(apply_relu, x_ref, w_ref, b_ref, out_ref):
    """1x1 conv over an identity kernel map: plain row-tiled matmul, no gather."""
    y = jnp.dot(x_ref[...], w_ref[...], preferred_element_type=jnp.float32)
    y = y + b_ref[...]
    if apply_relu:
        y = jnp.maximum(y, 0.0)
    out_ref[...] = y.astype(out_ref.dtype)


def _avg_pool_kernel(k_vol, nbr_ref, x_ref, out_ref):
    """MinkowskiAvgPooling(k=2,s=2): in-kernel 0/1 adjacency + matmul + 1/count scale."""
    x = x_ref[...]                                   # (N_in_pad, C) bf16, resident
    nbr = nbr_ref[...]                               # (tile, K) int32
    n_in = x.shape[0]
    tile = nbr.shape[0]
    iota = lax.broadcasted_iota(jnp.int32, (1, n_in), 1)

    adj = jnp.zeros((tile, n_in), jnp.float32)
    cnt = jnp.zeros((tile, 1), jnp.float32)
    for k in range(k_vol):
        col = nbr[:, k:k + 1]
        adj = adj + jnp.where(col == iota, 1.0, 0.0)
        cnt = cnt + jnp.where(col >= 0, 1.0, 0.0)

    s = jnp.dot(adj.astype(jnp.bfloat16), x, preferred_element_type=jnp.float32)
    inv = jnp.where(cnt > 0.0, 1.0 / jnp.maximum(cnt, 1.0), 0.0)
    out_ref[...] = (s * inv).astype(out_ref.dtype)


# ---------------------------------------------------------------------------
# Pallas wrappers
# ---------------------------------------------------------------------------

def sparse_conv_bn(x, nbr, w, scale, bias, residual=None, relu=True,
                   out_dtype=jnp.bfloat16):
    """x: (N_in_pad, Cin) bf16 feature table; nbr: (Np_pad, K) int32 map (-1 missing)."""
    x = jnp.asarray(x, jnp.bfloat16)
    n_in_pad, c_in_p = x.shape
    nbr_j = jnp.asarray(nbr, jnp.int32)
    np_pad, k_vol = nbr_j.shape

    w = jnp.asarray(w, jnp.float32)                           # (K, Cin_raw, Cout)
    c_out = w.shape[-1]
    if w.shape[1] != c_in_p:                                  # channel-pad (3-ch stem)
        w = jnp.pad(w, ((0, 0), (0, c_in_p - w.shape[1]), (0, 0)))
    # fold BN scale into the weights at trace time; kernel epilogue is bias-only
    w = w * jnp.asarray(scale, jnp.float32).reshape(1, 1, c_out)
    w_flat = w.reshape(k_vol * c_in_p, c_out).astype(jnp.bfloat16)
    bias2 = jnp.asarray(bias, jnp.float32).reshape(1, c_out)

    tile = _row_tile(np_pad)
    grid = (np_pad // tile,)

    in_specs = [
        pl.BlockSpec((tile, k_vol), lambda i: (i, 0)),             # neighbor map (tiled)
        pl.BlockSpec((n_in_pad, c_in_p), lambda i: (0, 0)),        # feature table (resident)
        pl.BlockSpec((k_vol * c_in_p, c_out), lambda i: (0, 0)),   # weights (resident)
        pl.BlockSpec((1, c_out), lambda i: (0, 0)),                # bias
    ]
    args = [nbr_j, x, w_flat, bias2]
    has_residual = residual is not None
    if has_residual:
        in_specs.append(pl.BlockSpec((tile, c_out), lambda i: (i, 0)))
        args.append(jnp.asarray(residual, jnp.bfloat16))

    kernel = functools.partial(_gather_conv_kernel, k_vol, c_in_p, relu, has_residual)
    return pl.pallas_call(
        kernel,
        out_shape=jax.ShapeDtypeStruct((np_pad, c_out), out_dtype),
        grid_spec=pltpu.PrefetchScalarGridSpec(
            num_scalar_prefetch=0,
            grid=grid,
            in_specs=in_specs,
            out_specs=pl.BlockSpec((tile, c_out), lambda i: (i, 0)),
            scratch_shapes=[pltpu.VMEM((tile, k_vol * c_in_p), jnp.bfloat16)]),
        compiler_params=_compiler_params(),
    )(*args)


def dense_conv_bn(x, w2d, scale, bias, relu=False, out_dtype=jnp.bfloat16):
    """1x1 conv over an identity kernel map: feed the bf16 activations straight in."""
    x = jnp.asarray(x, jnp.bfloat16)
    np_pad, c_in = x.shape
    w2d = jnp.asarray(w2d, jnp.float32)                       # (Cin, Cout)
    c_out = w2d.shape[-1]
    if scale is not None:
        w2d = w2d * jnp.asarray(scale, jnp.float32).reshape(1, c_out)
    w_bf = w2d.astype(jnp.bfloat16)
    bias2 = jnp.asarray(bias, jnp.float32).reshape(1, c_out)

    tile = _row_tile(np_pad)
    grid = (np_pad // tile,)

    kernel = functools.partial(_dense_conv_kernel, relu)
    return pl.pallas_call(
        kernel,
        out_shape=jax.ShapeDtypeStruct((np_pad, c_out), out_dtype),
        grid_spec=pltpu.PrefetchScalarGridSpec(
            num_scalar_prefetch=0,
            grid=grid,
            in_specs=[pl.BlockSpec((tile, c_in), lambda i: (i, 0)),
                      pl.BlockSpec((c_in, c_out), lambda i: (0, 0)),
                      pl.BlockSpec((1, c_out), lambda i: (0, 0))],
            out_specs=pl.BlockSpec((tile, c_out), lambda i: (i, 0))),
        compiler_params=_compiler_params(),
    )(x, w_bf, bias2)


def sparse_avg_pool(x, nbr):
    x = jnp.asarray(x, jnp.bfloat16)
    n_in_pad, c = x.shape
    nbr_j = jnp.asarray(nbr, jnp.int32)
    np_pad, k_vol = nbr_j.shape

    tile = _row_tile(np_pad)
    grid = (np_pad // tile,)

    kernel = functools.partial(_avg_pool_kernel, k_vol)
    return pl.pallas_call(
        kernel,
        out_shape=jax.ShapeDtypeStruct((np_pad, c), jnp.bfloat16),
        grid_spec=pltpu.PrefetchScalarGridSpec(
            num_scalar_prefetch=0,
            grid=grid,
            in_specs=[pl.BlockSpec((tile, k_vol), lambda i: (i, 0)),
                      pl.BlockSpec((n_in_pad, c), lambda i: (0, 0))],
            out_specs=pl.BlockSpec((tile, c), lambda i: (i, 0))),
        compiler_params=_compiler_params(),
    )(nbr_j, x)


# ---------------------------------------------------------------------------
# Kernel-map (neighbor map) construction — numpy glue on integer coordinates
# coords: (N, 4) int32 = [batch, x, y, z]
# ---------------------------------------------------------------------------

def _coord_lut(coords):
    return {tuple(int(v) for v in c): i for i, c in enumerate(coords)}


def _offsets(kernel_size):
    if kernel_size == 1:
        return [(0, 0, 0)]
    r = kernel_size // 2
    rng = range(-r, r + 1)
    return [(a, b, c) for a in rng for b in rng for c in rng]


def build_conv_nbr(in_coords, out_coords, kernel_size, dilation, in_tensor_stride,
                   n_pad_rows):
    lut = _coord_lut(in_coords)
    offs = _offsets(kernel_size)
    nbr = np.full((n_pad_rows, len(offs)), -1, dtype=np.int32)
    step = dilation * in_tensor_stride
    for j, oc in enumerate(out_coords):
        b, x, y, z = (int(v) for v in oc)
        for k, (dx, dy, dz) in enumerate(offs):
            hit = lut.get((b, x + dx * step, y + dy * step, z + dz * step))
            if hit is not None:
                nbr[j, k] = hit
    return nbr


def build_pool_nbr(in_coords, out_coords, in_tensor_stride, n_pad_rows):
    lut = _coord_lut(in_coords)
    offs = [(a, b, c) for a in (0, 1) for b in (0, 1) for c in (0, 1)]
    nbr = np.full((n_pad_rows, len(offs)), -1, dtype=np.int32)
    for j, oc in enumerate(out_coords):
        b, x, y, z = (int(v) for v in oc)
        for k, (dx, dy, dz) in enumerate(offs):
            hit = lut.get((b, x + dx * in_tensor_stride, y + dy * in_tensor_stride,
                           z + dz * in_tensor_stride))
            if hit is not None:
                nbr[j, k] = hit
    return nbr


def strided_out_coords(in_coords, in_tensor_stride, stride):
    new_ts = in_tensor_stride * stride
    sp = (in_coords[:, 1:] // new_ts) * new_ts
    out = np.concatenate([in_coords[:, :1], sp], axis=1)
    return np.unique(out, axis=0)


# ---------------------------------------------------------------------------
# Deterministic parameter init (synthetic, inference-mode folded BatchNorm)
# ---------------------------------------------------------------------------

def _conv_w(key, k, cin, cout):
    fan_in = k * cin
    return (jax.random.normal(key, (k, cin, cout), jnp.float32)
            * np.sqrt(2.0 / fan_in)).astype(jnp.float32)


def _bn(key, c):
    kg, kb = jax.random.split(key)
    gamma = 1.0 + 0.01 * jax.random.normal(kg, (c,), jnp.float32)
    beta = 0.01 * jax.random.normal(kb, (c,), jnp.float32)
    running_mean = jnp.zeros((c,), jnp.float32)
    running_var = jnp.ones((c,), jnp.float32)
    scale = gamma / jnp.sqrt(running_var + BN_EPS)
    bias = beta - running_mean * scale
    return scale, bias


def make_params(seed=42):
    key = jax.random.PRNGKey(seed)
    keys = jax.random.split(key, 40)
    p = {'conv1_w': _conv_w(keys[0], 27, 3, INIT_DIM), 'bn1': _bn(keys[1], INIT_DIM)}

    def block(kbase, cin, cout, need_ds):
        ks = jax.random.split(kbase, 6)
        blk = {
            'w1': _conv_w(ks[0], 27, cin, cout), 'sb1': _bn(ks[1], cout),
            'w2': _conv_w(ks[2], 27, cout, cout), 'sb2': _bn(ks[3], cout),
        }
        if need_ds:
            blk['ds_w'] = _conv_w(ks[4], 1, cin, cout)
            blk['ds_sb'] = _bn(ks[5], cout)
        return blk

    cins = (INIT_DIM,) + PLANES[:3]
    for i in range(4):
        need_ds = (STRIDES[i] != 1) or (cins[i] != PLANES[i])
        p[f'block{i + 1}'] = block(keys[2 + i], cins[i], PLANES[i], need_ds)

    p['final_w'] = _conv_w(keys[10], 1, PLANES[3], CLOUD_ENC_DIM)
    p['final_b'] = 0.01 * jax.random.normal(keys[11], (CLOUD_ENC_DIM,), jnp.float32)
    return p


# ---------------------------------------------------------------------------
# SparseEncoder forward
# ---------------------------------------------------------------------------

def sparse_encoder_forward(coords_np, feats, params):
    coords0 = np.asarray(coords_np, np.int64)
    n0 = coords0.shape[0]
    p0 = _row_pad(n0)

    # --- build kernel maps (host glue) ---------------------------------------------
    ts = 1
    nbr_c1 = build_conv_nbr(coords0, coords0, 3, 1, ts, p0)           # conv1 (stem)
    coords1 = strided_out_coords(coords0, ts, 2)                      # avg pool k=2 s=2
    n1 = coords1.shape[0]
    p1 = _row_pad(n1)
    nbr_pool = build_pool_nbr(coords0, coords1, ts, p1)
    ts = 2

    nbr_l1 = build_conv_nbr(coords1, coords1, 3, DILATIONS[0], ts, p1)
    nbr_l2 = build_conv_nbr(coords1, coords1, 3, DILATIONS[1], ts, p1)
    nbr_l3 = build_conv_nbr(coords1, coords1, 3, DILATIONS[2], ts, p1)

    coords2 = strided_out_coords(coords1, ts, STRIDES[3])             # layer4 stride 2
    n2 = coords2.shape[0]
    p2 = _row_pad(n2)
    nbr_l4a = build_conv_nbr(coords1, coords2, 3, DILATIONS[3], ts, p2)
    nbr_l4b = build_conv_nbr(coords2, coords2, 3, DILATIONS[3], ts * 2, p2)
    nbr_l4ds = build_conv_nbr(coords1, coords2, 1, 1, ts, p2)

    # --- stem: row-pad + channel-pad the 3-dim features to bf16 ---------------------
    feats_f = jnp.asarray(feats, jnp.float32)
    c0 = feats_f.shape[1]
    c0p = _round_up(max(c0, 8), 8)
    x0 = jnp.zeros((p0, c0p), jnp.bfloat16).at[:n0, :c0].set(feats_f.astype(jnp.bfloat16))

    x = sparse_conv_bn(x0, nbr_c1, params['conv1_w'], *params['bn1'], relu=True)
    x = sparse_avg_pool(x, nbr_pool)

    # --- layer1 (no downsample) ------------------------------------------------------
    b = params['block1']
    out = sparse_conv_bn(x, nbr_l1, b['w1'], *b['sb1'], relu=True)
    x = sparse_conv_bn(out, nbr_l1, b['w2'], *b['sb2'], residual=x, relu=True)

    # --- layer2 / layer3 (channel change -> 1x1 identity-map downsample, dense path) --
    for b, nbr in ((params['block2'], nbr_l2), (params['block3'], nbr_l3)):
        res = dense_conv_bn(x, b['ds_w'][0], b['ds_sb'][0], b['ds_sb'][1], relu=False)
        out = sparse_conv_bn(x, nbr, b['w1'], *b['sb1'], relu=True)
        x = sparse_conv_bn(out, nbr, b['w2'], *b['sb2'], residual=res, relu=True)

    # --- layer4 (stride 2; 1x1 downsample is a strided/permuting map -> K=1 gather) ---
    b = params['block4']
    res = sparse_conv_bn(x, nbr_l4ds, b['ds_w'], *b['ds_sb'], relu=False)
    out = sparse_conv_bn(x, nbr_l4a, b['w1'], *b['sb1'], relu=True)
    x = sparse_conv_bn(out, nbr_l4b, b['w2'], *b['sb2'], residual=res, relu=True)

    # --- final 1x1 conv to cloud_enc_dim (identity map -> dense path, f32 output) ------
    x = dense_conv_bn(x, params['final_w'][0], None, params['final_b'],
                      relu=False, out_dtype=jnp.float32)

    out_feats = x[:n2]          # strip row padding -> (N_out, cloud_enc_dim)
    return coords2, out_feats


# ---------------------------------------------------------------------------

if __name__ == "__main__":
    key = jax.random.PRNGKey(0)
    k_c0, k_c1, k_f = jax.random.split(key, 3)

    # synthetic sparse input: 2 batches x 48 unique voxels in a 16^3 grid, 3-dim feats
    grid = 16
    pts = 48
    lin0 = np.asarray(jax.random.permutation(k_c0, grid ** 3)[:pts])
    lin1 = np.asarray(jax.random.permutation(k_c1, grid ** 3)[:pts])

    def to_xyz(lin):
        return np.stack([lin // (grid * grid), (lin // grid) % grid, lin % grid], axis=1)

    coords = np.concatenate(
        [np.concatenate([np.zeros((pts, 1), np.int64), to_xyz(lin0)], axis=1),
         np.concatenate([np.ones((pts, 1), np.int64), to_xyz(lin1)], axis=1)],
        axis=0).astype(np.int32)                                   # (96, 4) [b, x, y, z]
    feats = jax.random.normal(k_f, (coords.shape[0], 3), jnp.float32)   # (96, 3)

    params = make_params(seed=42)
    out_coords, out_feats = sparse_encoder_forward(coords, feats, params)
    out_feats = jax.block_until_ready(out_feats)

    assert out_feats.shape[1] == CLOUD_ENC_DIM
    assert out_feats.shape[0] == out_coords.shape[0]
    assert bool(jnp.all(jnp.isfinite(out_feats)))
    print("KERNEL_OK")
</pallas_src>

<mosaic_0001>
module attributes {stable_mosaic.version = 11 : i64} {
  func.func @_gather_conv_kernel(%arg0: i32, %arg1: memref<64x27xi32, #tpu.memory_space<vmem>>, %arg2: memref<128x8xbf16, #tpu.memory_space<vmem>>, %arg3: memref<216x32xbf16, #tpu.memory_space<vmem>>, %arg4: memref<1x32xf32, #tpu.memory_space<vmem>>, %arg5: memref<64x32xbf16, #tpu.memory_space<vmem>>, %arg6: memref<64x216xbf16, #tpu.memory_space<vmem>>) attributes {dimension_semantics = [#tpu.dimension_semantics<parallel>], iteration_bounds = array<i64: 2>, scalar_prefetch = 0 : i64, scratch_operands = 1 : i64, tpu.core_type = #tpu.core_type<tc>, window_params = [{transform_indices = @transform_0, window_bounds = array<i64: 64, 27>}, {pipeline_mode = #tpu.pipeline_mode<synchronous>, transform_indices = @transform_1, window_bounds = array<i64: 128, 8>}, {pipeline_mode = #tpu.pipeline_mode<synchronous>, transform_indices = @transform_2, window_bounds = array<i64: 216, 32>}, {pipeline_mode = #tpu.pipeline_mode<synchronous>, transform_indices = @transform_3, window_bounds = array<i64: 1, 32>}, {transform_indices = @transform_4, window_bounds = array<i64: 64, 32>}]} {
    %c0 = arith.constant 0 : index
    %c0_0 = arith.constant 0 : index
    %0 = vector.load %arg2[%c0, %c0_0] : memref<128x8xbf16, #tpu.memory_space<vmem>>, vector<128x8xbf16>
    %c0_1 = arith.constant 0 : index
    %c0_2 = arith.constant 0 : index
    %1 = vector.load %arg1[%c0_1, %c0_2] : memref<64x27xi32, #tpu.memory_space<vmem>>, vector<64x27xi32>
    %2 = tpu.iota {dimensions = array<i32: 1>} : vector<1x128xi32>
    %3 = vector.extract_strided_slice %1 {offsets = [0, 0], sizes = [64, 1], strides = [1, 1]} : vector<64x27xi32> to vector<64x1xi32>
    %4 = vector.broadcast %3 : vector<64x1xi32> to vector<64x128xi32>
    %5 = vector.broadcast %2 : vector<1x128xi32> to vector<64x128xi32>
    %6 = arith.cmpi eq, %4, %5 : vector<64x128xi32>
    %cst = arith.constant 1.000000e+00 : f32
    %cst_3 = arith.constant 0.000000e+00 : f32
    %7 = vector.broadcast %cst : f32 to vector<64x128xf32>
    %8 = vector.broadcast %cst_3 : f32 to vector<64x128xf32>
    %9 = arith.select %6, %7, %8 : vector<64x128xi1>, vector<64x128xf32>
    %10 = arith.truncf %9 : vector<64x128xf32> to vector<64x128xbf16>
    %cst_4 = arith.constant dense<0.000000e+00> : vector<64x8xf32>
    %11 = tpu.matmul %10, %0, %cst_4 {dimension_numbers = #tpu.dot_dimension_numbers<[1], [0], [0], [1], [0, 0, 1, 1], [], []>} : vector<64x128xbf16>, vector<128x8xbf16>, vector<64x8xf32> -> vector<64x8xf32>
    %12 = arith.truncf %11 : vector<64x8xf32> to vector<64x8xbf16>
    %c0_5 = arith.constant 0 : index
    %c0_6 = arith.constant 0 : index
    %13 = vector.load %arg6[%c0_5, %c0_6] : memref<64x216xbf16, #tpu.memory_space<vmem>>, vector<64x8xbf16>
    tpu.vector_store %arg6[%c0_5, %c0_6], %12 {strides = array<i32>} : memref<64x216xbf16, #tpu.memory_space<vmem>>, vector<64x8xbf16>,
    %14 = vector.extract_strided_slice %1 {offsets = [0, 1], sizes = [64, 1], strides = [1, 1]} : vector<64x27xi32> to vector<64x1xi32>
    %15 = vector.broadcast %14 : vector<64x1xi32> to vector<64x128xi32>
    %16 = vector.broadcast %2 : vector<1x128xi32> to vector<64x128xi32>
    %17 = arith.cmpi eq, %15, %16 : vector<64x128xi32>
    %cst_7 = arith.constant 1.000000e+00 : f32
    %cst_8 = arith.constant 0.000000e+00 : f32
    %18 = vector.broadcast %cst_7 : f32 to vector<64x128xf32>
    %19 = vector.broadcast %cst_8 : f32 to vector<64x128xf32>
    %20 = arith.select %17, %18, %19 : vector<64x128xi1>, vector<64x128xf32>
    %21 = arith.truncf %20 : vector<64x128xf32> to vector<64x128xbf16>
    %cst_9 = arith.constant dense<0.000000e+00> : vector<64x8xf32>
    %22 = tpu.matmul %21, %0, %cst_9 {dimension_numbers = #tpu.dot_dimension_numbers<[1], [0], [0], [1], [0, 0, 1, 1], [], []>} : vector<64x128xbf16>, vector<128x8xbf16>, vector<64x8xf32> -> vector<64x8xf32>
    %23 = arith.truncf %22 : vector<64x8xf32> to vector<64x8xbf16>
    %c0_10 = arith.constant 0 : index
    %c8 = arith.constant 8 : index
    %24 = vector.load %arg6[%c0_10, %c8] : memref<64x216xbf16, #tpu.memory_space<vmem>>, vector<64x8xbf16>
    tpu.vector_store %arg6[%c0_10, %c8], %23 {strides = array<i32>} : memref<64x216xbf16, #tpu.memory_space<vmem>>, vector<64x8xbf16>,
    %25 = vector.extract_strided_slice %1 {offsets = [0, 2], sizes = [64, 1], strides = [1, 1]} : vector<64x27xi32> to vector<64x1xi32>
    %26 = vector.broadcast %25 : vector<64x1xi32> to vector<64x128xi32>
    %27 = vector.broadcast %2 : vector<1x128xi32> to vector<64x128xi32>
    %28 = arith.cmpi eq, %26, %27 : vector<64x128xi32>
    %cst_11 = arith.constant 1.000000e+00 : f32
    %cst_12 = arith.constant 0.000000e+00 : f32
    %29 = vector.broadcast %cst_11 : f32 to vector<64x128xf32>
    %30 = vector.broadcast %cst_12 : f32 to vector<64x128xf32>
    %31 = arith.select %28, %29, %30 : vector<64x128xi1>, vector<64x128xf32>
    %32 = arith.truncf %31 : vector<64x128xf32> to vector<64x128xbf16>
    %cst_13 = arith.constant dense<0.000000e+00> : vector<64x8xf32>
    %33 = tpu.matmul %32, %0, %cst_13 {dimension_numbers = #tpu.dot_dimension_numbers<[1], [0], [0], [1], [0, 0, 1, 1], [], []>} : vector<64x128xbf16>, vector<128x8xbf16>, vector<64x8xf32> -> vector<64x8xf32>
    %34 = arith.truncf %33 : vector<64x8xf32> to vector<64x8xbf16>
    %c0_14 = arith.constant 0 : index
    %c16 = arith.constant 16 : index
    %35 = vector.load %arg6[%c0_14, %c16] : memref<64x216xbf16, #tpu.memory_space<vmem>>, vector<64x8xbf16>
    tpu.vector_store %arg6[%c0_14, %c16], %34 {strides = array<i32>} : memref<64x216xbf16, #tpu.memory_space<vmem>>, vector<64x8xbf16>,
    %36 = vector.extract_strided_slice %1 {offsets = [0, 3], sizes = [64, 1], strides = [1, 1]} : vector<64x27xi32> to vector<64x1xi32>
    %37 = vector.broadcast %36 : vector<64x1xi32> to vector<64x128xi32>
    %38 = vector.broadcast %2 : vector<1x128xi32> to vector<64x128xi32>
    %39 = arith.cmpi eq, %37, %38 : vector<64x128xi32>
    %cst_15 = arith.constant 1.000000e+00 : f32
    %cst_16 = arith.constant 0.000000e+00 : f32
    %40 = vector.broadcast %cst_15 : f32 to vector<64x128xf32>
    %41 = vector.broadcast %cst_16 : f32 to vector<64x128xf32>
    %42 = arith.select %39, %40, %41 : vector<64x128xi1>, vector<64x128xf32>
    %43 = arith.truncf %42 : vector<64x128xf32> to vector<64x128xbf16>
    %cst_17 = arith.constant dense<0.000000e+00> : vector<64x8xf32>
    %44 = tpu.matmul %43, %0, %cst_17 {dimension_numbers = #tpu.dot_dimension_numbers<[1], [0], [0], [1], [0, 0, 1, 1], [], []>} : vector<64x128xbf16>, vector<128x8xbf16>, vector<64x8xf32> -> vector<64x8xf32>
    %45 = arith.truncf %44 : vector<64x8xf32> to vector<64x8xbf16>
    %c0_18 = arith.constant 0 : index
    %c24 = arith.constant 24 : index
    %46 = vector.load %arg6[%c0_18, %c24] : memref<64x216xbf16, #tpu.memory_space<vmem>>, vector<64x8xbf16>
    tpu.vector_store %arg6[%c0_18, %c24], %45 {strides = array<i32>} : memref<64x216xbf16, #tpu.memory_space<vmem>>, vector<64x8xbf16>,
    %47 = vector.extract_strided_slice %1 {offsets = [0, 4], sizes = [64, 1], strides = [1, 1]} : vector<64x27xi32> to vector<64x1xi32>
    %48 = vector.broadcast %47 : vector<64x1xi32> to vector<64x128xi32>
    %49 = vector.broadcast %2 : vector<1x128xi32> to vector<64x128xi32>
    %50 = arith.cmpi eq, %48, %49 : vector<64x128xi32>
    %cst_19 = arith.constant 1.000000e+00 : f32
    %cst_20 = arith.constant 0.000000e+00 : f32
    %51 = vector.broadcast %cst_19 : f32 to vector<64x128xf32>
    %52 = vector.broadcast %cst_20 : f32 to vector<64x128xf32>
    %53 = arith.select %50, %51, %52 : vector<64x128xi1>, vector<64x128xf32>
    %54 = arith.truncf %53 : vector<64x128xf32> to vector<64x128xbf16>
    %cst_21 = arith.constant dense<0.000000e+00> : vector<64x8xf32>
    %55 = tpu.matmul %54, %0, %cst_21 {dimension_numbers = #tpu.dot_dimension_numbers<[1], [0], [0], [1], [0, 0, 1, 1], [], []>} : vector<64x128xbf16>, vector<128x8xbf16>, vector<64x8xf32> -> vector<64x8xf32>
    %56 = arith.truncf %55 : vector<64x8xf32> to vector<64x8xbf16>
    %c0_22 = arith.constant 0 : index
    %c32 = arith.constant 32 : index
    %57 = vector.load %arg6[%c0_22, %c32] : memref<64x216xbf16, #tpu.memory_space<vmem>>, vector<64x8xbf16>
    tpu.vector_store %arg6[%c0_22, %c32], %56 {strides = array<i32>} : memref<64x216xbf16, #tpu.memory_space<vmem>>, vector<64x8xbf16>,
    %58 = vector.extract_strided_slice %1 {offsets = [0, 5], sizes = [64, 1], strides = [1, 1]} : vector<64x27xi32> to vector<64x1xi32>
    %59 = vector.broadcast %58 : vector<64x1xi32> to vector<64x128xi32>
    %60 = vector.broadcast %2 : vector<1x128xi32> to vector<64x128xi32>
    %61 = arith.cmpi eq, %59, %60 : vector<64x128xi32>
    %cst_23 = arith.constant 1.000000e+00 : f32
    %cst_24 = arith.constant 0.000000e+00 : f32
    %62 = vector.broadcast %cst_23 : f32 to vector<64x128xf32>
    %63 = vector.broadcast %cst_24 : f32 to vector<64x128xf32>
    %64 = arith.select %61, %62, %63 : vector<64x128xi1>, vector<64x128xf32>
    %65 = arith.truncf %64 : vector<64x128xf32> to vector<64x128xbf16>
    %cst_25 = arith.constant dense<0.000000e+00> : vector<64x8xf32>
    %66 = tpu.matmul %65, %0, %cst_25 {dimension_numbers = #tpu.dot_dimension_numbers<[1], [0], [0], [1], [0, 0, 1, 1], [], []>} : vector<64x128xbf16>, vector<128x8xbf16>, vector<64x8xf32> -> vector<64x8xf32>
    %67 = arith.truncf %66 : vector<64x8xf32> to vector<64x8xbf16>
    %c0_26 = arith.constant 0 : index
    %c40 = arith.constant 40 : index
    %68 = vector.load %arg6[%c0_26, %c40] : memref<64x216xbf16, #tpu.memory_space<vmem>>, vector<64x8xbf16>
    tpu.vector_store %arg6[%c0_26, %c40], %67 {strides = array<i32>} : memref<64x216xbf16, #tpu.memory_space<vmem>>, vector<64x8xbf16>,
    %69 = vector.extract_strided_slice %1 {offsets = [0, 6], sizes = [64, 1], strides = [1, 1]} : vector<64x27xi32> to vector<64x1xi32>
    %70 = vector.broadcast %69 : vector<64x1xi32> to vector<64x128xi32>
    %71 = vector.broadcast %2 : vector<1x128xi32> to vector<64x128xi32>
    %72 = arith.cmpi eq, %70, %71 : vector<64x128xi32>
    %cst_27 = arith.constant 1.000000e+00 : f32
    %cst_28 = arith.constant 0.000000e+00 : f32
    %73 = vector.broadcast %cst_27 : f32 to vector<64x128xf32>
    %74 = vector.broadcast %cst_28 : f32 to vector<64x128xf32>
    %75 = arith.select %72, %73, %74 : vector<64x128xi1>, vector<64x128xf32>
    %76 = arith.truncf %75 : vector<64x128xf32> to vector<64x128xbf16>
    %cst_29 = arith.constant dense<0.000000e+00> : vector<64x8xf32>
    %77 = tpu.matmul %76, %0, %cst_29 {dimension_numbers = #tpu.dot_dimension_numbers<[1], [0], [0], [1], [0, 0, 1, 1], [], []>} : vector<64x128xbf16>, vector<128x8xbf16>, vector<64x8xf32> -> vector<64x8xf32>
    %78 = arith.truncf %77 : vector<64x8xf32> to vector<64x8xbf16>
    %c0_30 = arith.constant 0 : index
    %c48 = arith.constant 48 : index
    %79 = vector.load %arg6[%c0_30, %c48] : memref<64x216xbf16, #tpu.memory_space<vmem>>, vector<64x8xbf16>
    tpu.vector_store %arg6[%c0_30, %c48], %78 {strides = array<i32>} : memref<64x216xbf16, #tpu.memory_space<vmem>>, vector<64x8xbf16>,
    %80 = vector.extract_strided_slice %1 {offsets = [0, 7], sizes = [64, 1], strides = [1, 1]} : vector<64x27xi32> to vector<64x1xi32>
    %81 = vector.broadcast %80 : vector<64x1xi32> to vector<64x128xi32>
    %82 = vector.broadcast %2 : vector<1x128xi32> to vector<64x128xi32>
    %83 = arith.cmpi eq, %81, %82 : vector<64x128xi32>
    %cst_31 = arith.constant 1.000000e+00 : f32
    %cst_32 = arith.constant 0.000000e+00 : f32
    %84 = vector.broadcast %cst_31 : f32 to vector<64x128xf32>
    %85 = vector.broadcast %cst_32 : f32 to vector<64x128xf32>
    %86 = arith.select %83, %84, %85 : vector<64x128xi1>, vector<64x128xf32>
    %87 = arith.truncf %86 : vector<64x128xf32> to vector<64x128xbf16>
    %cst_33 = arith.constant dense<0.000000e+00> : vector<64x8xf32>
    %88 = tpu.matmul %87, %0, %cst_33 {dimension_numbers = #tpu.dot_dimension_numbers<[1], [0], [0], [1], [0, 0, 1, 1], [], []>} : vector<64x128xbf16>, vector<128x8xbf16>, vector<64x8xf32> -> vector<64x8xf32>
    %89 = arith.truncf %88 : vector<64x8xf32> to vector<64x8xbf16>
    %c0_34 = arith.constant 0 : index
    %c56 = arith.constant 56 : index
    %90 = vector.load %arg6[%c0_34, %c56] : memref<64x216xbf16, #tpu.memory_space<vmem>>, vector<64x8xbf16>
    tpu.vector_store %arg6[%c0_34, %c56], %89 {strides = array<i32>} : memref<64x216xbf16, #tpu.memory_space<vmem>>, vector<64x8xbf16>,
    %91 = vector.extract_strided_slice %1 {offsets = [0, 8], sizes = [64, 1], strides = [1, 1]} : vector<64x27xi32> to vector<64x1xi32>
    %92 = vector.broadcast %91 : vector<64x1xi32> to vector<64x128xi32>
    %93 = vector.broadcast %2 : vector<1x128xi32> to vector<64x128xi32>
    %94 = arith.cmpi eq, %92, %93 : vector<64x128xi32>
    %cst_35 = arith.constant 1.000000e+00 : f32
    %cst_36 = arith.constant 0.000000e+00 : f32
    %95 = vector.broadcast %cst_35 : f32 to vector<64x128xf32>
    %96 = vector.broadcast %cst_36 : f32 to vector<64x128xf32>
    %97 = arith.select %94, %95, %96 : vector<64x128xi1>, vector<64x128xf32>
    %98 = arith.truncf %97 : vector<64x128xf32> to vector<64x128xbf16>
    %cst_37 = arith.constant dense<0.000000e+00> : vector<64x8xf32>
    %99 = tpu.matmul %98, %0, %cst_37 {dimension_numbers = #tpu.dot_dimension_numbers<[1], [0], [0], [1], [0, 0, 1, 1], [], []>} : vector<64x128xbf16>, vector<128x8xbf16>, vector<64x8xf32> -> vector<64x8xf32>
    %100 = arith.truncf %99 : vector<64x8xf32> to vector<64x8xbf16>
    %c0_38 = arith.constant 0 : index
    %c64 = arith.constant 64 : index
    %101 = vector.load %arg6[%c0_38, %c64] : memref<64x216xbf16, #tpu.memory_space<vmem>>, vector<64x8xbf16>
    tpu.vector_store %arg6[%c0_38, %c64], %100 {strides = array<i32>} : memref<64x216xbf16, #tpu.memory_space<vmem>>, vector<64x8xbf16>,
    %102 = vector.extract_strided_slice %1 {offsets = [0, 9], sizes = [64, 1], strides = [1, 1]} : vector<64x27xi32> to vector<64x1xi32>
    %103 = vector.broadcast %102 : vector<64x1xi32> to vector<64x128xi32>
    %104 = vector.broadcast %2 : vector<1x128xi32> to vector<64x128xi32>
    %105 = arith.cmpi eq, %103, %104 : vector<64x128xi32>
    %cst_39 = arith.constant 1.000000e+00 : f32
    %cst_40 = arith.constant 0.000000e+00 : f32
    %106 = vector.broadcast %cst_39 : f32 to vector<64x128xf32>
    %107 = vector.broadcast %cst_40 : f32 to vector<64x128xf32>
    %108 = arith.select %105, %106, %107 : vector<64x128xi1>, vector<64x128xf32>
    %109 = arith.truncf %108 : vector<64x128xf32> to vector<64x128xbf16>
    %cst_41 = arith.constant dense<0.000000e+00> : vector<64x8xf32>
    %110 = tpu.matmul %109, %0, %cst_41 {dimension_numbers = #tpu.dot_dimension_numbers<[1], [0], [0], [1], [0, 0, 1, 1], [], []>} : vector<64x128xbf16>, vector<128x8xbf16>, vector<64x8xf32> -> vector<64x8xf32>
    %111 = arith.truncf %110 : vector<64x8xf32> to vector<64x8xbf16>
    %c0_42 = arith.constant 0 : index
    %c72 = arith.constant 72 : index
    %112 = vector.load %arg6[%c0_42, %c72] : memref<64x216xbf16, #tpu.memory_space<vmem>>, vector<64x8xbf16>
    tpu.vector_store %arg6[%c0_42, %c72], %111 {strides = array<i32>} : memref<64x216xbf16, #tpu.memory_space<vmem>>, vector<64x8xbf16>,
    %113 = vector.extract_strided_slice %1 {offsets = [0, 10], sizes = [64, 1], strides = [1, 1]} : vector<64x27xi32> to vector<64x1xi32>
    %114 = vector.broadcast %113 : vector<64x1xi32> to vector<64x128xi32>
    %115 = vector.broadcast %2 : vector<1x128xi32> to vector<64x128xi32>
    %116 = arith.cmpi eq, %114, %115 : vector<64x128xi32>
    %cst_43 = arith.constant 1.000000e+00 : f32
    %cst_44 = arith.constant 0.000000e+00 : f32
    %117 = vector.broadcast %cst_43 : f32 to vector<64x128xf32>
    %118 = vector.broadcast %cst_44 : f32 to vector<64x128xf32>
    %119 = arith.select %116, %117, %118 : vector<64x128xi1>, vector<64x128xf32>
    %120 = arith.truncf %119 : vector<64x128xf32> to vector<64x128xbf16>
    %cst_45 = arith.constant dense<0.000000e+00> : vector<64x8xf32>
    %121 = tpu.matmul %120, %0, %cst_45 {dimension_numbers = #tpu.dot_dimension_numbers<[1], [0], [0], [1], [0, 0, 1, 1], [], []>} : vector<64x128xbf16>, vector<128x8xbf16>, vector<64x8xf32> -> vector<64x8xf32>
    %122 = arith.truncf %121 : vector<64x8xf32> to vector<64x8xbf16>
    %c0_46 = arith.constant 0 : index
    %c80 = arith.constant 80 : index
    %123 = vector.load %arg6[%c0_46, %c80] : memref<64x216xbf16, #tpu.memory_space<vmem>>, vector<64x8xbf16>
    tpu.vector_store %arg6[%c0_46, %c80], %122 {strides = array<i32>} : memref<64x216xbf16, #tpu.memory_space<vmem>>, vector<64x8xbf16>,
    %124 = vector.extract_strided_slice %1 {offsets = [0, 11], sizes = [64, 1], strides = [1, 1]} : vector<64x27xi32> to vector<64x1xi32>
    %125 = vector.broadcast %124 : vector<64x1xi32> to vector<64x128xi32>
    %126 = vector.broadcast %2 : vector<1x128xi32> to vector<64x128xi32>
    %127 = arith.cmpi eq, %125, %126 : vector<64x128xi32>
    %cst_47 = arith.constant 1.000000e+00 : f32
    %cst_48 = arith.constant 0.000000e+00 : f32
    %128 = vector.broadcast %cst_47 : f32 to vector<64x128xf32>
    %129 = vector.broadcast %cst_48 : f32 to vector<64x128xf32>
    %130 = arith.select %127, %128, %129 : vector<64x128xi1>, vector<64x128xf32>
    %131 = arith.truncf %130 : vector<64x128xf32> to vector<64x128xbf16>
    %cst_49 = arith.constant dense<0.000000e+00> : vector<64x8xf32>
    %132 = tpu.matmul %131, %0, %cst_49 {dimension_numbers = #tpu.dot_dimension_numbers<[1], [0], [0], [1], [0, 0, 1, 1], [], []>} : vector<64x128xbf16>, vector<128x8xbf16>, vector<64x8xf32> -> vector<64x8xf32>
    %133 = arith.truncf %132 : vector<64x8xf32> to vector<64x8xbf16>
    %c0_50 = arith.constant 0 : index
    %c88 = arith.constant 88 : index
    %134 = vector.load %arg6[%c0_50, %c88] : memref<64x216xbf16, #tpu.memory_space<vmem>>, vector<64x8xbf16>
    tpu.vector_store %arg6[%c0_50, %c88], %133 {strides = array<i32>} : memref<64x216xbf16, #tpu.memory_space<vmem>>, vector<64x8xbf16>,
    %135 = vector.extract_strided_slice %1 {offsets = [0, 12], sizes = [64, 1], strides = [1, 1]} : vector<64x27xi32> to vector<64x1xi32>
    %136 = vector.broadcast %135 : vector<64x1xi32> to vector<64x128xi32>
    %137 = vector.broadcast %2 : vector<1x128xi32> to vector<64x128xi32>
    %138 = arith.cmpi eq, %136, %137 : vector<64x128xi32>
    %cst_51 = arith.constant 1.000000e+00 : f32
    %cst_52 = arith.constant 0.000000e+00 : f32
    %139 = vector.broadcast %cst_51 : f32 to vector<64x128xf32>
    %140 = vector.broadcast %cst_52 : f32 to vector<64x128xf32>
    %141 = arith.select %138, %139, %140 : vector<64x128xi1>, vector<64x128xf32>
    %142 = arith.truncf %141 : vector<64x128xf32> to vector<64x128xbf16>
    %cst_53 = arith.constant dense<0.000000e+00> : vector<64x8xf32>
    %143 = tpu.matmul %142, %0, %cst_53 {dimension_numbers = #tpu.dot_dimension_numbers<[1], [0], [0], [1], [0, 0, 1, 1], [], []>} : vector<64x128xbf16>, vector<128x8xbf16>, vector<64x8xf32> -> vector<64x8xf32>
    %144 = arith.truncf %143 : vector<64x8xf32> to vector<64x8xbf16>
    %c0_54 = arith.constant 0 : index
    %c96 = arith.constant 96 : index
    %145 = vector.load %arg6[%c0_54, %c96] : memref<64x216xbf16, #tpu.memory_space<vmem>>, vector<64x8xbf16>
    tpu.vector_store %arg6[%c0_54, %c96], %144 {strides = array<i32>} : memref<64x216xbf16, #tpu.memory_space<vmem>>, vector<64x8xbf16>,
    %146 = vector.extract_strided_slice %1 {offsets = [0, 13], sizes = [64, 1], strides = [1, 1]} : vector<64x27xi32> to vector<64x1xi32>
    %147 = vector.broadcast %146 : vector<64x1xi32> to vector<64x128xi32>
    %148 = vector.broadcast %2 : vector<1x128xi32> to vector<64x128xi32>
    %149 = arith.cmpi eq, %147, %148 : vector<64x128xi32>
    %cst_55 = arith.constant 1.000000e+00 : f32
    %cst_56 = arith.constant 0.000000e+00 : f32
    %150 = vector.broadcast %cst_55 : f32 to vector<64x128xf32>
    %151 = vector.broadcast %cst_56 : f32 to vector<64x128xf32>
    %152 = arith.select %149, %150, %151 : vector<64x128xi1>, vector<64x128xf32>
    %153 = arith.truncf %152 : vector<64x128xf32> to vector<64x128xbf16>
    %cst_57 = arith.constant dense<0.000000e+00> : vector<64x8xf32>
    %154 = tpu.matmul %153, %0, %cst_57 {dimension_numbers = #tpu.dot_dimension_numbers<[1], [0], [0], [1], [0, 0, 1, 1], [], []>} : vector<64x128xbf16>, vector<128x8xbf16>, vector<64x8xf32> -> vector<64x8xf32>
    %155 = arith.truncf %154 : vector<64x8xf32> to vector<64x8xbf16>
    %c0_58 = arith.constant 0 : index
    %c104 = arith.constant 104 : index
    %156 = vector.load %arg6[%c0_58, %c104] : memref<64x216xbf16, #tpu.memory_space<vmem>>, vector<64x8xbf16>
    tpu.vector_store %arg6[%c0_58, %c104], %155 {strides = array<i32>} : memref<64x216xbf16, #tpu.memory_space<vmem>>, vector<64x8xbf16>,
    %157 = vector.extract_strided_slice %1 {offsets = [0, 14], sizes = [64, 1], strides = [1, 1]} : vector<64x27xi32> to vector<64x1xi32>
    %158 = vector.broadcast %157 : vector<64x1xi32> to vector<64x128xi32>
    %159 = vector.broadcast %2 : vector<1x128xi32> to vector<64x128xi32>
    %160 = arith.cmpi eq, %158, %159 : vector<64x128xi32>
    %cst_59 = arith.constant 1.000000e+00 : f32
    %cst_60 = arith.constant 0.000000e+00 : f32
    %161 = vector.broadcast %cst_59 : f32 to vector<64x128xf32>
    %162 = vector.broadcast %cst_60 : f32 to vector<64x128xf32>
    %163 = arith.select %160, %161, %162 : vector<64x128xi1>, vector<64x128xf32>
    %164 = arith.truncf %163 : vector<64x128xf32> to vector<64x128xbf16>
    %cst_61 = arith.constant dense<0.000000e+00> : vector<64x8xf32>
    %165 = tpu.matmul %164, %0, %cst_61 {dimension_numbers = #tpu.dot_dimension_numbers<[1], [0], [0], [1], [0, 0, 1, 1], [], []>} : vector<64x128xbf16>, vector<128x8xbf16>, vector<64x8xf32> -> vector<64x8xf32>
    %166 = arith.truncf %165 : vector<64x8xf32> to vector<64x8xbf16>
    %c0_62 = arith.constant 0 : index
    %c112 = arith.constant 112 : index
    %167 = vector.load %arg6[%c0_62, %c112] : memref<64x216xbf16, #tpu.memory_space<vmem>>, vector<64x8xbf16>
    tpu.vector_store %arg6[%c0_62, %c112], %166 {strides = array<i32>} : memref<64x216xbf16, #tpu.memory_space<vmem>>, vector<64x8xbf16>,
    %168 = vector.extract_strided_slice %1 {offsets = [0, 15], sizes = [64, 1], strides = [1, 1]} : vector<64x27xi32> to vector<64x1xi32>
    %169 = vector.broadcast %168 : vector<64x1xi32> to vector<64x128xi32>
    %170 = vector.broadcast %2 : vector<1x128xi32> to vector<64x128xi32>
    %171 = arith.cmpi eq, %169, %170 : vector<64x128xi32>
    %cst_63 = arith.constant 1.000000e+00 : f32
    %cst_64 = arith.constant 0.000000e+00 : f32
    %172 = vector.broadcast %cst_63 : f32 to vector<64x128xf32>
    %173 = vector.broadcast %cst_64 : f32 to vector<64x128xf32>
    %174 = arith.select %171, %172, %173 : vector<64x128xi1>, vector<64x128xf32>
    %175 = arith.truncf %174 : vector<64x128xf32> to vector<64x128xbf16>
    %cst_65 = arith.constant dense<0.000000e+00> : vector<64x8xf32>
    %176 = tpu.matmul %175, %0, %cst_65 {dimension_numbers = #tpu.dot_dimension_numbers<[1], [0], [0], [1], [0, 0, 1, 1], [], []>} : vector<64x128xbf16>, vector<128x8xbf16>, vector<64x8xf32> -> vector<64x8xf32>
    %177 = arith.truncf %176 : vector<64x8xf32> to vector<64x8xbf16>
    %c0_66 = arith.constant 0 : index
    %c120 = arith.constant 120 : index
    %178 = vector.load %arg6[%c0_66, %c120] : memref<64x216xbf16, #tpu.memory_space<vmem>>, vector<64x8xbf16>
    tpu.vector_store %arg6[%c0_66, %c120], %177 {strides = array<i32>} : memref<64x216xbf16, #tpu.memory_space<vmem>>, vector<64x8xbf16>,
    %179 = vector.extract_strided_slice %1 {offsets = [0, 16], sizes = [64, 1], strides = [1, 1]} : vector<64x27xi32> to vector<64x1xi32>
    %180 = vector.broadcast %179 : vector<64x1xi32> to vector<64x128xi32>
    %181 = vector.broadcast %2 : vector<1x128xi32> to vector<64x128xi32>
    %182 = arith.cmpi eq, %180, %181 : vector<64x128xi32>
    %cst_67 = arith.constant 1.000000e+00 : f32
    %cst_68 = arith.constant 0.000000e+00 : f32
    %183 = vector.broadcast %cst_67 : f32 to vector<64x128xf32>
    %184 = vector.broadcast %cst_68 : f32 to vector<64x128xf32>
    %185 = arith.select %182, %183, %184 : vector<64x128xi1>, vector<64x128xf32>
    %186 = arith.truncf %185 : vector<64x128xf32> to vector<64x128xbf16>
    %cst_69 = arith.constant dense<0.000000e+00> : vector<64x8xf32>
    %187 = tpu.matmul %186, %0, %cst_69 {dimension_numbers = #tpu.dot_dimension_numbers<[1], [0], [0], [1], [0, 0, 1, 1], [], []>} : vector<64x128xbf16>, vector<128x8xbf16>, vector<64x8xf32> -> vector<64x8xf32>
    %188 = arith.truncf %187 : vector<64x8xf32> to vector<64x8xbf16>
    %c0_70 = arith.constant 0 : index
    %c128 = arith.constant 128 : index
    %189 = vector.load %arg6[%c0_70, %c128] : memref<64x216xbf16, #tpu.memory_space<vmem>>, vector<64x8xbf16>
    tpu.vector_store %arg6[%c0_70, %c128], %188 {strides = array<i32>} : memref<64x216xbf16, #tpu.memory_space<vmem>>, vector<64x8xbf16>,
    %190 = vector.extract_strided_slice %1 {offsets = [0, 17], sizes = [64, 1], strides = [1, 1]} : vector<64x27xi32> to vector<64x1xi32>
    %191 = vector.broadcast %190 : vector<64x1xi32> to vector<64x128xi32>
    %192 = vector.broadcast %2 : vector<1x128xi32> to vector<64x128xi32>
    %193 = arith.cmpi eq, %191, %192 : vector<64x128xi32>
    %cst_71 = arith.constant 1.000000e+00 : f32
    %cst_72 = arith.constant 0.000000e+00 : f32
    %194 = vector.broadcast %cst_71 : f32 to vector<64x128xf32>
    %195 = vector.broadcast %cst_72 : f32 to vector<64x128xf32>
    %196 = arith.select %193, %194, %195 : vector<64x128xi1>, vector<64x128xf32>
    %197 = arith.truncf %196 : vector<64x128xf32> to vector<64x128xbf16>
    %cst_73 = arith.constant dense<0.000000e+00> : vector<64x8xf32>
    %198 = tpu.matmul %197, %0, %cst_73 {dimension_numbers = #tpu.dot_dimension_numbers<[1], [0], [0], [1], [0, 0, 1, 1], [], []>} : vector<64x128xbf16>, vector<128x8xbf16>, vector<64x8xf32> -> vector<64x8xf32>
    %199 = arith.truncf %198 : vector<64x8xf32> to vector<64x8xbf16>
    %c0_74 = arith.constant 0 : index
    %c136 = arith.constant 136 : index
    %200 = vector.load %arg6[%c0_74, %c136] : memref<64x216xbf16, #tpu.memory_space<vmem>>, vector<64x8xbf16>
    tpu.vector_store %arg6[%c0_74, %c136], %199 {strides = array<i32>} : memref<64x216xbf16, #tpu.memory_space<vmem>>, vector<64x8xbf16>,
    %201 = vector.extract_strided_slice %1 {offsets = [0, 18], sizes = [64, 1], strides = [1, 1]} : vector<64x27xi32> to vector<64x1xi32>
    %202 = vector.broadcast %201 : vector<64x1xi32> to vector<64x128xi32>
    %203 = vector.broadcast %2 : vector<1x128xi32> to vector<64x128xi32>
    %204 = arith.cmpi eq, %202, %203 : vector<64x128xi32>
    %cst_75 = arith.constant 1.000000e+00 : f32
    %cst_76 = arith.constant 0.000000e+00 : f32
    %205 = vector.broadcast %cst_75 : f32 to vector<64x128xf32>
    %206 = vector.broadcast %cst_76 : f32 to vector<64x128xf32>
    %207 = arith.select %204, %205, %206 : vector<64x128xi1>, vector<64x128xf32>
    %208 = arith.truncf %207 : vector<64x128xf32> to vector<64x128xbf16>
    %cst_77 = arith.constant dense<0.000000e+00> : vector<64x8xf32>
    %209 = tpu.matmul %208, %0, %cst_77 {dimension_numbers = #tpu.dot_dimension_numbers<[1], [0], [0], [1], [0, 0, 1, 1], [], []>} : vector<64x128xbf16>, vector<128x8xbf16>, vector<64x8xf32> -> vector<64x8xf32>
    %210 = arith.truncf %209 : vector<64x8xf32> to vector<64x8xbf16>
    %c0_78 = arith.constant 0 : index
    %c144 = arith.constant 144 : index
    %211 = vector.load %arg6[%c0_78, %c144] : memref<64x216xbf16, #tpu.memory_space<vmem>>, vector<64x8xbf16>
    tpu.vector_store %arg6[%c0_78, %c144], %210 {strides = array<i32>} : memref<64x216xbf16, #tpu.memory_space<vmem>>, vector<64x8xbf16>,
    %212 = vector.extract_strided_slice %1 {offsets = [0, 19], sizes = [64, 1], strides = [1, 1]} : vector<64x27xi32> to vector<64x1xi32>
    %213 = vector.broadcast %212 : vector<64x1xi32> to vector<64x128xi32>
    %214 = vector.broadcast %2 : vector<1x128xi32> to vector<64x128xi32>
    %215 = arith.cmpi eq, %213, %214 : vector<64x128xi32>
    %cst_79 = arith.constant 1.000000e+00 : f32
    %cst_80 = arith.constant 0.000000e+00 : f32
    %216 = vector.broadcast %cst_79 : f32 to vector<64x128xf32>
    %217 = vector.broadcast %cst_80 : f32 to vector<64x128xf32>
    %218 = arith.select %215, %216, %217 : vector<64x128xi1>, vector<64x128xf32>
    %219 = arith.truncf %218 : vector<64x128xf32> to vector<64x128xbf16>
    %cst_81 = arith.constant dense<0.000000e+00> : vector<64x8xf32>
    %220 = tpu.matmul %219, %0, %cst_81 {dimension_numbers = #tpu.dot_dimension_numbers<[1], [0], [0], [1], [0, 0, 1, 1], [], []>} : vector<64x128xbf16>, vector<128x8xbf16>, vector<64x8xf32> -> vector<64x8xf32>
    %221 = arith.truncf %220 : vector<64x8xf32> to vector<64x8xbf16>
    %c0_82 = arith.constant 0 : index
    %c152 = arith.constant 152 : index
    %222 = vector.load %arg6[%c0_82, %c152] : memref<64x216xbf16, #tpu.memory_space<vmem>>, vector<64x8xbf16>
    tpu.vector_store %arg6[%c0_82, %c152], %221 {strides = array<i32>} : memref<64x216xbf16, #tpu.memory_space<vmem>>, vector<64x8xbf16>,
    %223 = vector.extract_strided_slice %1 {offsets = [0, 20], sizes = [64, 1], strides = [1, 1]} : vector<64x27xi32> to vector<64x1xi32>
    %224 = vector.broadcast %223 : vector<64x1xi32> to vector<64x128xi32>
    %225 = vector.broadcast %2 : vector<1x128xi32> to vector<64x128xi32>
    %226 = arith.cmpi eq, %224, %225 : vector<64x128xi32>
    %cst_83 = arith.constant 1.000000e+00 : f32
    %cst_84 = arith.constant 0.000000e+00 : f32
    %227 = vector.broadcast %cst_83 : f32 to vector<64x128xf32>
    %228 = vector.broadcast %cst_84 : f32 to vector<64x128xf32>
    %229 = arith.select %226, %227, %228 : vector<64x128xi1>, vector<64x128xf32>
    %230 = arith.truncf %229 : vector<64x128xf32> to vector<64x128xbf16>
    %cst_85 = arith.constant dense<0.000000e+00> : vector<64x8xf32>
    %231 = tpu.matmul %230, %0, %cst_85 {dimension_numbers = #tpu.dot_dimension_numbers<[1], [0], [0], [1], [0, 0, 1, 1], [], []>} : vector<64x128xbf16>, vector<128x8xbf16>, vector<64x8xf32> -> vector<64x8xf32>
    %232 = arith.truncf %231 : vector<64x8xf32> to vector<64x8xbf16>
    %c0_86 = arith.constant 0 : index
    %c160 = arith.constant 160 : index
    %233 = vector.load %arg6[%c0_86, %c160] : memref<64x216xbf16, #tpu.memory_space<vmem>>, vector<64x8xbf16>
    tpu.vector_store %arg6[%c0_86, %c160], %232 {strides = array<i32>} : memref<64x216xbf16, #tpu.memory_space<vmem>>, vector<64x8xbf16>,
    %234 = vector.extract_strided_slice %1 {offsets = [0, 21], sizes = [64, 1], strides = [1, 1]} : vector<64x27xi32> to vector<64x1xi32>
    %235 = vector.broadcast %234 : vector<64x1xi32> to vector<64x128xi32>
    %236 = vector.broadcast %2 : vector<1x128xi32> to vector<64x128xi32>
    %237 = arith.cmpi eq, %235, %236 : vector<64x128xi32>
    %cst_87 = arith.constant 1.000000e+00 : f32
    %cst_88 = arith.constant 0.000000e+00 : f32
    %238 = vector.broadcast %cst_87 : f32 to vector<64x128xf32>
    %239 = vector.broadcast %cst_88 : f32 to vector<64x128xf32>
    %240 = arith.select %237, %238, %239 : vector<64x128xi1>, vector<64x128xf32>
    %241 = arith.truncf %240 : vector<64x128xf32> to vector<64x128xbf16>
    %cst_89 = arith.constant dense<0.000000e+00> : vector<64x8xf32>
    %242 = tpu.matmul %241, %0, %cst_89 {dimension_numbers = #tpu.dot_dimension_numbers<[1], [0], [0], [1], [0, 0, 1, 1], [], []>} : vector<64x128xbf16>, vector<128x8xbf16>, vector<64x8xf32> -> vector<64x8xf32>
    %243 = arith.truncf %242 : vector<64x8xf32> to vector<64x8xbf16>
    %c0_90 = arith.constant 0 : index
    %c168 = arith.constant 168 : index
    %244 = vector.load %arg6[%c0_90, %c168] : memref<64x216xbf16, #tpu.memory_space<vmem>>, vector<64x8xbf16>
    tpu.vector_store %arg6[%c0_90, %c168], %243 {strides = array<i32>} : memref<64x216xbf16, #tpu.memory_space<vmem>>, vector<64x8xbf16>,
    %245 = vector.extract_strided_slice %1 {offsets = [0, 22], sizes = [64, 1], strides = [1, 1]} : vector<64x27xi32> to vector<64x1xi32>
    %246 = vector.broadcast %245 : vector<64x1xi32> to vector<64x128xi32>
    %247 = vector.broadcast %2 : vector<1x128xi32> to vector<64x128xi32>
    %248 = arith.cmpi eq, %246, %247 : vector<64x128xi32>
    %cst_91 = arith.constant 1.000000e+00 : f32
    %cst_92 = arith.constant 0.000000e+00 : f32
    %249 = vector.broadcast %cst_91 : f32 to vector<64x128xf32>
    %250 = vector.broadcast %cst_92 : f32 to vector<64x128xf32>
    %251 = arith.select %248, %249, %250 : vector<64x128xi1>, vector<64x128xf32>
    %252 = arith.truncf %251 : vector<64x128xf32> to vector<64x128xbf16>
    %cst_93 = arith.constant dense<0.000000e+00> : vector<64x8xf32>
    %253 = tpu.matmul %252, %0, %cst_93 {dimension_numbers = #tpu.dot_dimension_numbers<[1], [0], [0], [1], [0, 0, 1, 1], [], []>} : vector<64x128xbf16>, vector<128x8xbf16>, vector<64x8xf32> -> vector<64x8xf32>
    %254 = arith.truncf %253 : vector<64x8xf32> to vector<64x8xbf16>
    %c0_94 = arith.constant 0 : index
    %c176 = arith.constant 176 : index
    %255 = vector.load %arg6[%c0_94, %c176] : memref<64x216xbf16, #tpu.memory_space<vmem>>, vector<64x8xbf16>
    tpu.vector_store %arg6[%c0_94, %c176], %254 {strides = array<i32>} : memref<64x216xbf16, #tpu.memory_space<vmem>>, vector<64x8xbf16>,
    %256 = vector.extract_strided_slice %1 {offsets = [0, 23], sizes = [64, 1], strides = [1, 1]} : vector<64x27xi32> to vector<64x1xi32>
    %257 = vector.broadcast %256 : vector<64x1xi32> to vector<64x128xi32>
    %258 = vector.broadcast %2 : vector<1x128xi32> to vector<64x128xi32>
    %259 = arith.cmpi eq, %257, %258 : vector<64x128xi32>
    %cst_95 = arith.constant 1.000000e+00 : f32
    %cst_96 = arith.constant 0.000000e+00 : f32
    %260 = vector.broadcast %cst_95 : f32 to vector<64x128xf32>
    %261 = vector.broadcast %cst_96 : f32 to vector<64x128xf32>
    %262 = arith.select %259, %260, %261 : vector<64x128xi1>, vector<64x128xf32>
    %263 = arith.truncf %262 : vector<64x128xf32> to vector<64x128xbf16>
    %cst_97 = arith.constant dense<0.000000e+00> : vector<64x8xf32>
    %264 = tpu.matmul %263, %0, %cst_97 {dimension_numbers = #tpu.dot_dimension_numbers<[1], [0], [0], [1], [0, 0, 1, 1], [], []>} : vector<64x128xbf16>, vector<128x8xbf16>, vector<64x8xf32> -> vector<64x8xf32>
    %265 = arith.truncf %264 : vector<64x8xf32> to vector<64x8xbf16>
    %c0_98 = arith.constant 0 : index
    %c184 = arith.constant 184 : index
    %266 = vector.load %arg6[%c0_98, %c184] : memref<64x216xbf16, #tpu.memory_space<vmem>>, vector<64x8xbf16>
    tpu.vector_store %arg6[%c0_98, %c184], %265 {strides = array<i32>} : memref<64x216xbf16, #tpu.memory_space<vmem>>, vector<64x8xbf16>,
    %267 = vector.extract_strided_slice %1 {offsets = [0, 24], sizes = [64, 1], strides = [1, 1]} : vector<64x27xi32> to vector<64x1xi32>
    %268 = vector.broadcast %267 : vector<64x1xi32> to vector<64x128xi32>
    %269 = vector.broadcast %2 : vector<1x128xi32> to vector<64x128xi32>
    %270 = arith.cmpi eq, %268, %269 : vector<64x128xi32>
    %cst_99 = arith.constant 1.000000e+00 : f32
    %cst_100 = arith.constant 0.000000e+00 : f32
    %271 = vector.broadcast %cst_99 : f32 to vector<64x128xf32>
    %272 = vector.broadcast %cst_100 : f32 to vector<64x128xf32>
    %273 = arith.select %270, %271, %272 : vector<64x128xi1>, vector<64x128xf32>
    %274 = arith.truncf %273 : vector<64x128xf32> to vector<64x128xbf16>
    %cst_101 = arith.constant dense<0.000000e+00> : vector<64x8xf32>
    %275 = tpu.matmul %274, %0, %cst_101 {dimension_numbers = #tpu.dot_dimension_numbers<[1], [0], [0], [1], [0, 0, 1, 1], [], []>} : vector<64x128xbf16>, vector<128x8xbf16>, vector<64x8xf32> -> vector<64x8xf32>
    %276 = arith.truncf %275 : vector<64x8xf32> to vector<64x8xbf16>
    %c0_102 = arith.constant 0 : index
    %c192 = arith.constant 192 : index
    %277 = vector.load %arg6[%c0_102, %c192] : memref<64x216xbf16, #tpu.memory_space<vmem>>, vector<64x8xbf16>
    tpu.vector_store %arg6[%c0_102, %c192], %276 {strides = array<i32>} : memref<64x216xbf16, #tpu.memory_space<vmem>>, vector<64x8xbf16>,
    %278 = vector.extract_strided_slice %1 {offsets = [0, 25], sizes = [64, 1], strides = [1, 1]} : vector<64x27xi32> to vector<64x1xi32>
    %279 = vector.broadcast %278 : vector<64x1xi32> to vector<64x128xi32>
    %280 = vector.broadcast %2 : vector<1x128xi32> to vector<64x128xi32>
    %281 = arith.cmpi eq, %279, %280 : vector<64x128xi32>
    %cst_103 = arith.constant 1.000000e+00 : f32
    %cst_104 = arith.constant 0.000000e+00 : f32
    %282 = vector.broadcast %cst_103 : f32 to vector<64x128xf32>
    %283 = vector.broadcast %cst_104 : f32 to vector<64x128xf32>
    %284 = arith.select %281, %282, %283 : vector<64x128xi1>, vector<64x128xf32>
    %285 = arith.truncf %284 : vector<64x128xf32> to vector<64x128xbf16>
    %cst_105 = arith.constant dense<0.000000e+00> : vector<64x8xf32>
    %286 = tpu.matmul %285, %0, %cst_105 {dimension_numbers = #tpu.dot_dimension_numbers<[1], [0], [0], [1], [0, 0, 1, 1], [], []>} : vector<64x128xbf16>, vector<128x8xbf16>, vector<64x8xf32> -> vector<64x8xf32>
    %287 = arith.truncf %286 : vector<64x8xf32> to vector<64x8xbf16>
    %c0_106 = arith.constant 0 : index
    %c200 = arith.constant 200 : index
    %288 = vector.load %arg6[%c0_106, %c200] : memref<64x216xbf16, #tpu.memory_space<vmem>>, vector<64x8xbf16>
    tpu.vector_store %arg6[%c0_106, %c200], %287 {strides = array<i32>} : memref<64x216xbf16, #tpu.memory_space<vmem>>, vector<64x8xbf16>,
    %289 = vector.extract_strided_slice %1 {offsets = [0, 26], sizes = [64, 1], strides = [1, 1]} : vector<64x27xi32> to vector<64x1xi32>
    %290 = vector.broadcast %289 : vector<64x1xi32> to vector<64x128xi32>
    %291 = vector.broadcast %2 : vector<1x128xi32> to vector<64x128xi32>
    %292 = arith.cmpi eq, %290, %291 : vector<64x128xi32>
    %cst_107 = arith.constant 1.000000e+00 : f32
    %cst_108 = arith.constant 0.000000e+00 : f32
    %293 = vector.broadcast %cst_107 : f32 to vector<64x128xf32>
    %294 = vector.broadcast %cst_108 : f32 to vector<64x128xf32>
    %295 = arith.select %292, %293, %294 : vector<64x128xi1>, vector<64x128xf32>
    %296 = arith.truncf %295 : vector<64x128xf32> to vector<64x128xbf16>
    %cst_109 = arith.constant dense<0.000000e+00> : vector<64x8xf32>
    %297 = tpu.matmul %296, %0, %cst_109 {dimension_numbers = #tpu.dot_dimension_numbers<[1], [0], [0], [1], [0, 0, 1, 1], [], []>} : vector<64x128xbf16>, vector<128x8xbf16>, vector<64x8xf32> -> vector<64x8xf32>
    %298 = arith.truncf %297 : vector<64x8xf32> to vector<64x8xbf16>
    %c0_110 = arith.constant 0 : index
    %c208 = arith.constant 208 : index
    %299 = vector.load %arg6[%c0_110, %c208] : memref<64x216xbf16, #tpu.memory_space<vmem>>, vector<64x8xbf16>
    tpu.vector_store %arg6[%c0_110, %c208], %298 {strides = array<i32>} : memref<64x216xbf16, #tpu.memory_space<vmem>>, vector<64x8xbf16>,
    %c0_111 = arith.constant 0 : index
    %c0_112 = arith.constant 0 : index
    %300 = vector.load %arg6[%c0_111, %c0_112] : memref<64x216xbf16, #tpu.memory_space<vmem>>, vector<64x216xbf16>
    %c0_113 = arith.constant 0 : index
    %c0_114 = arith.constant 0 : index
    %301 = vector.load %arg3[%c0_113, %c0_114] : memref<216x32xbf16, #tpu.memory_space<vmem>>, vector<216x32xbf16>
    %cst_115 = arith.constant dense<0.000000e+00> : vector<64x32xf32>
    %302 = tpu.matmul %300, %301, %cst_115 {dimension_numbers = #tpu.dot_dimension_numbers<[1], [0], [0], [1], [0, 0, 1, 1], [], []>} : vector<64x216xbf16>, vector<216x32xbf16>, vector<64x32xf32> -> vector<64x32xf32>
    %c0_116 = arith.constant 0 : index
    %c0_117 = arith.constant 0 : index
    %303 = vector.load %arg4[%c0_116, %c0_117] : memref<1x32xf32, #tpu.memory_space<vmem>>, vector<1x32xf32>
    %304 = vector.broadcast %303 : vector<1x32xf32> to vector<64x32xf32>
    %305 = arith.addf %302, %304 : vector<64x32xf32>
    %cst_118 = arith.constant 0.000000e+00 : f32
    %306 = vector.broadcast %cst_118 : f32 to vector<64x32xf32>
    %307 = arith.maximumf %305, %306 : vector<64x32xf32>
    %308 = arith.truncf %307 : vector<64x32xf32> to vector<64x32xbf16>
    %c0_119 = arith.constant 0 : index
    %c0_120 = arith.constant 0 : index
    %309 = vector.load %arg5[%c0_119, %c0_120] : memref<64x32xbf16, #tpu.memory_space<vmem>>, vector<64x32xbf16>
    tpu.vector_store %arg5[%c0_119, %c0_120], %308 {strides = array<i32>} : memref<64x32xbf16, #tpu.memory_space<vmem>>, vector<64x32xbf16>,
    return
  }
  func.func @transform_0(%arg0: i32) -> (i32, i32) {
    %c0_i32 = arith.constant 0 : i32
    %c0_i32_0 = arith.constant 0 : i32
    return %arg0, %c0_i32 : i32, i32
  }
  func.func @transform_1(%arg0: i32) -> (i32, i32) {
    %c0_i32 = arith.constant 0 : i32
    %c0_i32_0 = arith.constant 0 : i32
    %c0_i32_1 = arith.constant 0 : i32
    return %c0_i32, %c0_i32_0 : i32, i32
  }
  func.func @transform_2(%arg0: i32) -> (i32, i32) {
    %c0_i32 = arith.constant 0 : i32
    %c0_i32_0 = arith.constant 0 : i32
    %c0_i32_1 = arith.constant 0 : i32
    return %c0_i32, %c0_i32_0 : i32, i32
  }
  func.func @transform_3(%arg0: i32) -> (i32, i32) {
    %c0_i32 = arith.constant 0 : i32
    %c0_i32_0 = arith.constant 0 : i32
    %c0_i32_1 = arith.constant 0 : i32
    return %c0_i32, %c0_i32_0 : i32, i32
  }
  func.func @transform_4(%arg0: i32) -> (i32, i32) {
    %c0_i32 = arith.constant 0 : i32
    %c0_i32_0 = arith.constant 0 : i32
    return %arg0, %c0_i32 : i32, i32
  }
}

</mosaic_0001>

<llo_original>
// kernel: tpu_custom_call.1
$region0: #{tpu_custom_call.1}
  #allocation0 [shape = 'u32[]', space=smem, size = 0x4, offset = 0x4, fixed_abs, tag = 'smem constant byte address 0x4 - core index']
  #allocation1 [shape = 'u32[144,128]{1,0:T(1,128)}', space=vmem, size = 0x12000, scoped, tag = 'internal scratch']
  #allocation2 [shape = 'bf16[64,216]{1,0:T(16,128)(2,1)}', space=vmem, size = 0x8000, scoped, tag = 'scratch operand']
  %s0 = inlined_call_operand.vmem [shape: s32[128,27], index: 0, kind: input, shape index: {}]
  %s1 = inlined_call_operand.vmem [shape: bf16[128,8], index: 1, kind: input, shape index: {}]
  %s2 = inlined_call_operand.vmem [shape: bf16[216,32], index: 2, kind: input, shape index: {}]
  %s3 = inlined_call_operand.vmem [shape: f32[1,32], index: 3, kind: input, shape index: {}]
  %s4 = inlined_call_operand.vmem [shape: bf16[128,32], index: 4, kind: output, shape index: {}]
  %s5 = sld [smem:[#allocation0]]
  $region49: #{tpu_custom_call.1} parent=0
    _
  %s7 = ssub.s32 1, %s5
  %s8 = scalar_select 0, %s7, %s5
  loop: start=0, step=1, limit=4
  $region2: #{tpu_custom_call.1} parent=0 // loop_pre_header
    _
  $region3: #{tpu_custom_call.1} parent=0 // loop_header
    %s10 = sphi 0, %s14
    %p11 = scmp.ge.s32.totalorder %s10, 4
    %s20 = sphi 0, %s22
    %s23 = sphi 0, %s20
    %s24 = sphi 0, %s23
    %s40 = sphi 0, %s24
    %s44 = sphi 0, %s44
    %s46 = sphi 0, %s44
    %s47 = sphi 0, %s46
    %s61 = sphi 0, %s47
    %s65 = sphi 0, %s65
    %s67 = sphi 0, %s65
    %s68 = sphi 0, %s67
    %s82 = sphi 0, %s68
    %s86 = sphi 0, %s86
    %s88 = sphi 0, %s86
    %s89 = sphi 0, %s88
    %s103 = sphi 0, %s89
    %s109 = sphi 0, %s111
    %s112 = sphi 0, %s109
    %s113 = sphi 0, %s112
    %s129 = sphi 0, %s113
  $region4: #{tpu_custom_call.1} parent=0 // loop_header_branch
    %13 = sbr.rel (%p11) target = $region8
  $region5: #{tpu_custom_call.1} parent=0 // loop_body
    %s15 = ssub.s32 %s10, 1
    %s16 = ssub.s32 %s10, 2
    %s17 = sadd.s32 %s10, 1
    %s18 = ssub.s32 %s10, %s17
    %p19 = scmp.eq.s32.totalorder %s18, 0
    %s21 = sadd.s32 %s20, 1
    %s22 = scalar_select %p19, %s20, %s21
    %p25 = pneg %p19
    %p26 = scmp.eq.s32.totalorder %s10, 1
    %p27 = por %p25, %p26
    %p28 = scmp.ne.s32.totalorder %s20, %s23
    %p29 = scmp.eq.s32.totalorder %s10, 0
    %p30 = por %p28, %p29
    %p31 = scmp.ne.s32.totalorder %s20, %s23
    %p32 = scmp.eq.s32.totalorder %s15, 1
    %p33 = por %p31, %p32
    %p34 = scmp.ne.s32.totalorder %s23, %s24
    %p35 = scmp.eq.s32.totalorder %s15, 0
    %p36 = por %p34, %p35
    %p37 = scmp.ne.s32.totalorder %s23, %s24
    %p38 = scmp.eq.s32.totalorder %s16, 1
    %p39 = por %p37, %p38
    %p41 = scmp.ne.s32.totalorder %s24, %s40
    %p42 = scmp.eq.s32.totalorder %s16, 0
    %p43 = por %p41, %p42
    %s45 = sadd.s32 %s44, 1
    %p48 = scmp.eq.s32.totalorder %s10, 1
    %p49 = scmp.ne.s32.totalorder %s44, %s46
    %p50 = scmp.eq.s32.totalorder %s10, 0
    %p51 = por %p49, %p50
    %p52 = scmp.ne.s32.totalorder %s44, %s46
    %p53 = scmp.eq.s32.totalorder %s15, 1
    %p54 = por %p52, %p53
    %p55 = scmp.ne.s32.totalorder %s46, %s47
    %p56 = scmp.eq.s32.totalorder %s15, 0
    %p57 = por %p55, %p56
    %p58 = scmp.ne.s32.totalorder %s46, %s47
    %p59 = scmp.eq.s32.totalorder %s16, 1
    %p60 = por %p58, %p59
    %p62 = scmp.ne.s32.totalorder %s47, %s61
    %p63 = scmp.eq.s32.totalorder %s16, 0
    %p64 = por %p62, %p63
    %s66 = sadd.s32 %s65, 1
    %p69 = scmp.eq.s32.totalorder %s10, 1
    %p70 = scmp.ne.s32.totalorder %s65, %s67
    %p71 = scmp.eq.s32.totalorder %s10, 0
    %p72 = por %p70, %p71
    %p73 = scmp.ne.s32.totalorder %s65, %s67
    %p74 = scmp.eq.s32.totalorder %s15, 1
    %p75 = por %p73, %p74
    %p76 = scmp.ne.s32.totalorder %s67, %s68
    %p77 = scmp.eq.s32.totalorder %s15, 0
    %p78 = por %p76, %p77
    %p79 = scmp.ne.s32.totalorder %s67, %s68
    %p80 = scmp.eq.s32.totalorder %s16, 1
    %p81 = por %p79, %p80
    %p83 = scmp.ne.s32.totalorder %s68, %s82
    %p84 = scmp.eq.s32.totalorder %s16, 0
    %p85 = por %p83, %p84
    %s87 = sadd.s32 %s86, 1
    %p90 = scmp.eq.s32.totalorder %s10, 1
    %p91 = scmp.ne.s32.totalorder %s86, %s88
    %p92 = scmp.eq.s32.totalorder %s10, 0
    %p93 = por %p91, %p92
    %p94 = scmp.ne.s32.totalorder %s86, %s88
    %p95 = scmp.eq.s32.totalorder %s15, 1
    %p96 = por %p94, %p95
    %p97 = scmp.ne.s32.totalorder %s88, %s89
    %p98 = scmp.eq.s32.totalorder %s15, 0
    %p99 = por %p97, %p98
    %p100 = scmp.ne.s32.totalorder %s88, %s89
    %p101 = scmp.eq.s32.totalorder %s16, 1
    %p102 = por %p100, %p101
    %p104 = scmp.ne.s32.totalorder %s89, %s103
    %p105 = scmp.eq.s32.totalorder %s16, 0
    %p106 = por %p104, %p105
    %s107 = ssub.s32 %s10, %s17
    %p108 = scmp.eq.s32.totalorder %s107, 0
    %s110 = sadd.s32 %s109, 1
    %s111 = scalar_select %p108, %s109, %s110
    %p114 = pneg %p108
    %p115 = scmp.eq.s32.totalorder %s10, 1
    %p116 = por %p114, %p115
    %p117 = scmp.ne.s32.totalorder %s109, %s112
    %p118 = scmp.eq.s32.totalorder %s10, 0
    %p119 = por %p117, %p118
    %p120 = scmp.ne.s32.totalorder %s109, %s112
    %p121 = scmp.eq.s32.totalorder %s15, 1
    %p122 = por %p120, %p121
    %p123 = scmp.ne.s32.totalorder %s112, %s113
    %p124 = scmp.eq.s32.totalorder %s15, 0
    %p125 = por %p123, %p124
    %p126 = scmp.ne.s32.totalorder %s112, %s113
    %p127 = scmp.eq.s32.totalorder %s16, 1
    %p128 = por %p126, %p127
    %p130 = scmp.ne.s32.totalorder %s113, %s129
    %p131 = scmp.eq.s32.totalorder %s16, 0
    %p132 = por %p130, %p131
    %p133 = scmp.le.s32.totalorder 1, %s10
    %p134 = scmp.lt.s32.totalorder %s10, 3
    %p135 = pnand %p133, %p134
    %p136 = pneg %p135
    // Predicated region
    $region9: #{tpu_custom_call.1} parent=5 // pred_check
      _
    $region10: #{tpu_custom_call.1} parent=5 // pred_check_branch
      %138 = sbr.rel (%p135) target = $region12
    $region11: #{tpu_custom_call.1} parent=5 // pred_region
      %s139 = ssub.s32 %s10, 1
      // Predicated region
      $region13: #{tpu_custom_call.1} parent=11 // pred_check
        %p140 = pneg %p57
      $region14: #{tpu_custom_call.1} parent=11 // pred_check_branch
        %142 = sbr.rel (%p140) target = $region16
      $region15: #{tpu_custom_call.1} parent=11 // pred_region
        _
      $region16: #{tpu_custom_call.1} parent=11 // pred_fallthru
        _
      // Predicated region
      $region17: #{tpu_custom_call.1} parent=11 // pred_check
        %p143 = pneg %p78
      $region18: #{tpu_custom_call.1} parent=11 // pred_check_branch
        %145 = sbr.rel (%p143) target = $region20
      $region19: #{tpu_custom_call.1} parent=11 // pred_region
        _
      $region20: #{tpu_custom_call.1} parent=11 // pred_fallthru
        _
      // Predicated region
      $region21: #{tpu_custom_call.1} parent=11 // pred_check
        %p146 = pneg %p99
      $region22: #{tpu_custom_call.1} parent=11 // pred_check_branch
        %148 = sbr.rel (%p146) target = $region24
      $region23: #{tpu_custom_call.1} parent=11 // pred_region
        _
      $region24: #{tpu_custom_call.1} parent=11 // pred_fallthru
        _
    $region12: #{tpu_custom_call.1} parent=5 // pred_fallthru
      _
    %p149 = scmp.lt.s32.totalorder %s10, 2
    // Predicated region
    $region25: #{tpu_custom_call.1} parent=5 // pred_check
      %p150 = pneg %p149
    $region26: #{tpu_custom_call.1} parent=5 // pred_check_branch
      %152 = sbr.rel (%p150) target = $region28
    $region27: #{tpu_custom_call.1} parent=5 // pred_region
      // Predicated region
      $region29: #{tpu_custom_call.1} parent=27 // pred_check
        %p153 = pneg %p30
      $region30: #{tpu_custom_call.1} parent=27 // pred_check_branch
        %155 = sbr.rel (%p153) target = $region32
      $region31: #{tpu_custom_call.1} parent=27 // pred_region
        %s156 = smul.u32 8, %s10
        %p157 = scmp.lt.s32.totalorder %s156, 15
        %s158 = scalar_select %p157, %s156, 15
        %s159 = smul.addr %s158, 8
        %s160 = scalar_lea.vmem %s0, %s159
        %s161 = smul.u32 8, %s10
      $region32: #{tpu_custom_call.1} parent=27 // pred_fallthru
        _
    $region28: #{tpu_custom_call.1} parent=5 // pred_fallthru
      _
    %p162 = scmp.le.s32.totalorder 1, %s10
    %p163 = scmp.lt.s32.totalorder %s10, 3
    %p164 = pnand %p162, %p163
    %p165 = pneg %p164
    // Predicated region
    $region33: #{tpu_custom_call.1} parent=5 // pred_check
      _
    $region34: #{tpu_custom_call.1} parent=5 // pred_check_branch
      %167 = sbr.rel (%p164) target = $region36
    $region35: #{tpu_custom_call.1} parent=5 // pred_region
      %s168 = ssub.s32 %s10, 1
      %s169 = smul.u32 8, %s15
      %p170 = scmp.lt.s32.totalorder %s169, 15
      %s171 = scalar_select %p170, %s169, 15
      %s172 = smul.addr %s171, 8
      %s173 = scalar_lea.vmem %s0, %s172
      %p174 = pneg %p36
      %p175 = pneg %p33
      %p176 = pneg %p57
      %p177 = pneg %p54
      %p178 = pneg %p78
      %p179 = pneg %p75
      %p180 = pneg %p99
      %p181 = pneg %p96
      %p182 = pneg %p125
      %p183 = pneg %p122
      %s184 = smul.u32 8, %s15
      %p185 = scmp.lt.s32.totalorder %s184, 15
      %s186 = scalar_select %p185, %s184, 15
      %s187 = smul.addr %s186, 4
      %s188 = scalar_lea.vmem %s4, %s187
      %s189 = smul.u32 8, %s15
      %p190 = scmp.lt.s32.totalorder %s189, 15
      %s191 = scalar_select %p190, %s189, 15
      %s192 = smul.addr %s191, 8
      %s193 = scalar_lea.vmem %s0, %s192
      %s194 = smul.u32 8, %s15
      %s195 = smul.u32 8, %s15
      %p196 = scmp.lt.s32.totalorder %s195, 15
      %s197 = scalar_select %p196, %s195, 15
      %s198 = smul.addr %s197, 4
      %s199 = scalar_lea.vmem %s4, %s198
      %s200 = smul.u32 8, %s15
      %v202 = vld [vmem:[%s1] sm:$0xf]
      %v203 = vld [vmem:[%s1 + $0x4] sm:$0xf]
      %v204 = vld [vmem:[%s1 + $0x8] sm:$0xf]
      %v205 = vld [vmem:[%s1 + $0xc] sm:$0xf]
      %v206 = vld [vmem:[%s1 + $0x10] sm:$0xf]
      %v207 = vld [vmem:[%s1 + $0x14] sm:$0xf]
      %v208 = vld [vmem:[%s1 + $0x18] sm:$0xf]
      %v209 = vld [vmem:[%s1 + $0x1c] sm:$0xf]
      %v210 = vld [vmem:[%s1 + $0x20] sm:$0xf]
      %v211 = vld [vmem:[%s1 + $0x24] sm:$0xf]
      %v212 = vld [vmem:[%s1 + $0x28] sm:$0xf]
      %v213 = vld [vmem:[%s1 + $0x2c] sm:$0xf]
      %v214 = vld [vmem:[%s1 + $0x30] sm:$0xf]
      %v215 = vld [vmem:[%s1 + $0x34] sm:$0xf]
      %v216 = vld [vmem:[%s1 + $0x38] sm:$0xf]
      %v217 = vld [vmem:[%s1 + $0x3c] sm:$0xf]
      %v218 = vld [vmem:[%s193] sm:$0xff]
      %v219 = vld [vmem:[%s193 + $0x8] sm:$0xff]
      %v220 = vld [vmem:[%s193 + $0x10] sm:$0xff]
      %v221 = vld [vmem:[%s193 + $0x18] sm:$0xff]
      %v222 = vld [vmem:[%s193 + $0x20] sm:$0xff]
      %v223 = vld [vmem:[%s193 + $0x28] sm:$0xff]
      %v224 = vld [vmem:[%s193 + $0x30] sm:$0xff]
      %v225 = vld [vmem:[%s193 + $0x38] sm:$0xff]
      %v226 = vlaneseq
      %v227 = vand.u32 %v226, 127
      %228 = vset.pattern.permute.xlu0 0
      %229 = vperm.xlu0 %228, %v218
      %v230 = vpop.permute.xlu0 %229
      %231 = vset.pattern.permute.xlu0 0
      %232 = vperm.xlu0 %231, %v219
      %v233 = vpop.permute.xlu0 %232
      %234 = vset.pattern.permute.xlu0 0
      %235 = vperm.xlu0 %234, %v220
      %v236 = vpop.permute.xlu0 %235
      %237 = vset.pattern.permute.xlu0 0
      %238 = vperm.xlu0 %237, %v221
      %v239 = vpop.permute.xlu0 %238
      %240 = vset.pattern.permute.xlu0 0
      %241 = vperm.xlu0 %240, %v222
      %v242 = vpop.permute.xlu0 %241
      %243 = vset.pattern.permute.xlu0 0
      %244 = vperm.xlu0 %243, %v223
      %v245 = vpop.permute.xlu0 %244
      %246 = vset.pattern.permute.xlu0 0
      %247 = vperm.xlu0 %246, %v224
      %v248 = vpop.permute.xlu0 %247
      %249 = vset.pattern.permute.xlu0 0
      %250 = vperm.xlu0 %249, %v225
      %v251 = vpop.permute.xlu0 %250
      %vm252 = vcmp.eq.s32.totalorder %v230, %v227
      %vm253 = vcmp.eq.s32.totalorder %v233, %v227
      %vm254 = vcmp.eq.s32.totalorder %v236, %v227
      %vm255 = vcmp.eq.s32.totalorder %v239, %v227
      %vm256 = vcmp.eq.s32.totalorder %v242, %v227
      %vm257 = vcmp.eq.s32.totalorder %v245, %v227
      %vm258 = vcmp.eq.s32.totalorder %v248, %v227
      %vm259 = vcmp.eq.s32.totalorder %v251, %v227
      %v260 = vsel %vm252, 1.0, 0.0
      %v261 = vsel %vm253, 1.0, 0.0
      %v262 = vsel %vm254, 1.0, 0.0
      %v263 = vsel %vm255, 1.0, 0.0
      %v264 = vsel %vm256, 1.0, 0.0
      %v265 = vsel %vm257, 1.0, 0.0
      %v266 = vsel %vm258, 1.0, 0.0
      %v267 = vsel %vm259, 1.0, 0.0
      %v268 = vpack.c.bf16 %v261, %v260
      %v269 = vpack.c.bf16 %v263, %v262
      %v270 = vpack.c.bf16 %v265, %v264
      %v271 = vpack.c.bf16 %v267, %v266
      %v288 = vunpack.c.l.b16 %v202
      %v289 = vunpack.c.l.b16 %v203
      %v290 = vunpack.c.l.b16 %v204
      %v291 = vunpack.c.l.b16 %v205
      %v292 = vunpack.c.l.b16 %v206
      %v293 = vunpack.c.l.b16 %v207
      %v294 = vunpack.c.l.b16 %v208
      %v295 = vunpack.c.l.b16 %v209
      %v296 = vunpack.c.l.b16 %v210
      %v297 = vunpack.c.l.b16 %v211
      %v298 = vunpack.c.l.b16 %v212
      %v299 = vunpack.c.l.b16 %v213
      %v300 = vunpack.c.l.b16 %v214
      %v301 = vunpack.c.l.b16 %v215
      %v302 = vunpack.c.l.b16 %v216
      %v303 = vunpack.c.l.b16 %v217
      %v304 = vpack.c.b16 %v289, %v288
      %v305 = vpack.c.b16 %v291, %v290
      %v306 = vpack.c.b16 %v293, %v292
      %v307 = vpack.c.b16 %v295, %v294
      %v308 = vpack.c.b16 %v297, %v296
      %v309 = vpack.c.b16 %v299, %v298
      %v310 = vpack.c.b16 %v301, %v300
      %v311 = vpack.c.b16 %v303, %v302
      %320 = vmatprep.subr.bf16.mxu0 0
      %321 = vmatpush1.bf16.msra.mxu0 %v304
      %322 = vmatprep.subr.bf16.mxu0 0
      %323 = vmatpush1.bf16.msra.mxu0 %v305
      %324 = vmatprep.subr.bf16.mxu0 0
      %325 = vmatpush1.bf16.msra.mxu0 %v306
      %326 = vmatprep.subr.bf16.mxu0 0
      %327 = vmatpush1.bf16.msra.mxu0 %v307
      %328 = vmatprep.subr.bf16.mxu0 0
      %329 = vmatpush1.bf16.msra.mxu0 %v308
      %330 = vmatprep.subr.bf16.mxu0 0
      %331 = vmatpush1.bf16.msra.mxu0 %v309
      %332 = vmatprep.subr.bf16.mxu0 0
      %333 = vmatpush1.bf16.msra.mxu0 %v310
      %334 = vmatprep.subr.bf16.mxu0 0
      %335 = vmatpush1.bf16.msra.mxu0 %v311
      %336 = vmatprep.subr.bf16.mxu0 0
      %337 = vmatpush1.bf16.msra.mxu0 0
      %338 = vmatprep.subr.bf16.mxu0 0
      %339 = vmatpush1.bf16.msra.mxu0 0
      %340 = vmatprep.subr.bf16.mxu0 0
      %341 = vmatpush1.bf16.msra.mxu0 0
      %342 = vmatprep.subr.bf16.mxu0 0
      %343 = vmatpush1.bf16.msra.mxu0 0
      %344 = vmatprep.subr.bf16.mxu0 0
      %345 = vmatpush1.bf16.msra.mxu0 0
      %346 = vmatprep.subr.bf16.mxu0 0
      %347 = vmatpush1.bf16.msra.mxu0 0
      %348 = vmatprep.subr.bf16.mxu0 0
      %349 = vmatpush1.bf16.msra.mxu0 0
      %350 = vmatprep.subr.bf16.mxu0 0
      %351 = vmatpush1.bf16.msra.mxu0 0
      %352 = vmatprep.mubr.bf16.mxu0 0
      %353 = vmatmul.mubr.bf16.gmra.mrb[0].mxu0 %v268
      %v354 = vpop.f32.mrb[0].mxu0
      %v355 = vadd.f32 0.0, %v354
      %v356 = vpop.f32.mrb[0].mxu0
      %v357 = vpop.f32.mrb[0].mxu0
      %v358 = vadd.f32 0.0, %v357
      %v359 = vpop.f32.mrb[0].mxu0
      %360 = vmatprep.mubr.bf16.mxu0 0
      %361 = vmatmul.mubr.bf16.gmra.mrb[0].mxu0 %v269
      %v362 = vpop.f32.mrb[0].mxu0
      %v363 = vadd.f32 0.0, %v362
      %v364 = vpop.f32.mrb[0].mxu0
      %v365 = vpop.f32.mrb[0].mxu0
      %v366 = vadd.f32 0.0, %v365
      %v367 = vpop.f32.mrb[0].mxu0
      %368 = vmatprep.mubr.bf16.mxu0 0
      %369 = vmatmul.mubr.bf16.gmra.mrb[0].mxu0 %v270
      %v370 = vpop.f32.mrb[0].mxu0
      %v371 = vadd.f32 0.0, %v370
      %v372 = vpop.f32.mrb[0].mxu0
      %v373 = vpop.f32.mrb[0].mxu0
      %v374 = vadd.f32 0.0, %v373
      %v375 = vpop.f32.mrb[0].mxu0
      %376 = vmatprep.mubr.bf16.mxu0 0
      %377 = vmatmul.mubr.bf16.gmra.mrb[0].mxu0 %v271
      %v378 = vpop.f32.mrb[0].mxu0
      %v379 = vadd.f32 0.0, %v378
      %v380 = vpop.f32.mrb[0].mxu0
      %v381 = vpop.f32.mrb[0].mxu0
      %v382 = vadd.f32 0.0, %v381
      %v383 = vpop.f32.mrb[0].mxu0
      %384 = vdwg.mxu0
      %v385 = vpack.c.bf16 %v358, %v355
      %v386 = vpack.c.bf16 %v366, %v363
      %v387 = vpack.c.bf16 %v374, %v371
      %v388 = vpack.c.bf16 %v382, %v379
      %vm389 = vcmask 64512
      %390 = vst.msk [vmem:[#allocation2] sm:$0xff] %vm389, %v385
      %391 = vst.msk [vmem:[#allocation2 + $0x10] sm:$0xff] %vm389, %v386
      %392 = vst.msk [vmem:[#allocation2 + $0x20] sm:$0xff] %vm389, %v387
      %393 = vst.msk [vmem:[#allocation2 + $0x30] sm:$0xff] %vm389, %v388
      %394 = vset.pattern.permute.xlu0 1
      %395 = vperm.xlu0 %394, %v218
      %v396 = vpop.permute.xlu0 %395
      %397 = vset.pattern.permute.xlu0 1
      %398 = vperm.xlu0 %397, %v219
      %v399 = vpop.permute.xlu0 %398
      %400 = vset.pattern.permute.xlu0 1
      %401 = vperm.xlu0 %400, %v220
      %v402 = vpop.permute.xlu0 %401
      %403 = vset.pattern.permute.xlu0 1
      %404 = vperm.xlu0 %403, %v221
      %v405 = vpop.permute.xlu0 %404
      %406 = vset.pattern.permute.xlu0 1
      %407 = vperm.xlu0 %406, %v222
      %v408 = vpop.permute.xlu0 %407
      %409 = vset.pattern.permute.xlu0 1
      %410 = vperm.xlu0 %409, %v223
      %v411 = vpop.permute.xlu0 %410
      %412 = vset.pattern.permute.xlu0 1
      %413 = vperm.xlu0 %412, %v224
      %v414 = vpop.permute.xlu0 %413
      %415 = vset.pattern.permute.xlu0 1
      %416 = vperm.xlu0 %415, %v225
      %v417 = vpop.permute.xlu0 %416
      %vm418 = vcmp.eq.s32.totalorder %v396, %v227
      %vm419 = vcmp.eq.s32.totalorder %v399, %v227
      %vm420 = vcmp.eq.s32.totalorder %v402, %v227
      %vm421 = vcmp.eq.s32.totalorder %v405, %v227
      %vm422 = vcmp.eq.s32.totalorder %v408, %v227
      %vm423 = vcmp.eq.s32.totalorder %v411, %v227
      %vm424 = vcmp.eq.s32.totalorder %v414, %v227
      %vm425 = vcmp.eq.s32.totalorder %v417, %v227
      %v426 = vsel %vm418, 1.0, 0.0
      %v427 = vsel %vm419, 1.0, 0.0
      %v428 = vsel %vm420, 1.0, 0.0
      %v429 = vsel %vm421, 1.0, 0.0
      %v430 = vsel %vm422, 1.0, 0.0
      %v431 = vsel %vm423, 1.0, 0.0
      %v432 = vsel %vm424, 1.0, 0.0
      %v433 = vsel %vm425, 1.0, 0.0
      %v434 = vpack.c.bf16 %v427, %v426
      %v435 = vpack.c.bf16 %v429, %v428
      %v436 = vpack.c.bf16 %v431, %v430
      %v437 = vpack.c.bf16 %v433, %v432
      %438 = vmatprep.subr.bf16.mxu0 0
      %439 = vmatpush1.bf16.msra.mxu0 %v304
      %440 = vmatprep.subr.bf16.mxu0 0
      %441 = vmatpush1.bf16.msra.mxu0 %v305
      %442 = vmatprep.subr.bf16.mxu0 0
      %443 = vmatpush1.bf16.msra.mxu0 %v306
      %444 = vmatprep.subr.bf16.mxu0 0
      %445 = vmatpush1.bf16.msra.mxu0 %v307
      %446 = vmatprep.subr.bf16.mxu0 0
      %447 = vmatpush1.bf16.msra.mxu0 %v308
      %448 = vmatprep.subr.bf16.mxu0 0
      %449 = vmatpush1.bf16.msra.mxu0 %v309
      %450 = vmatprep.subr.bf16.mxu0 0
      %451 = vmatpush1.bf16.msra.mxu0 %v310
      %452 = vmatprep.subr.bf16.mxu0 0
      %453 = vmatpush1.bf16.msra.mxu0 %v311
      %454 = vmatprep.subr.bf16.mxu0 0
      %455 = vmatpush1.bf16.msra.mxu0 0
      %456 = vmatprep.subr.bf16.mxu0 0
      %457 = vmatpush1.bf16.msra.mxu0 0
      %458 = vmatprep.subr.bf16.mxu0 0
      %459 = vmatpush1.bf16.msra.mxu0 0
      %460 = vmatprep.subr.bf16.mxu0 0
      %461 = vmatpush1.bf16.msra.mxu0 0
      %462 = vmatprep.subr.bf16.mxu0 0
      %463 = vmatpush1.bf16.msra.mxu0 0
      %464 = vmatprep.subr.bf16.mxu0 0
      %465 = vmatpush1.bf16.msra.mxu0 0
      %466 = vmatprep.subr.bf16.mxu0 0
      %467 = vmatpush1.bf16.msra.mxu0 0
      %468 = vmatprep.subr.bf16.mxu0 0
      %469 = vmatpush1.bf16.msra.mxu0 0
      %470 = vmatprep.mubr.bf16.mxu0 0
      %471 = vmatmul.mubr.bf16.gmra.mrb[0].mxu0 %v434
      %v472 = vpop.f32.mrb[0].mxu0
      %v473 = vadd.f32 0.0, %v472
      %v474 = vpop.f32.mrb[0].mxu0
      %v475 = vpop.f32.mrb[0].mxu0
      %v476 = vadd.f32 0.0, %v475
      %v477 = vpop.f32.mrb[0].mxu0
      %478 = vmatprep.mubr.bf16.mxu0 0
      %479 = vmatmul.mubr.bf16.gmra.mrb[0].mxu0 %v435
      %v480 = vpop.f32.mrb[0].mxu0
      %v481 = vadd.f32 0.0, %v480
      %v482 = vpop.f32.mrb[0].mxu0
      %v483 = vpop.f32.mrb[0].mxu0
      %v484 = vadd.f32 0.0, %v483
      %v485 = vpop.f32.mrb[0].mxu0
      %486 = vmatprep.mubr.bf16.mxu0 0
      %487 = vmatmul.mubr.bf16.gmra.mrb[0].mxu0 %v436
      %v488 = vpop.f32.mrb[0].mxu0
      %v489 = vadd.f32 0.0, %v488
      %v490 = vpop.f32.mrb[0].mxu0
      %v491 = vpop.f32.mrb[0].mxu0
      %v492 = vadd.f32 0.0, %v491
      %v493 = vpop.f32.mrb[0].mxu0
      %494 = vmatprep.mubr.bf16.mxu0 0
      %495 = vmatmul.mubr.bf16.gmra.mrb[0].mxu0 %v437
      %v496 = vpop.f32.mrb[0].mxu0
      %v497 = vadd.f32 0.0, %v496
      %v498 = vpop.f32.mrb[0].mxu0
      %v499 = vpop.f32.mrb[0].mxu0
      %v500 = vadd.f32 0.0, %v499
      %v501 = vpop.f32.mrb[0].mxu0
      %502 = vdwg.mxu0
      %v503 = vpack.c.bf16 %v476, %v473
      %v504 = vpack.c.bf16 %v484, %v481
      %v505 = vpack.c.bf16 %v492, %v489
      %v506 = vpack.c.bf16 %v500, %v497
      %511 = vrot.lane.b32.xlu0 %v503, 8
      %v512 = vpop.permute.xlu0 %511
      %513 = vrot.lane.b32.xlu0 %v504, 8
      %v514 = vpop.permute.xlu0 %513
      %515 = vrot.lane.b32.xlu0 %v505, 8
      %v516 = vpop.permute.xlu0 %515
      %517 = vrot.lane.b32.xlu0 %v506, 8
      %v518 = vpop.permute.xlu0 %517
      %vm523 = vcmask 130112
      %524 = vst.msk [vmem:[#allocation2] sm:$0xff] %vm523, %v512
      %525 = vst.msk [vmem:[#allocation2 + $0x10] sm:$0xff] %vm523, %v514
      %526 = vst.msk [vmem:[#allocation2 + $0x20] sm:$0xff] %vm523, %v516
      %527 = vst.msk [vmem:[#allocation2 + $0x30] sm:$0xff] %vm523, %v518
      %528 = vset.pattern.permute.xlu0 2
      %529 = vperm.xlu0 %528, %v218
      %v530 = vpop.permute.xlu0 %529
      %531 = vset.pattern.permute.xlu0 2
      %532 = vperm.xlu0 %531, %v219
      %v533 = vpop.permute.xlu0 %532
      %534 = vset.pattern.permute.xlu0 2
      %535 = vperm.xlu0 %534, %v220
      %v536 = vpop.permute.xlu0 %535
      %537 = vset.pattern.permute.xlu0 2
      %538 = vperm.xlu0 %537, %v221
      %v539 = vpop.permute.xlu0 %538
      %540 = vset.pattern.permute.xlu0 2
      %541 = vperm.xlu0 %540, %v222
      %v542 = vpop.permute.xlu0 %541
      %543 = vset.pattern.permute.xlu0 2
      %544 = vperm.xlu0 %543, %v223
      %v545 = vpop.permute.xlu0 %544
      %546 = vset.pattern.permute.xlu0 2
      %547 = vperm.xlu0 %546, %v224
      %v548 = vpop.permute.xlu0 %547
      %549 = vset.pattern.permute.xlu0 2
      %550 = vperm.xlu0 %549, %v225
      %v551 = vpop.permute.xlu0 %550
      %vm552 = vcmp.eq.s32.totalorder %v530, %v227
      %vm553 = vcmp.eq.s32.totalorder %v533, %v227
      %vm554 = vcmp.eq.s32.totalorder %v536, %v227
      %vm555 = vcmp.eq.s32.totalorder %v539, %v227
      %vm556 = vcmp.eq.s32.totalorder %v542, %v227
      %vm557 = vcmp.eq.s32.totalorder %v545, %v227
      %vm558 = vcmp.eq.s32.totalorder %v548, %v227
      %vm559 = vcmp.eq.s32.totalorder %v551, %v227
      %v560 = vsel %vm552, 1.0, 0.0
      %v561 = vsel %vm553, 1.0, 0.0
      %v562 = vsel %vm554, 1.0, 0.0
      %v563 = vsel %vm555, 1.0, 0.0
      %v564 = vsel %vm556, 1.0, 0.0
      %v565 = vsel %vm557, 1.0, 0.0
      %v566 = vsel %vm558, 1.0, 0.0
      %v567 = vsel %vm559, 1.0, 0.0
      %v568 = vpack.c.bf16 %v561, %v560
      %v569 = vpack.c.bf16 %v563, %v562
      %v570 = vpack.c.bf16 %v565, %v564
      %v571 = vpack.c.bf16 %v567, %v566
      %572 = vmatprep.subr.bf16.mxu0 0
      %573 = vmatpush1.bf16.msra.mxu0 %v304
      %574 = vmatprep.subr.bf16.mxu0 0
      %575 = vmatpush1.bf16.msra.mxu0 %v305
      %576 = vmatprep.subr.bf16.mxu0 0
      %577 = vmatpush1.bf16.msra.mxu0 %v306
      %578 = vmatprep.subr.bf16.mxu0 0
      %579 = vmatpush1.bf16.msra.mxu0 %v307
      %580 = vmatprep.subr.bf16.mxu0 0
      %581 = vmatpush1.bf16.msra.mxu0 %v308
      %582 = vmatprep.subr.bf16.mxu0 0
      %583 = vmatpush1.bf16.msra.mxu0 %v309
      %584 = vmatprep.subr.bf16.mxu0 0
      %585 = vmatpush1.bf16.msra.mxu0 %v310
      %586 = vmatprep.subr.bf16.mxu0 0
      %587 = vmatpush1.bf16.msra.mxu0 %v311
      %588 = vmatprep.subr.bf16.mxu0 0
      %589 = vmatpush1.bf16.msra.mxu0 0
      %590 = vmatprep.subr.bf16.mxu0 0
      %591 = vmatpush1.bf16.msra.mxu0 0
      %592 = vmatprep.subr.bf16.mxu0 0
      %593 = vmatpush1.bf16.msra.mxu0 0
      %594 = vmatprep.subr.bf16.mxu0 0
      %595 = vmatpush1.bf16.msra.mxu0 0
      %596 = vmatprep.subr.bf16.mxu0 0
      %597 = vmatpush1.bf16.msra.mxu0 0
      %598 = vmatprep.subr.bf16.mxu0 0
      %599 = vmatpush1.bf16.msra.mxu0 0
      %600 = vmatprep.subr.bf16.mxu0 0
      %601 = vmatpush1.bf16.msra.mxu0 0
      %602 = vmatprep.subr.bf16.mxu0 0
      %603 = vmatpush1.bf16.msra.mxu0 0
      %604 = vmatprep.mubr.bf16.mxu0 0
      %605 = vmatmul.mubr.bf16.gmra.mrb[0].mxu0 %v568
      %v606 = vpop.f32.mrb[0].mxu0
      %v607 = vadd.f32 0.0, %v606
      %v608 = vpop.f32.mrb[0].mxu0
      %v609 = vpop.f32.mrb[0].mxu0
      %v610 = vadd.f32 0.0, %v609
      %v611 = vpop.f32.mrb[0].mxu0
      %612 = vmatprep.mubr.bf16.mxu0 0
      %613 = vmatmul.mubr.bf16.gmra.mrb[0].mxu0 %v569
      %v614 = vpop.f32.mrb[0].mxu0
      %v615 = vadd.f32 0.0, %v614
      %v616 = vpop.f32.mrb[0].mxu0
      %v617 = vpop.f32.mrb[0].mxu0
      %v618 = vadd.f32 0.0, %v617
      %v619 = vpop.f32.mrb[0].mxu0
      %620 = vmatprep.mubr.bf16.mxu0 0
      %621 = vmatmul.mubr.bf16.gmra.mrb[0].mxu0 %v570
      %v622 = vpop.f32.mrb[0].mxu0
      %v623 = vadd.f32 0.0, %v622
      %v624 = vpop.f32.mrb[0].mxu0
      %v625 = vpop.f32.mrb[0].mxu0
      %v626 = vadd.f32 0.0, %v625
      %v627 = vpop.f32.mrb[0].mxu0
      %628 = vmatprep.mubr.bf16.mxu0 0
      %629 = vmatmul.mubr.bf16.gmra.mrb[0].mxu0 %v571
      %v630 = vpop.f32.mrb[0].mxu0
      %v631 = vadd.f32 0.0, %v630
      %v632 = vpop.f32.mrb[0].mxu0
      %v633 = vpop.f32.mrb[0].mxu0
      %v634 = vadd.f32 0.0, %v633
      %v635 = vpop.f32.mrb[0].mxu0
      %636 = vdwg.mxu0
      %v637 = vpack.c.bf16 %v610, %v607
      %v638 = vpack.c.bf16 %v618, %v615
      %v639 = vpack.c.bf16 %v626, %v623
      %v640 = vpack.c.bf16 %v634, %v631
      %645 = vrot.lane.b32.xlu0 %v637, 16
      %v646 = vpop.permute.xlu0 %645
      %647 = vrot.lane.b32.xlu0 %v638, 16
      %v648 = vpop.permute.xlu0 %647
      %649 = vrot.lane.b32.xlu0 %v639, 16
      %v650 = vpop.permute.xlu0 %649
      %651 = vrot.lane.b32.xlu0 %v640, 16
      %v652 = vpop.permute.xlu0 %651
      %vm657 = vcmask 195712
      %658 = vst.msk [vmem:[#allocation2] sm:$0xff] %vm657, %v646
      %659 = vst.msk [vmem:[#allocation2 + $0x10] sm:$0xff] %vm657, %v648
      %660 = vst.msk [vmem:[#allocation2 + $0x20] sm:$0xff] %vm657, %v650
      %661 = vst.msk [vmem:[#allocation2 + $0x30] sm:$0xff] %vm657, %v652
      %662 = vset.pattern.permute.xlu0 3
      %663 = vperm.xlu0 %662, %v218
      %v664 = vpop.permute.xlu0 %663
      %665 = vset.pattern.permute.xlu0 3
      %666 = vperm.xlu0 %665, %v219
      %v667 = vpop.permute.xlu0 %666
      %668 = vset.pattern.permute.xlu0 3
      %669 = vperm.xlu0 %668, %v220
      %v670 = vpop.permute.xlu0 %669
      %671 = vset.pattern.permute.xlu0 3
      %672 = vperm.xlu0 %671, %v221
      %v673 = vpop.permute.xlu0 %672
      %674 = vset.pattern.permute.xlu0 3
      %675 = vperm.xlu0 %674, %v222
      %v676 = vpop.permute.xlu0 %675
      %677 = vset.pattern.permute.xlu0 3
      %678 = vperm.xlu0 %677, %v223
      %v679 = vpop.permute.xlu0 %678
      %680 = vset.pattern.permute.xlu0 3
      %681 = vperm.xlu0 %680, %v224
      %v682 = vpop.permute.xlu0 %681
      %683 = vset.pattern.permute.xlu0 3
      %684 = vperm.xlu0 %683, %v225
      %v685 = vpop.permute.xlu0 %684
      %vm686 = vcmp.eq.s32.totalorder %v664, %v227
      %vm687 = vcmp.eq.s32.totalorder %v667, %v227
      %vm688 = vcmp.eq.s32.totalorder %v670, %v227
      %vm689 = vcmp.eq.s32.totalorder %v673, %v227
      %vm690 = vcmp.eq.s32.totalorder %v676, %v227
      %vm691 = vcmp.eq.s32.totalorder %v679, %v227
      %vm692 = vcmp.eq.s32.totalorder %v682, %v227
      %vm693 = vcmp.eq.s32.totalorder %v685, %v227
      %v694 = vsel %vm686, 1.0, 0.0
      %v695 = vsel %vm687, 1.0, 0.0
      %v696 = vsel %vm688, 1.0, 0.0
      %v697 = vsel %vm689, 1.0, 0.0
      %v698 = vsel %vm690, 1.0, 0.0
      %v699 = vsel %vm691, 1.0, 0.0
      %v700 = vsel %vm692, 1.0, 0.0
      %v701 = vsel %vm693, 1.0, 0.0
      %v702 = vpack.c.bf16 %v695, %v694
      %v703 = vpack.c.bf16 %v697, %v696
      %v704 = vpack.c.bf16 %v699, %v698
      %v705 = vpack.c.bf16 %v701, %v700
      %706 = vmatprep.subr.bf16.mxu0 0
      %707 = vmatpush1.bf16.msra.mxu0 %v304
      %708 = vmatprep.subr.bf16.mxu0 0
      %709 = vmatpush1.bf16.msra.mxu0 %v305
      %710 = vmatprep.subr.bf16.mxu0 0
      %711 = vmatpush1.bf16.msra.mxu0 %v306
      %712 = vmatprep.subr.bf16.mxu0 0
      %713 = vmatpush1.bf16.msra.mxu0 %v307
      %714 = vmatprep.subr.bf16.mxu0 0
      %715 = vmatpush1.bf16.msra.mxu0 %v308
      %716 = vmatprep.subr.bf16.mxu0 0
      %717 = vmatpush1.bf16.msra.mxu0 %v309
      %718 = vmatprep.subr.bf16.mxu0 0
      %719 = vmatpush1.bf16.msra.mxu0 %v310
      %720 = vmatprep.subr.bf16.mxu0 0
      %721 = vmatpush1.bf16.msra.mxu0 %v311
      %722 = vmatprep.subr.bf16.mxu0 0
      %723 = vmatpush1.bf16.msra.mxu0 0
      %724 = vmatprep.subr.bf16.mxu0 0
      %725 = vmatpush1.bf16.msra.mxu0 0
      %726 = vmatprep.subr.bf16.mxu0 0
      %727 = vmatpush1.bf16.msra.mxu0 0
      %728 = vmatprep.subr.bf16.mxu0 0
      %729 = vmatpush1.bf16.msra.mxu0 0
      %730 = vmatprep.subr.bf16.mxu0 0
      %731 = vmatpush1.bf16.msra.mxu0 0
      %732 = vmatprep.subr.bf16.mxu0 0
      %733 = vmatpush1.bf16.msra.mxu0 0
      %734 = vmatprep.subr.bf16.mxu0 0
      %735 = vmatpush1.bf16.msra.mxu0 0
      %736 = vmatprep.subr.bf16.mxu0 0
      %737 = vmatpush1.bf16.msra.mxu0 0
      %738 = vmatprep.mubr.bf16.mxu0 0
      %739 = vmatmul.mubr.bf16.gmra.mrb[0].mxu0 %v702
      %v740 = vpop.f32.mrb[0].mxu0
      %v741 = vadd.f32 0.0, %v740
      %v742 = vpop.f32.mrb[0].mxu0
      %v743 = vpop.f32.mrb[0].mxu0
      %v744 = vadd.f32 0.0, %v743
      %v745 = vpop.f32.mrb[0].mxu0
      %746 = vmatprep.mubr.bf16.mxu0 0
      %747 = vmatmul.mubr.bf16.gmra.mrb[0].mxu0 %v703
      %v748 = vpop.f32.mrb[0].mxu0
      %v749 = vadd.f32 0.0, %v748
      %v750 = vpop.f32.mrb[0].mxu0
      %v751 = vpop.f32.mrb[0].mxu0
      %v752 = vadd.f32 0.0, %v751
      %v753 = vpop.f32.mrb[0].mxu0
      %754 = vmatprep.mubr.bf16.mxu0 0
      %755 = vmatmul.mubr.bf16.gmra.mrb[0].mxu0 %v704
      %v756 = vpop.f32.mrb[0].mxu0
      %v757 = vadd.f32 0.0, %v756
      %v758 = vpop.f32.mrb[0].mxu0
      %v759 = vpop.f32.mrb[0].mxu0
      %v760 = vadd.f32 0.0, %v759
      %v761 = vpop.f32.mrb[0].mxu0
      %762 = vmatprep.mubr.bf16.mxu0 0
      %763 = vmatmul.mubr.bf16.gmra.mrb[0].mxu0 %v705
      %v764 = vpop.f32.mrb[0].mxu0
      %v765 = vadd.f32 0.0, %v764
      %v766 = vpop.f32.mrb[0].mxu0
      %v767 = vpop.f32.mrb[0].mxu0
      %v768 = vadd.f32 0.0, %v767
      %v769 = vpop.f32.mrb[0].mxu0
      %770 = vdwg.mxu0
      %v771 = vpack.c.bf16 %v744, %v741
      %v772 = vpack.c.bf16 %v752, %v749
      %v773 = vpack.c.bf16 %v760, %v757
      %v774 = vpack.c.bf16 %v768, %v765
      %779 = vrot.lane.b32.xlu0 %v771, 24
      %v780 = vpop.permute.xlu0 %779
      %781 = vrot.lane.b32.xlu0 %v772, 24
      %v782 = vpop.permute.xlu0 %781
      %783 = vrot.lane.b32.xlu0 %v773, 24
      %v784 = vpop.permute.xlu0 %783
      %785 = vrot.lane.b32.xlu0 %v774, 24
      %v786 = vpop.permute.xlu0 %785
      %vm791 = vcmask 261312
      %792 = vst.msk [vmem:[#allocation2] sm:$0xff] %vm791, %v780
      %793 = vst.msk [vmem:[#allocation2 + $0x10] sm:$0xff] %vm791, %v782
      %794 = vst.msk [vmem:[#allocation2 + $0x20] sm:$0xff] %vm791, %v784
      %795 = vst.msk [vmem:[#allocation2 + $0x30] sm:$0xff] %vm791, %v786
      %796 = vset.pattern.permute.xlu0 4
      %797 = vperm.xlu0 %796, %v218
      %v798 = vpop.permute.xlu0 %797
      %799 = vset.pattern.permute.xlu0 4
      %800 = vperm.xlu0 %799, %v219
      %v801 = vpop.permute.xlu0 %800
      %802 = vset.pattern.permute.xlu0 4
      %803 = vperm.xlu0 %802, %v220
      %v804 = vpop.permute.xlu0 %803
      %805 = vset.pattern.permute.xlu0 4
      %806 = vperm.xlu0 %805, %v221
      %v807 = vpop.permute.xlu0 %806
      %808 = vset.pattern.permute.xlu0 4
      %809 = vperm.xlu0 %808, %v222
      %v810 = vpop.permute.xlu0 %809
      %811 = vset.pattern.permute.xlu0 4
      %812 = vperm.xlu0 %811, %v223
      %v813 = vpop.permute.xlu0 %812
      %814 = vset.pattern.permute.xlu0 4
      %815 = vperm.xlu0 %814, %v224
      %v816 = vpop.permute.xlu0 %815
      %817 = vset.pattern.permute.xlu0 4
      %818 = vperm.xlu0 %817, %v225
      %v819 = vpop.permute.xlu0 %818
      %vm820 = vcmp.eq.s32.totalorder %v798, %v227
      %vm821 = vcmp.eq.s32.totalorder %v801, %v227
      %vm822 = vcmp.eq.s32.totalorder %v804, %v227
      %vm823 = vcmp.eq.s32.totalorder %v807, %v227
      %vm824 = vcmp.eq.s32.totalorder %v810, %v227
      %vm825 = vcmp.eq.s32.totalorder %v813, %v227
      %vm826 = vcmp.eq.s32.totalorder %v816, %v227
      %vm827 = vcmp.eq.s32.totalorder %v819, %v227
      %v828 = vsel %vm820, 1.0, 0.0
      %v829 = vsel %vm821, 1.0, 0.0
      %v830 = vsel %vm822, 1.0, 0.0
      %v831 = vsel %vm823, 1.0, 0.0
      %v832 = vsel %vm824, 1.0, 0.0
      %v833 = vsel %vm825, 1.0, 0.0
      %v834 = vsel %vm826, 1.0, 0.0
      %v835 = vsel %vm827, 1.0, 0.0
      %v836 = vpack.c.bf16 %v829, %v828
      %v837 = vpack.c.bf16 %v831, %v830
      %v838 = vpack.c.bf16 %v833, %v832
      %v839 = vpack.c.bf16 %v835, %v834
      %840 = vmatprep.subr.bf16.mxu0 0
      %841 = vmatpush1.bf16.msra.mxu0 %v304
      %842 = vmatprep.subr.bf16.mxu0 0
      %843 = vmatpush1.bf16.msra.mxu0 %v305
      %844 = vmatprep.subr.bf16.mxu0 0
      %845 = vmatpush1.bf16.msra.mxu0 %v306
      %846 = vmatprep.subr.bf16.mxu0 0
      %847 = vmatpush1.bf16.msra.mxu0 %v307
      %848 = vmatprep.subr.bf16.mxu0 0
      %849 = vmatpush1.bf16.msra.mxu0 %v308
      %850 = vmatprep.subr.bf16.mxu0 0
      %851 = vmatpush1.bf16.msra.mxu0 %v309
      %852 = vmatprep.subr.bf16.mxu0 0
      %853 = vmatpush1.bf16.msra.mxu0 %v310
      %854 = vmatprep.subr.bf16.mxu0 0
      %855 = vmatpush1.bf16.msra.mxu0 %v311
      %856 = vmatprep.subr.bf16.mxu0 0
      %857 = vmatpush1.bf16.msra.mxu0 0
      %858 = vmatprep.subr.bf16.mxu0 0
      %859 = vmatpush1.bf16.msra.mxu0 0
      %860 = vmatprep.subr.bf16.mxu0 0
      %861 = vmatpush1.bf16.msra.mxu0 0
      %862 = vmatprep.subr.bf16.mxu0 0
      %863 = vmatpush1.bf16.msra.mxu0 0
      %864 = vmatprep.subr.bf16.mxu0 0
      %865 = vmatpush1.bf16.msra.mxu0 0
      %866 = vmatprep.subr.bf16.mxu0 0
      %867 = vmatpush1.bf16.msra.mxu0 0
      %868 = vmatprep.subr.bf16.mxu0 0
      %869 = vmatpush1.bf16.msra.mxu0 0
      %870 = vmatprep.subr.bf16.mxu0 0
      %871 = vmatpush1.bf16.msra.mxu0 0
      %872 = vmatprep.mubr.bf16.mxu0 0
      %873 = vmatmul.mubr.bf16.gmra.mrb[0].mxu0 %v836
      %v874 = vpop.f32.mrb[0].mxu0
      %v875 = vadd.f32 0.0, %v874
      %v876 = vpop.f32.mrb[0].mxu0
      %v877 = vpop.f32.mrb[0].mxu0
      %v878 = vadd.f32 0.0, %v877
      %v879 = vpop.f32.mrb[0].mxu0
      %880 = vmatprep.mubr.bf16.mxu0 0
      %881 = vmatmul.mubr.bf16.gmra.mrb[0].mxu0 %v837
      %v882 = vpop.f32.mrb[0].mxu0
      %v883 = vadd.f32 0.0, %v882
      %v884 = vpop.f32.mrb[0].mxu0
      %v885 = vpop.f32.mrb[0].mxu0
      %v886 = vadd.f32 0.0, %v885
      %v887 = vpop.f32.mrb[0].mxu0
      %888 = vmatprep.mubr.bf16.mxu0 0
      %889 = vmatmul.mubr.bf16.gmra.mrb[0].mxu0 %v838
      %v890 = vpop.f32.mrb[0].mxu0
      %v891 = vadd.f32 0.0, %v890
      %v892 = vpop.f32.mrb[0].mxu0
      %v893 = vpop.f32.mrb[0].mxu0
      %v894 = vadd.f32 0.0, %v893
      %v895 = vpop.f32.mrb[0].mxu0
      %896 = vmatprep.mubr.bf16.mxu0 0
      %897 = vmatmul.mubr.bf16.gmra.mrb[0].mxu0 %v839
      %v898 = vpop.f32.mrb[0].mxu0
      %v899 = vadd.f32 0.0, %v898
      %v900 = vpop.f32.mrb[0].mxu0
      %v901 = vpop.f32.mrb[0].mxu0
      %v902 = vadd.f32 0.0, %v901
      %v903 = vpop.f32.mrb[0].mxu0
      %904 = vdwg.mxu0
      %v905 = vpack.c.bf16 %v878, %v875
      %v906 = vpack.c.bf16 %v886, %v883
      %v907 = vpack.c.bf16 %v894, %v891
      %v908 = vpack.c.bf16 %v902, %v899
      %913 = vrot.lane.b32.xlu0 %v905, 32
      %v914 = vpop.permute.xlu0 %913
      %915 = vrot.lane.b32.xlu0 %v906, 32
      %v916 = vpop.permute.xlu0 %915
      %917 = vrot.lane.b32.xlu0 %v907, 32
      %v918 = vpop.permute.xlu0 %917
      %919 = vrot.lane.b32.xlu0 %v908, 32
      %v920 = vpop.permute.xlu0 %919
      %vm925 = vcmask 326912
      %926 = vst.msk [vmem:[#allocation2] sm:$0xff] %vm925, %v914
      %927 = vst.msk [vmem:[#allocation2 + $0x10] sm:$0xff] %vm925, %v916
      %928 = vst.msk [vmem:[#allocation2 + $0x20] sm:$0xff] %vm925, %v918
      %929 = vst.msk [vmem:[#allocation2 + $0x30] sm:$0xff] %vm925, %v920
      %930 = vset.pattern.permute.xlu0 5
      %931 = vperm.xlu0 %930, %v218
      %v932 = vpop.permute.xlu0 %931
      %933 = vset.pattern.permute.xlu0 5
      %934 = vperm.xlu0 %933, %v219
      %v935 = vpop.permute.xlu0 %934
      %936 = vset.pattern.permute.xlu0 5
      %937 = vperm.xlu0 %936, %v220
      %v938 = vpop.permute.xlu0 %937
      %939 = vset.pattern.permute.xlu0 5
      %940 = vperm.xlu0 %939, %v221
      %v941 = vpop.permute.xlu0 %940
      %942 = vset.pattern.permute.xlu0 5
      %943 = vperm.xlu0 %942, %v222
      %v944 = vpop.permute.xlu0 %943
      %945 = vset.pattern.permute.xlu0 5
      %946 = vperm.xlu0 %945, %v223
      %v947 = vpop.permute.xlu0 %946
      %948 = vset.pattern.permute.xlu0 5
      %949 = vperm.xlu0 %948, %v224
      %v950 = vpop.permute.xlu0 %949
      %951 = vset.pattern.permute.xlu0 5
      %952 = vperm.xlu0 %951, %v225
      %v953 = vpop.permute.xlu0 %952
      %vm954 = vcmp.eq.s32.totalorder %v932, %v227
      %vm955 = vcmp.eq.s32.totalorder %v935, %v227
      %vm956 = vcmp.eq.s32.totalorder %v938, %v227
      %vm957 = vcmp.eq.s32.totalorder %v941, %v227
      %vm958 = vcmp.eq.s32.totalorder %v944, %v227
      %vm959 = vcmp.eq.s32.totalorder %v947, %v227
      %vm960 = vcmp.eq.s32.totalorder %v950, %v227
      %vm961 = vcmp.eq.s32.totalorder %v953, %v227
      %v962 = vsel %vm954, 1.0, 0.0
      %v963 = vsel %vm955, 1.0, 0.0
      %v964 = vsel %vm956, 1.0, 0.0
      %v965 = vsel %vm957, 1.0, 0.0
      %v966 = vsel %vm958, 1.0, 0.0
      %v967 = vsel %vm959, 1.0, 0.0
      %v968 = vsel %vm960, 1.0, 0.0
      %v969 = vsel %vm961, 1.0, 0.0
      %v970 = vpack.c.bf16 %v963, %v962
      %v971 = vpack.c.bf16 %v965, %v964
      %v972 = vpack.c.bf16 %v967, %v966
      %v973 = vpack.c.bf16 %v969, %v968
      %974 = vmatprep.subr.bf16.mxu0 0
      %975 = vmatpush1.bf16.msra.mxu0 %v304
      %976 = vmatprep.subr.bf16.mxu0 0
      %977 = vmatpush1.bf16.msra.mxu0 %v305
      %978 = vmatprep.subr.bf16.mxu0 0
      %979 = vmatpush1.bf16.msra.mxu0 %v306
      %980 = vmatprep.subr.bf16.mxu0 0
      %981 = vmatpush1.bf16.msra.mxu0 %v307
      %982 = vmatprep.subr.bf16.mxu0 0
      %983 = vmatpush1.bf16.msra.mxu0 %v308
      %984 = vmatprep.subr.bf16.mxu0 0
      %985 = vmatpush1.bf16.msra.mxu0 %v309
      %986 = vmatprep.subr.bf16.mxu0 0
      %987 = vmatpush1.bf16.msra.mxu0 %v310
      %988 = vmatprep.subr.bf16.mxu0 0
      %989 = vmatpush1.bf16.msra.mxu0 %v311
      %990 = vmatprep.subr.bf16.mxu0 0
      %991 = vmatpush1.bf16.msra.mxu0 0
      %992 = vmatprep.subr.bf16.mxu0 0
      %993 = vmatpush1.bf16.msra.mxu0 0
      %994 = vmatprep.subr.bf16.mxu0 0
      %995 = vmatpush1.bf16.msra.mxu0 0
      %996 = vmatprep.subr.bf16.mxu0 0
      %997 = vmatpush1.bf16.msra.mxu0 0
      %998 = vmatprep.subr.bf16.mxu0 0
      %999 = vmatpush1.bf16.msra.mxu0 0
      %1000 = vmatprep.subr.bf16.mxu0 0
      %1001 = vmatpush1.bf16.msra.mxu0 0
      %1002 = vmatprep.subr.bf16.mxu0 0
      %1003 = vmatpush1.bf16.msra.mxu0 0
      %1004 = vmatprep.subr.bf16.mxu0 0
      %1005 = vmatpush1.bf16.msra.mxu0 0
      %1006 = vmatprep.mubr.bf16.mxu0 0
      %1007 = vmatmul.mubr.bf16.gmra.mrb[0].mxu0 %v970
      %v1008 = vpop.f32.mrb[0].mxu0
      %v1009 = vadd.f32 0.0, %v1008
      %v1010 = vpop.f32.mrb[0].mxu0
      %v1011 = vpop.f32.mrb[0].mxu0
      %v1012 = vadd.f32 0.0, %v1011
      %v1013 = vpop.f32.mrb[0].mxu0
      %1014 = vmatprep.mubr.bf16.mxu0 0
      %1015 = vmatmul.mubr.bf16.gmra.mrb[0].mxu0 %v971
      %v1016 = vpop.f32.mrb[0].mxu0
      %v1017 = vadd.f32 0.0, %v1016
      %v1018 = vpop.f32.mrb[0].mxu0
      %v1019 = vpop.f32.mrb[0].mxu0
      %v1020 = vadd.f32 0.0, %v1019
      %v1021 = vpop.f32.mrb[0].mxu0
      %1022 = vmatprep.mubr.bf16.mxu0 0
      %1023 = vmatmul.mubr.bf16.gmra.mrb[0].mxu0 %v972
      %v1024 = vpop.f32.mrb[0].mxu0
      %v1025 = vadd.f32 0.0, %v1024
      %v1026 = vpop.f32.mrb[0].mxu0
      %v1027 = vpop.f32.mrb[0].mxu0
      %v1028 = vadd.f32 0.0, %v1027
      %v1029 = vpop.f32.mrb[0].mxu0
      %1030 = vmatprep.mubr.bf16.mxu0 0
      %1031 = vmatmul.mubr.bf16.gmra.mrb[0].mxu0 %v973
      %v1032 = vpop.f32.mrb[0].mxu0
      %v1033 = vadd.f32 0.0, %v1032
      %v1034 = vpop.f32.mrb[0].mxu0
      %v1035 = vpop.f32.mrb[0].mxu0
      %v1036 = vadd.f32 0.0, %v1035
      %v1037 = vpop.f32.mrb[0].mxu0
      %1038 = vdwg.mxu0
      %v1039 = vpack.c.bf16 %v1012, %v1009
      %v1040 = vpack.c.bf16 %v1020, %v1017
      %v1041 = vpack.c.bf16 %v1028, %v1025
      %v1042 = vpack.c.bf16 %v1036, %v1033
      %1047 = vrot.lane.b32.xlu0 %v1039, 40
      %v1048 = vpop.permute.xlu0 %1047
      %1049 = vrot.lane.b32.xlu0 %v1040, 40
      %v1050 = vpop.permute.xlu0 %1049
      %1051 = vrot.lane.b32.xlu0 %v1041, 40
      %v1052 = vpop.permute.xlu0 %1051
      %1053 = vrot.lane.b32.xlu0 %v1042, 40
      %v1054 = vpop.permute.xlu0 %1053
      %vm1059 = vcmask 392512
      %1060 = vst.msk [vmem:[#allocation2] sm:$0xff] %vm1059, %v1048
      %1061 = vst.msk [vmem:[#allocation2 + $0x10] sm:$0xff] %vm1059, %v1050
      %1062 = vst.msk [vmem:[#allocation2 + $0x20] sm:$0xff] %vm1059, %v1052
      %1063 = vst.msk [vmem:[#allocation2 + $0x30] sm:$0xff] %vm1059, %v1054
      %1064 = vset.pattern.permute.xlu0 6
      %1065 = vperm.xlu0 %1064, %v218
      %v1066 = vpop.permute.xlu0 %1065
      %1067 = vset.pattern.permute.xlu0 6
      %1068 = vperm.xlu0 %1067, %v219
      %v1069 = vpop.permute.xlu0 %1068
      %1070 = vset.pattern.permute.xlu0 6
      %1071 = vperm.xlu0 %1070, %v220
      %v1072 = vpop.permute.xlu0 %1071
      %1073 = vset.pattern.permute.xlu0 6
      %1074 = vperm.xlu0 %1073, %v221
      %v1075 = vpop.permute.xlu0 %1074
      %1076 = vset.pattern.permute.xlu0 6
      %1077 = vperm.xlu0 %1076, %v222
      %v1078 = vpop.permute.xlu0 %1077
      %1079 = vset.pattern.permute.xlu0 6
      %1080 = vperm.xlu0 %1079, %v223
      %v1081 = vpop.permute.xlu0 %1080
      %1082 = vset.pattern.permute.xlu0 6
      %1083 = vperm.xlu0 %1082, %v224
      %v1084 = vpop.permute.xlu0 %1083
      %1085 = vset.pattern.permute.xlu0 6
      %1086 = vperm.xlu0 %1085, %v225
      %v1087 = vpop.permute.xlu0 %1086
      %vm1088 = vcmp.eq.s32.totalorder %v1066, %v227
      %vm1089 = vcmp.eq.s32.totalorder %v1069, %v227
      %vm1090 = vcmp.eq.s32.totalorder %v1072, %v227
      %vm1091 = vcmp.eq.s32.totalorder %v1075, %v227
      %vm1092 = vcmp.eq.s32.totalorder %v1078, %v227
      %vm1093 = vcmp.eq.s32.totalorder %v1081, %v227
      %vm1094 = vcmp.eq.s32.totalorder %v1084, %v227
      %vm1095 = vcmp.eq.s32.totalorder %v1087, %v227
      %v1096 = vsel %vm1088, 1.0, 0.0
      %v1097 = vsel %vm1089, 1.0, 0.0
      %v1098 = vsel %vm1090, 1.0, 0.0
      %v1099 = vsel %vm1091, 1.0, 0.0
      %v1100 = vsel %vm1092, 1.0, 0.0
      %v1101 = vsel %vm1093, 1.0, 0.0
      %v1102 = vsel %vm1094, 1.0, 0.0
      %v1103 = vsel %vm1095, 1.0, 0.0
      %v1104 = vpack.c.bf16 %v1097, %v1096
      %v1105 = vpack.c.bf16 %v1099, %v1098
      %v1106 = vpack.c.bf16 %v1101, %v1100
      %v1107 = vpack.c.bf16 %v1103, %v1102
      %1108 = vmatprep.subr.bf16.mxu0 0
      %1109 = vmatpush1.bf16.msra.mxu0 %v304
      %1110 = vmatprep.subr.bf16.mxu0 0
      %1111 = vmatpush1.bf16.msra.mxu0 %v305
      %1112 = vmatprep.subr.bf16.mxu0 0
      %1113 = vmatpush1.bf16.msra.mxu0 %v306
      %1114 = vmatprep.subr.bf16.mxu0 0
      %1115 = vmatpush1.bf16.msra.mxu0 %v307
      %1116 = vmatprep.subr.bf16.mxu0 0
      %1117 = vmatpush1.bf16.msra.mxu0 %v308
      %1118 = vmatprep.subr.bf16.mxu0 0
      %1119 = vmatpush1.bf16.msra.mxu0 %v309
      %1120 = vmatprep.subr.bf16.mxu0 0
      %1121 = vmatpush1.bf16.msra.mxu0 %v310
      %1122 = vmatprep.subr.bf16.mxu0 0
      %1123 = vmatpush1.bf16.msra.mxu0 %v311
      %1124 = vmatprep.subr.bf16.mxu0 0
      %1125 = vmatpush1.bf16.msra.mxu0 0
      %1126 = vmatprep.subr.bf16.mxu0 0
      %1127 = vmatpush1.bf16.msra.mxu0 0
      %1128 = vmatprep.subr.bf16.mxu0 0
      %1129 = vmatpush1.bf16.msra.mxu0 0
      %1130 = vmatprep.subr.bf16.mxu0 0
      %1131 = vmatpush1.bf16.msra.mxu0 0
      %1132 = vmatprep.subr.bf16.mxu0 0
      %1133 = vmatpush1.bf16.msra.mxu0 0
      %1134 = vmatprep.subr.bf16.mxu0 0
      %1135 = vmatpush1.bf16.msra.mxu0 0
      %1136 = vmatprep.subr.bf16.mxu0 0
      %1137 = vmatpush1.bf16.msra.mxu0 0
      %1138 = vmatprep.subr.bf16.mxu0 0
      %1139 = vmatpush1.bf16.msra.mxu0 0
      %1140 = vmatprep.mubr.bf16.mxu0 0
      %1141 = vmatmul.mubr.bf16.gmra.mrb[0].mxu0 %v1104
      %v1142 = vpop.f32.mrb[0].mxu0
      %v1143 = vadd.f32 0.0, %v1142
      %v1144 = vpop.f32.mrb[0].mxu0
      %v1145 = vpop.f32.mrb[0].mxu0
      %v1146 = vadd.f32 0.0, %v1145
      %v1147 = vpop.f32.mrb[0].mxu0
      %1148 = vmatprep.mubr.bf16.mxu0 0
      %1149 = vmatmul.mubr.bf16.gmra.mrb[0].mxu0 %v1105
      %v1150 = vpop.f32.mrb[0].mxu0
      %v1151 = vadd.f32 0.0, %v1150
      %v1152 = vpop.f32.mrb[0].mxu0
      %v1153 = vpop.f32.mrb[0].mxu0
      %v1154 = vadd.f32 0.0, %v1153
      %v1155 = vpop.f32.mrb[0].mxu0
      %1156 = vmatprep.mubr.bf16.mxu0 0
      %1157 = vmatmul.mubr.bf16.gmra.mrb[0].mxu0 %v1106
      %v1158 = vpop.f32.mrb[0].mxu0
      %v1159 = vadd.f32 0.0, %v1158
      %v1160 = vpop.f32.mrb[0].mxu0
      %v1161 = vpop.f32.mrb[0].mxu0
      %v1162 = vadd.f32 0.0, %v1161
      %v1163 = vpop.f32.mrb[0].mxu0
      %1164 = vmatprep.mubr.bf16.mxu0 0
      %1165 = vmatmul.mubr.bf16.gmra.mrb[0].mxu0 %v1107
      %v1166 = vpop.f32.mrb[0].mxu0
      %v1167 = vadd.f32 0.0, %v1166
      %v1168 = vpop.f32.mrb[0].mxu0
      %v1169 = vpop.f32.mrb[0].mxu0
      %v1170 = vadd.f32 0.0, %v1169
      %v1171 = vpop.f32.mrb[0].mxu0
      %1172 = vdwg.mxu0
      %v1173 = vpack.c.bf16 %v1146, %v1143
      %v1174 = vpack.c.bf16 %v1154, %v1151
      %v1175 = vpack.c.bf16 %v1162, %v1159
      %v1176 = vpack.c.bf16 %v1170, %v1167
      %1181 = vrot.lane.b32.xlu0 %v1173, 48
      %v1182 = vpop.permute.xlu0 %1181
      %1183 = vrot.lane.b32.xlu0 %v1174, 48
      %v1184 = vpop.permute.xlu0 %1183
      %1185 = vrot.lane.b32.xlu0 %v1175, 48
      %v1186 = vpop.permute.xlu0 %1185
      %1187 = vrot.lane.b32.xlu0 %v1176, 48
      %v1188 = vpop.permute.xlu0 %1187
      %vm1193 = vcmask 458112
      %1194 = vst.msk [vmem:[#allocation2] sm:$0xff] %vm1193, %v1182
      %1195 = vst.msk [vmem:[#allocation2 + $0x10] sm:$0xff] %vm1193, %v1184
      %1196 = vst.msk [vmem:[#allocation2 + $0x20] sm:$0xff] %vm1193, %v1186
      %1197 = vst.msk [vmem:[#allocation2 + $0x30] sm:$0xff] %vm1193, %v1188
      %1198 = vset.pattern.permute.xlu0 7
      %1199 = vperm.xlu0 %1198, %v218
      %v1200 = vpop.permute.xlu0 %1199
      %1201 = vset.pattern.permute.xlu0 7
      %1202 = vperm.xlu0 %1201, %v219
      %v1203 = vpop.permute.xlu0 %1202
      %1204 = vset.pattern.permute.xlu0 7
      %1205 = vperm.xlu0 %1204, %v220
      %v1206 = vpop.permute.xlu0 %1205
      %1207 = vset.pattern.permute.xlu0 7
      %1208 = vperm.xlu0 %1207, %v221
      %v1209 = vpop.permute.xlu0 %1208
      %1210 = vset.pattern.permute.xlu0 7
      %1211 = vperm.xlu0 %1210, %v222
      %v1212 = vpop.permute.xlu0 %1211
      %1213 = vset.pattern.permute.xlu0 7
      %1214 = vperm.xlu0 %1213, %v223
      %v1215 = vpop.permute.xlu0 %1214
      %1216 = vset.pattern.permute.xlu0 7
      %1217 = vperm.xlu0 %1216, %v224
      %v1218 = vpop.permute.xlu0 %1217
      %1219 = vset.pattern.permute.xlu0 7
      %1220 = vperm.xlu0 %1219, %v225
      %v1221 = vpop.permute.xlu0 %1220
      %vm1222 = vcmp.eq.s32.totalorder %v1200, %v227
      %vm1223 = vcmp.eq.s32.totalorder %v1203, %v227
      %vm1224 = vcmp.eq.s32.totalorder %v1206, %v227
      %vm1225 = vcmp.eq.s32.totalorder %v1209, %v227
      %vm1226 = vcmp.eq.s32.totalorder %v1212, %v227
      %vm1227 = vcmp.eq.s32.totalorder %v1215, %v227
      %vm1228 = vcmp.eq.s32.totalorder %v1218, %v227
      %vm1229 = vcmp.eq.s32.totalorder %v1221, %v227
      %v1230 = vsel %vm1222, 1.0, 0.0
      %v1231 = vsel %vm1223, 1.0, 0.0
      %v1232 = vsel %vm1224, 1.0, 0.0
      %v1233 = vsel %vm1225, 1.0, 0.0
      %v1234 = vsel %vm1226, 1.0, 0.0
      %v1235 = vsel %vm1227, 1.0, 0.0
      %v1236 = vsel %vm1228, 1.0, 0.0
      %v1237 = vsel %vm1229, 1.0, 0.0
      %v1238 = vpack.c.bf16 %v1231, %v1230
      %v1239 = vpack.c.bf16 %v1233, %v1232
      %v1240 = vpack.c.bf16 %v1235, %v1234
      %v1241 = vpack.c.bf16 %v1237, %v1236
      %1242 = vmatprep.subr.bf16.mxu0 0
      %1243 = vmatpush1.bf16.msra.mxu0 %v304
      %1244 = vmatprep.subr.bf16.mxu0 0
      %1245 = vmatpush1.bf16.msra.mxu0 %v305
      %1246 = vmatprep.subr.bf16.mxu0 0
      %1247 = vmatpush1.bf16.msra.mxu0 %v306
      %1248 = vmatprep.subr.bf16.mxu0 0
      %1249 = vmatpush1.bf16.msra.mxu0 %v307
      %1250 = vmatprep.subr.bf16.mxu0 0
      %1251 = vmatpush1.bf16.msra.mxu0 %v308
      %1252 = vmatprep.subr.bf16.mxu0 0
      %1253 = vmatpush1.bf16.msra.mxu0 %v309
      %1254 = vmatprep.subr.bf16.mxu0 0
      %1255 = vmatpush1.bf16.msra.mxu0 %v310
      %1256 = vmatprep.subr.bf16.mxu0 0
      %1257 = vmatpush1.bf16.msra.mxu0 %v311
      %1258 = vmatprep.subr.bf16.mxu0 0
      %1259 = vmatpush1.bf16.msra.mxu0 0
      %1260 = vmatprep.subr.bf16.mxu0 0
      %1261 = vmatpush1.bf16.msra.mxu0 0
      %1262 = vmatprep.subr.bf16.mxu0 0
      %1263 = vmatpush1.bf16.msra.mxu0 0
      %1264 = vmatprep.subr.bf16.mxu0 0
      %1265 = vmatpush1.bf16.msra.mxu0 0
      %1266 = vmatprep.subr.bf16.mxu0 0
      %1267 = vmatpush1.bf16.msra.mxu0 0
      %1268 = vmatprep.subr.bf16.mxu0 0
      %1269 = vmatpush1.bf16.msra.mxu0 0
      %1270 = vmatprep.subr.bf16.mxu0 0
      %1271 = vmatpush1.bf16.msra.mxu0 0
      %1272 = vmatprep.subr.bf16.mxu0 0
      %1273 = vmatpush1.bf16.msra.mxu0 0
      %1274 = vmatprep.mubr.bf16.mxu0 0
      %1275 = vmatmul.mubr.bf16.gmra.mrb[0].mxu0 %v1238
      %v1276 = vpop.f32.mrb[0].mxu0
      %v1277 = vadd.f32 0.0, %v1276
      %v1278 = vpop.f32.mrb[0].mxu0
      %v1279 = vpop.f32.mrb[0].mxu0
      %v1280 = vadd.f32 0.0, %v1279
      %v1281 = vpop.f32.mrb[0].mxu0
      %1282 = vmatprep.mubr.bf16.mxu0 0
      %1283 = vmatmul.mubr.bf16.gmra.mrb[0].mxu0 %v1239
      %v1284 = vpop.f32.mrb[0].mxu0
      %v1285 = vadd.f32 0.0, %v1284
      %v1286 = vpop.f32.mrb[0].mxu0
      %v1287 = vpop.f32.mrb[0].mxu0
      %v1288 = vadd.f32 0.0, %v1287
      %v1289 = vpop.f32.mrb[0].mxu0
      %1290 = vmatprep.mubr.bf16.mxu0 0
      %1291 = vmatmul.mubr.bf16.gmra.mrb[0].mxu0 %v1240
      %v1292 = vpop.f32.mrb[0].mxu0
      %v1293 = vadd.f32 0.0, %v1292
      %v1294 = vpop.f32.mrb[0].mxu0
      %v1295 = vpop.f32.mrb[0].mxu0
      %v1296 = vadd.f32 0.0, %v1295
      %v1297 = vpop.f32.mrb[0].mxu0
      %1298 = vmatprep.mubr.bf16.mxu0 0
      %1299 = vmatmul.mubr.bf16.gmra.mrb[0].mxu0 %v1241
      %v1300 = vpop.f32.mrb[0].mxu0
      %v1301 = vadd.f32 0.0, %v1300
      %v1302 = vpop.f32.mrb[0].mxu0
      %v1303 = vpop.f32.mrb[0].mxu0
      %v1304 = vadd.f32 0.0, %v1303
      %v1305 = vpop.f32.mrb[0].mxu0
      %1306 = vdwg.mxu0
      %v1307 = vpack.c.bf16 %v1280, %v1277
      %v1308 = vpack.c.bf16 %v1288, %v1285
      %v1309 = vpack.c.bf16 %v1296, %v1293
      %v1310 = vpack.c.bf16 %v1304, %v1301
      %1315 = vrot.lane.b32.xlu0 %v1307, 56
      %v1316 = vpop.permute.xlu0 %1315
      %1317 = vrot.lane.b32.xlu0 %v1308, 56
      %v1318 = vpop.permute.xlu0 %1317
      %1319 = vrot.lane.b32.xlu0 %v1309, 56
      %v1320 = vpop.permute.xlu0 %1319
      %1321 = vrot.lane.b32.xlu0 %v1310, 56
      %v1322 = vpop.permute.xlu0 %1321
      %vm1327 = vcmask 523712
      %1328 = vst.msk [vmem:[#allocation2] sm:$0xff] %vm1327, %v1316
      %1329 = vst.msk [vmem:[#allocation2 + $0x10] sm:$0xff] %vm1327, %v1318
      %1330 = vst.msk [vmem:[#allocation2 + $0x20] sm:$0xff] %vm1327, %v1320
      %1331 = vst.msk [vmem:[#allocation2 + $0x30] sm:$0xff] %vm1327, %v1322
      %1332 = vset.pattern.permute.xlu0 8
      %1333 = vperm.xlu0 %1332, %v218
      %v1334 = vpop.permute.xlu0 %1333
      %1335 = vset.pattern.permute.xlu0 8
      %1336 = vperm.xlu0 %1335, %v219
      %v1337 = vpop.permute.xlu0 %1336
      %1338 = vset.pattern.permute.xlu0 8
      %1339 = vperm.xlu0 %1338, %v220
      %v1340 = vpop.permute.xlu0 %1339
      %1341 = vset.pattern.permute.xlu0 8
      %1342 = vperm.xlu0 %1341, %v221
      %v1343 = vpop.permute.xlu0 %1342
      %1344 = vset.pattern.permute.xlu0 8
      %1345 = vperm.xlu0 %1344, %v222
      %v1346 = vpop.permute.xlu0 %1345
      %1347 = vset.pattern.permute.xlu0 8
      %1348 = vperm.xlu0 %1347, %v223
      %v1349 = vpop.permute.xlu0 %1348
      %1350 = vset.pattern.permute.xlu0 8
      %1351 = vperm.xlu0 %1350, %v224
      %v1352 = vpop.permute.xlu0 %1351
      %1353 = vset.pattern.permute.xlu0 8
      %1354 = vperm.xlu0 %1353, %v225
      %v1355 = vpop.permute.xlu0 %1354
      %vm1356 = vcmp.eq.s32.totalorder %v1334, %v227
      %vm1357 = vcmp.eq.s32.totalorder %v1337, %v227
      %vm1358 = vcmp.eq.s32.totalorder %v1340, %v227
      %vm1359 = vcmp.eq.s32.totalorder %v1343, %v227
      %vm1360 = vcmp.eq.s32.totalorder %v1346, %v227
      %vm1361 = vcmp.eq.s32.totalorder %v1349, %v227
      %vm1362 = vcmp.eq.s32.totalorder %v1352, %v227
      %vm1363 = vcmp.eq.s32.totalorder %v1355, %v227
      %v1364 = vsel %vm1356, 1.0, 0.0
      %v1365 = vsel %vm1357, 1.0, 0.0
      %v1366 = vsel %vm1358, 1.0, 0.0
      %v1367 = vsel %vm1359, 1.0, 0.0
      %v1368 = vsel %vm1360, 1.0, 0.0
      %v1369 = vsel %vm1361, 1.0, 0.0
      %v1370 = vsel %vm1362, 1.0, 0.0
      %v1371 = vsel %vm1363, 1.0, 0.0
      %v1372 = vpack.c.bf16 %v1365, %v1364
      %v1373 = vpack.c.bf16 %v1367, %v1366
      %v1374 = vpack.c.bf16 %v1369, %v1368
      %v1375 = vpack.c.bf16 %v1371, %v1370
      %1376 = vmatprep.subr.bf16.mxu0 0
      %1377 = vmatpush1.bf16.msra.mxu0 %v304
      %1378 = vmatprep.subr.bf16.mxu0 0
      %1379 = vmatpush1.bf16.msra.mxu0 %v305
      %1380 = vmatprep.subr.bf16.mxu0 0
      %1381 = vmatpush1.bf16.msra.mxu0 %v306
      %1382 = vmatprep.subr.bf16.mxu0 0
      %1383 = vmatpush1.bf16.msra.mxu0 %v307
      %1384 = vmatprep.subr.bf16.mxu0 0
      %1385 = vmatpush1.bf16.msra.mxu0 %v308
      %1386 = vmatprep.subr.bf16.mxu0 0
      %1387 = vmatpush1.bf16.msra.mxu0 %v309
      %1388 = vmatprep.subr.bf16.mxu0 0
      %1389 = vmatpush1.bf16.msra.mxu0 %v310
      %1390 = vmatprep.subr.bf16.mxu0 0
      %1391 = vmatpush1.bf16.msra.mxu0 %v311
      %1392 = vmatprep.subr.bf16.mxu0 0
      %1393 = vmatpush1.bf16.msra.mxu0 0
      %1394 = vmatprep.subr.bf16.mxu0 0
      %1395 = vmatpush1.bf16.msra.mxu0 0
      %1396 = vmatprep.subr.bf16.mxu0 0
      %1397 = vmatpush1.bf16.msra.mxu0 0
      %1398 = vmatprep.subr.bf16.mxu0 0
      %1399 = vmatpush1.bf16.msra.mxu0 0
      %1400 = vmatprep.subr.bf16.mxu0 0
      %1401 = vmatpush1.bf16.msra.mxu0 0
      %1402 = vmatprep.subr.bf16.mxu0 0
      %1403 = vmatpush1.bf16.msra.mxu0 0
      %1404 = vmatprep.subr.bf16.mxu0 0
      %1405 = vmatpush1.bf16.msra.mxu0 0
      %1406 = vmatprep.subr.bf16.mxu0 0
      %1407 = vmatpush1.bf16.msra.mxu0 0
      %1408 = vmatprep.mubr.bf16.mxu0 0
      %1409 = vmatmul.mubr.bf16.gmra.mrb[0].mxu0 %v1372
      %v1410 = vpop.f32.mrb[0].mxu0
      %v1411 = vadd.f32 0.0, %v1410
      %v1412 = vpop.f32.mrb[0].mxu0
      %v1413 = vpop.f32.mrb[0].mxu0
      %v1414 = vadd.f32 0.0, %v1413
      %v1415 = vpop.f32.mrb[0].mxu0
      %1416 = vmatprep.mubr.bf16.mxu0 0
      %1417 = vmatmul.mubr.bf16.gmra.mrb[0].mxu0 %v1373
      %v1418 = vpop.f32.mrb[0].mxu0
      %v1419 = vadd.f32 0.0, %v1418
      %v1420 = vpop.f32.mrb[0].mxu0
      %v1421 = vpop.f32.mrb[0].mxu0
      %v1422 = vadd.f32 0.0, %v1421
      %v1423 = vpop.f32.mrb[0].mxu0
      %1424 = vmatprep.mubr.bf16.mxu0 0
      %1425 = vmatmul.mubr.bf16.gmra.mrb[0].mxu0 %v1374
      %v1426 = vpop.f32.mrb[0].mxu0
      %v1427 = vadd.f32 0.0, %v1426
      %v1428 = vpop.f32.mrb[0].mxu0
      %v1429 = vpop.f32.mrb[0].mxu0
      %v1430 = vadd.f32 0.0, %v1429
      %v1431 = vpop.f32.mrb[0].mxu0
      %1432 = vmatprep.mubr.bf16.mxu0 0
      %1433 = vmatmul.mubr.bf16.gmra.mrb[0].mxu0 %v1375
      %v1434 = vpop.f32.mrb[0].mxu0
      %v1435 = vadd.f32 0.0, %v1434
      %v1436 = vpop.f32.mrb[0].mxu0
      %v1437 = vpop.f32.mrb[0].mxu0
      %v1438 = vadd.f32 0.0, %v1437
      %v1439 = vpop.f32.mrb[0].mxu0
      %1440 = vdwg.mxu0
      %v1441 = vpack.c.bf16 %v1414, %v1411
      %v1442 = vpack.c.bf16 %v1422, %v1419
      %v1443 = vpack.c.bf16 %v1430, %v1427
      %v1444 = vpack.c.bf16 %v1438, %v1435
      %1449 = vrot.lane.b32.xlu0 %v1441, 64
      %v1450 = vpop.permute.xlu0 %1449
      %1451 = vrot.lane.b32.xlu0 %v1442, 64
      %v1452 = vpop.permute.xlu0 %1451
      %1453 = vrot.lane.b32.xlu0 %v1443, 64
      %v1454 = vpop.permute.xlu0 %1453
      %1455 = vrot.lane.b32.xlu0 %v1444, 64
      %v1456 = vpop.permute.xlu0 %1455
      %vm1461 = vcmask 589312
      %1462 = vst.msk [vmem:[#allocation2] sm:$0xff] %vm1461, %v1450
      %1463 = vst.msk [vmem:[#allocation2 + $0x10] sm:$0xff] %vm1461, %v1452
      %1464 = vst.msk [vmem:[#allocation2 + $0x20] sm:$0xff] %vm1461, %v1454
      %1465 = vst.msk [vmem:[#allocation2 + $0x30] sm:$0xff] %vm1461, %v1456
      %1466 = vset.pattern.permute.xlu0 9
      %1467 = vperm.xlu0 %1466, %v218
      %v1468 = vpop.permute.xlu0 %1467
      %1469 = vset.pattern.permute.xlu0 9
      %1470 = vperm.xlu0 %1469, %v219
      %v1471 = vpop.permute.xlu0 %1470
      %1472 = vset.pattern.permute.xlu0 9
      %1473 = vperm.xlu0 %1472, %v220
      %v1474 = vpop.permute.xlu0 %1473
      %1475 = vset.pattern.permute.xlu0 9
      %1476 = vperm.xlu0 %1475, %v221
      %v1477 = vpop.permute.xlu0 %1476
      %1478 = vset.pattern.permute.xlu0 9
      %1479 = vperm.xlu0 %1478, %v222
      %v1480 = vpop.permute.xlu0 %1479
      %1481 = vset.pattern.permute.xlu0 9
      %1482 = vperm.xlu0 %1481, %v223
      %v1483 = vpop.permute.xlu0 %1482
      %1484 = vset.pattern.permute.xlu0 9
      %1485 = vperm.xlu0 %1484, %v224
      %v1486 = vpop.permute.xlu0 %1485
      %1487 = vset.pattern.permute.xlu0 9
      %1488 = vperm.xlu0 %1487, %v225
      %v1489 = vpop.permute.xlu0 %1488
      %vm1490 = vcmp.eq.s32.totalorder %v1468, %v227
      %vm1491 = vcmp.eq.s32.totalorder %v1471, %v227
      %vm1492 = vcmp.eq.s32.totalorder %v1474, %v227
      %vm1493 = vcmp.eq.s32.totalorder %v1477, %v227
      %vm1494 = vcmp.eq.s32.totalorder %v1480, %v227
      %vm1495 = vcmp.eq.s32.totalorder %v1483, %v227
      %vm1496 = vcmp.eq.s32.totalorder %v1486, %v227
      %vm1497 = vcmp.eq.s32.totalorder %v1489, %v227
      %v1498 = vsel %vm1490, 1.0, 0.0
      %v1499 = vsel %vm1491, 1.0, 0.0
      %v1500 = vsel %vm1492, 1.0, 0.0
      %v1501 = vsel %vm1493, 1.0, 0.0
      %v1502 = vsel %vm1494, 1.0, 0.0
      %v1503 = vsel %vm1495, 1.0, 0.0
      %v1504 = vsel %vm1496, 1.0, 0.0
      %v1505 = vsel %vm1497, 1.0, 0.0
      %v1506 = vpack.c.bf16 %v1499, %v1498
      %v1507 = vpack.c.bf16 %v1501, %v1500
      %v1508 = vpack.c.bf16 %v1503, %v1502
      %v1509 = vpack.c.bf16 %v1505, %v1504
      %1510 = vmatprep.subr.bf16.mxu0 0
      %1511 = vmatpush1.bf16.msra.mxu0 %v304
      %1512 = vmatprep.subr.bf16.mxu0 0
      %1513 = vmatpush1.bf16.msra.mxu0 %v305
      %1514 = vmatprep.subr.bf16.mxu0 0
      %1515 = vmatpush1.bf16.msra.mxu0 %v306
      %1516 = vmatprep.subr.bf16.mxu0 0
      %1517 = vmatpush1.bf16.msra.mxu0 %v307
      %1518 = vmatprep.subr.bf16.mxu0 0
      %1519 = vmatpush1.bf16.msra.mxu0 %v308
      %1520 = vmatprep.subr.bf16.mxu0 0
      %1521 = vmatpush1.bf16.msra.mxu0 %v309
      %1522 = vmatprep.subr.bf16.mxu0 0
      %1523 = vmatpush1.bf16.msra.mxu0 %v310
      %1524 = vmatprep.subr.bf16.mxu0 0
      %1525 = vmatpush1.bf16.msra.mxu0 %v311
      %1526 = vmatprep.subr.bf16.mxu0 0
      %1527 = vmatpush1.bf16.msra.mxu0 0
      %1528 = vmatprep.subr.bf16.mxu0 0
      %1529 = vmatpush1.bf16.msra.mxu0 0
      %1530 = vmatprep.subr.bf16.mxu0 0
      %1531 = vmatpush1.bf16.msra.mxu0 0
      %1532 = vmatprep.subr.bf16.mxu0 0
      %1533 = vmatpush1.bf16.msra.mxu0 0
      %1534 = vmatprep.subr.bf16.mxu0 0
      %1535 = vmatpush1.bf16.msra.mxu0 0
      %1536 = vmatprep.subr.bf16.mxu0 0
      %1537 = vmatpush1.bf16.msra.mxu0 0
      %1538 = vmatprep.subr.bf16.mxu0 0
      %1539 = vmatpush1.bf16.msra.mxu0 0
      %1540 = vmatprep.subr.bf16.mxu0 0
      %1541 = vmatpush1.bf16.msra.mxu0 0
      %1542 = vmatprep.mubr.bf16.mxu0 0
      %1543 = vmatmul.mubr.bf16.gmra.mrb[0].mxu0 %v1506
      %v1544 = vpop.f32.mrb[0].mxu0
      %v1545 = vadd.f32 0.0, %v1544
      %v1546 = vpop.f32.mrb[0].mxu0
      %v1547 = vpop.f32.mrb[0].mxu0
      %v1548 = vadd.f32 0.0, %v1547
      %v1549 = vpop.f32.mrb[0].mxu0
      %1550 = vmatprep.mubr.bf16.mxu0 0
      %1551 = vmatmul.mubr.bf16.gmra.mrb[0].mxu0 %v1507
      %v1552 = vpop.f32.mrb[0].mxu0
      %v1553 = vadd.f32 0.0, %v1552
      %v1554 = vpop.f32.mrb[0].mxu0
      %v1555 = vpop.f32.mrb[0].mxu0
      %v1556 = vadd.f32 0.0, %v1555
      %v1557 = vpop.f32.mrb[0].mxu0
      %1558 = vmatprep.mubr.bf16.mxu0 0
      %1559 = vmatmul.mubr.bf16.gmra.mrb[0].mxu0 %v1508
      %v1560 = vpop.f32.mrb[0].mxu0
      %v1561 = vadd.f32 0.0, %v1560
      %v1562 = vpop.f32.mrb[0].mxu0
      %v1563 = vpop.f32.mrb[0].mxu0
      %v1564 = vadd.f32 0.0, %v1563
      %v1565 = vpop.f32.mrb[0].mxu0
      %1566 = vmatprep.mubr.bf16.mxu0 0
      %1567 = vmatmul.mubr.bf16.gmra.mrb[0].mxu0 %v1509
      %v1568 = vpop.f32.mrb[0].mxu0
      %v1569 = vadd.f32 0.0, %v1568
      %v1570 = vpop.f32.mrb[0].mxu0
      %v1571 = vpop.f32.mrb[0].mxu0
      %v1572 = vadd.f32 0.0, %v1571
      %v1573 = vpop.f32.mrb[0].mxu0
      %1574 = vdwg.mxu0
      %v1575 = vpack.c.bf16 %v1548, %v1545
      %v1576 = vpack.c.bf16 %v1556, %v1553
      %v1577 = vpack.c.bf16 %v1564, %v1561
      %v1578 = vpack.c.bf16 %v1572, %v1569
      %1583 = vrot.lane.b32.xlu0 %v1575, 72
      %v1584 = vpop.permute.xlu0 %1583
      %1585 = vrot.lane.b32.xlu0 %v1576, 72
      %v1586 = vpop.permute.xlu0 %1585
      %1587 = vrot.lane.b32.xlu0 %v1577, 72
      %v1588 = vpop.permute.xlu0 %1587
      %1589 = vrot.lane.b32.xlu0 %v1578, 72
      %v1590 = vpop.permute.xlu0 %1589
      %vm1595 = vcmask 654912
      %1596 = vst.msk [vmem:[#allocation2] sm:$0xff] %vm1595, %v1584
      %1597 = vst.msk [vmem:[#allocation2 + $0x10] sm:$0xff] %vm1595, %v1586
      %1598 = vst.msk [vmem:[#allocation2 + $0x20] sm:$0xff] %vm1595, %v1588
      %1599 = vst.msk [vmem:[#allocation2 + $0x30] sm:$0xff] %vm1595, %v1590
      %1600 = vset.pattern.permute.xlu0 10
      %1601 = vperm.xlu0 %1600, %v218
      %v1602 = vpop.permute.xlu0 %1601
      %1603 = vset.pattern.permute.xlu0 10
      %1604 = vperm.xlu0 %1603, %v219
      %v1605 = vpop.permute.xlu0 %1604
      %1606 = vset.pattern.permute.xlu0 10
      %1607 = vperm.xlu0 %1606, %v220
      %v1608 = vpop.permute.xlu0 %1607
      %1609 = vset.pattern.permute.xlu0 10
      %1610 = vperm.xlu0 %1609, %v221
      %v1611 = vpop.permute.xlu0 %1610
      %1612 = vset.pattern.permute.xlu0 10
      %1613 = vperm.xlu0 %1612, %v222
      %v1614 = vpop.permute.xlu0 %1613
      %1615 = vset.pattern.permute.xlu0 10
      %1616 = vperm.xlu0 %1615, %v223
      %v1617 = vpop.permute.xlu0 %1616
      %1618 = vset.pattern.permute.xlu0 10
      %1619 = vperm.xlu0 %1618, %v224
      %v1620 = vpop.permute.xlu0 %1619
      %1621 = vset.pattern.permute.xlu0 10
      %1622 = vperm.xlu0 %1621, %v225
      %v1623 = vpop.permute.xlu0 %1622
      %vm1624 = vcmp.eq.s32.totalorder %v1602, %v227
      %vm1625 = vcmp.eq.s32.totalorder %v1605, %v227
      %vm1626 = vcmp.eq.s32.totalorder %v1608, %v227
      %vm1627 = vcmp.eq.s32.totalorder %v1611, %v227
      %vm1628 = vcmp.eq.s32.totalorder %v1614, %v227
      %vm1629 = vcmp.eq.s32.totalorder %v1617, %v227
      %vm1630 = vcmp.eq.s32.totalorder %v1620, %v227
      %vm1631 = vcmp.eq.s32.totalorder %v1623, %v227
      %v1632 = vsel %vm1624, 1.0, 0.0
      %v1633 = vsel %vm1625, 1.0, 0.0
      %v1634 = vsel %vm1626, 1.0, 0.0
      %v1635 = vsel %vm1627, 1.0, 0.0
      %v1636 = vsel %vm1628, 1.0, 0.0
      %v1637 = vsel %vm1629, 1.0, 0.0
      %v1638 = vsel %vm1630, 1.0, 0.0
      %v1639 = vsel %vm1631, 1.0, 0.0
      %v1640 = vpack.c.bf16 %v1633, %v1632
      %v1641 = vpack.c.bf16 %v1635, %v1634
      %v1642 = vpack.c.bf16 %v1637, %v1636
      %v1643 = vpack.c.bf16 %v1639, %v1638
      %1644 = vmatprep.subr.bf16.mxu0 0
      %1645 = vmatpush1.bf16.msra.mxu0 %v304
      %1646 = vmatprep.subr.bf16.mxu0 0
      %1647 = vmatpush1.bf16.msra.mxu0 %v305
      %1648 = vmatprep.subr.bf16.mxu0 0
      %1649 = vmatpush1.bf16.msra.mxu0 %v306
      %1650 = vmatprep.subr.bf16.mxu0 0
      %1651 = vmatpush1.bf16.msra.mxu0 %v307
      %1652 = vmatprep.subr.bf16.mxu0 0
      %1653 = vmatpush1.bf16.msra.mxu0 %v308
      %1654 = vmatprep.subr.bf16.mxu0 0
      %1655 = vmatpush1.bf16.msra.mxu0 %v309
      %1656 = vmatprep.subr.bf16.mxu0 0
      %1657 = vmatpush1.bf16.msra.mxu0 %v310
      %1658 = vmatprep.subr.bf16.mxu0 0
      %1659 = vmatpush1.bf16.msra.mxu0 %v311
      %1660 = vmatprep.subr.bf16.mxu0 0
      %1661 = vmatpush1.bf16.msra.mxu0 0
      %1662 = vmatprep.subr.bf16.mxu0 0
      %1663 = vmatpush1.bf16.msra.mxu0 0
      %1664 = vmatprep.subr.bf16.mxu0 0
      %1665 = vmatpush1.bf16.msra.mxu0 0
      %1666 = vmatprep.subr.bf16.mxu0 0
      %1667 = vmatpush1.bf16.msra.mxu0 0
      %1668 = vmatprep.subr.bf16.mxu0 0
      %1669 = vmatpush1.bf16.msra.mxu0 0
      %1670 = vmatprep.subr.bf16.mxu0 0
      %1671 = vmatpush1.bf16.msra.mxu0 0
      %1672 = vmatprep.subr.bf16.mxu0 0
      %1673 = vmatpush1.bf16.msra.mxu0 0
      %1674 = vmatprep.subr.bf16.mxu0 0
      %1675 = vmatpush1.bf16.msra.mxu0 0
      %1676 = vmatprep.mubr.bf16.mxu0 0
      %1677 = vmatmul.mubr.bf16.gmra.mrb[0].mxu0 %v1640
      %v1678 = vpop.f32.mrb[0].mxu0
      %v1679 = vadd.f32 0.0, %v1678
      %v1680 = vpop.f32.mrb[0].mxu0
      %v1681 = vpop.f32.mrb[0].mxu0
      %v1682 = vadd.f32 0.0, %v1681
      %v1683 = vpop.f32.mrb[0].mxu0
      %1684 = vmatprep.mubr.bf16.mxu0 0
      %1685 = vmatmul.mubr.bf16.gmra.mrb[0].mxu0 %v1641
      %v1686 = vpop.f32.mrb[0].mxu0
      %v1687 = vadd.f32 0.0, %v1686
      %v1688 = vpop.f32.mrb[0].mxu0
      %v1689 = vpop.f32.mrb[0].mxu0
      %v1690 = vadd.f32 0.0, %v1689
      %v1691 = vpop.f32.mrb[0].mxu0
      %1692 = vmatprep.mubr.bf16.mxu0 0
      %1693 = vmatmul.mubr.bf16.gmra.mrb[0].mxu0 %v1642
      %v1694 = vpop.f32.mrb[0].mxu0
      %v1695 = vadd.f32 0.0, %v1694
      %v1696 = vpop.f32.mrb[0].mxu0
      %v1697 = vpop.f32.mrb[0].mxu0
      %v1698 = vadd.f32 0.0, %v1697
      %v1699 = vpop.f32.mrb[0].mxu0
      %1700 = vmatprep.mubr.bf16.mxu0 0
      %1701 = vmatmul.mubr.bf16.gmra.mrb[0].mxu0 %v1643
      %v1702 = vpop.f32.mrb[0].mxu0
      %v1703 = vadd.f32 0.0, %v1702
      %v1704 = vpop.f32.mrb[0].mxu0
      %v1705 = vpop.f32.mrb[0].mxu0
      %v1706 = vadd.f32 0.0, %v1705
      %v1707 = vpop.f32.mrb[0].mxu0
      %1708 = vdwg.mxu0
      %v1709 = vpack.c.bf16 %v1682, %v1679
      %v1710 = vpack.c.bf16 %v1690, %v1687
      %v1711 = vpack.c.bf16 %v1698, %v1695
      %v1712 = vpack.c.bf16 %v1706, %v1703
      %1717 = vrot.lane.b32.xlu0 %v1709, 80
      %v1718 = vpop.permute.xlu0 %1717
      %1719 = vrot.lane.b32.xlu0 %v1710, 80
      %v1720 = vpop.permute.xlu0 %1719
      %1721 = vrot.lane.b32.xlu0 %v1711, 80
      %v1722 = vpop.permute.xlu0 %1721
      %1723 = vrot.lane.b32.xlu0 %v1712, 80
      %v1724 = vpop.permute.xlu0 %1723
      %vm1729 = vcmask 720512
      %1730 = vst.msk [vmem:[#allocation2] sm:$0xff] %vm1729, %v1718
      %1731 = vst.msk [vmem:[#allocation2 + $0x10] sm:$0xff] %vm1729, %v1720
      %1732 = vst.msk [vmem:[#allocation2 + $0x20] sm:$0xff] %vm1729, %v1722
      %1733 = vst.msk [vmem:[#allocation2 + $0x30] sm:$0xff] %vm1729, %v1724
      %1734 = vset.pattern.permute.xlu0 11
      %1735 = vperm.xlu0 %1734, %v218
      %v1736 = vpop.permute.xlu0 %1735
      %1737 = vset.pattern.permute.xlu0 11
      %1738 = vperm.xlu0 %1737, %v219
      %v1739 = vpop.permute.xlu0 %1738
      %1740 = vset.pattern.permute.xlu0 11
      %1741 = vperm.xlu0 %1740, %v220
      %v1742 = vpop.permute.xlu0 %1741
      %1743 = vset.pattern.permute.xlu0 11
      %1744 = vperm.xlu0 %1743, %v221
      %v1745 = vpop.permute.xlu0 %1744
      %1746 = vset.pattern.permute.xlu0 11
      %1747 = vperm.xlu0 %1746, %v222
      %v1748 = vpop.permute.xlu0 %1747
      %1749 = vset.pattern.permute.xlu0 11
      %1750 = vperm.xlu0 %1749, %v223
      %v1751 = vpop.permute.xlu0 %1750
      %1752 = vset.pattern.permute.xlu0 11
      %1753 = vperm.xlu0 %1752, %v224
      %v1754 = vpop.permute.xlu0 %1753
      %1755 = vset.pattern.permute.xlu0 11
      %1756 = vperm.xlu0 %1755, %v225
      %v1757 = vpop.permute.xlu0 %1756
      %vm1758 = vcmp.eq.s32.totalorder %v1736, %v227
      %vm1759 = vcmp.eq.s32.totalorder %v1739, %v227
      %vm1760 = vcmp.eq.s32.totalorder %v1742, %v227
      %vm1761 = vcmp.eq.s32.totalorder %v1745, %v227
      %vm1762 = vcmp.eq.s32.totalorder %v1748, %v227
      %vm1763 = vcmp.eq.s32.totalorder %v1751, %v227
      %vm1764 = vcmp.eq.s32.totalorder %v1754, %v227
      %vm1765 = vcmp.eq.s32.totalorder %v1757, %v227
      %v1766 = vsel %vm1758, 1.0, 0.0
      %v1767 = vsel %vm1759, 1.0, 0.0
      %v1768 = vsel %vm1760, 1.0, 0.0
      %v1769 = vsel %vm1761, 1.0, 0.0
      %v1770 = vsel %vm1762, 1.0, 0.0
      %v1771 = vsel %vm1763, 1.0, 0.0
      %v1772 = vsel %vm1764, 1.0, 0.0
      %v1773 = vsel %vm1765, 1.0, 0.0
      %v1774 = vpack.c.bf16 %v1767, %v1766
      %v1775 = vpack.c.bf16 %v1769, %v1768
      %v1776 = vpack.c.bf16 %v1771, %v1770
      %v1777 = vpack.c.bf16 %v1773, %v1772
      %1778 = vmatprep.subr.bf16.mxu0 0
      %1779 = vmatpush1.bf16.msra.mxu0 %v304
      %1780 = vmatprep.subr.bf16.mxu0 0
      %1781 = vmatpush1.bf16.msra.mxu0 %v305
      %1782 = vmatprep.subr.bf16.mxu0 0
      %1783 = vmatpush1.bf16.msra.mxu0 %v306
      %1784 = vmatprep.subr.bf16.mxu0 0
      %1785 = vmatpush1.bf16.msra.mxu0 %v307
      %1786 = vmatprep.subr.bf16.mxu0 0
      %1787 = vmatpush1.bf16.msra.mxu0 %v308
      %1788 = vmatprep.subr.bf16.mxu0 0
      %1789 = vmatpush1.bf16.msra.mxu0 %v309
      %1790 = vmatprep.subr.bf16.mxu0 0
      %1791 = vmatpush1.bf16.msra.mxu0 %v310
      %1792 = vmatprep.subr.bf16.mxu0 0
      %1793 = vmatpush1.bf16.msra.mxu0 %v311
      %1794 = vmatprep.subr.bf16.mxu0 0
      %1795 = vmatpush1.bf16.msra.mxu0 0
      %1796 = vmatprep.subr.bf16.mxu0 0
      %1797 = vmatpush1.bf16.msra.mxu0 0
      %1798 = vmatprep.subr.bf16.mxu0 0
      %1799 = vmatpush1.bf16.msra.mxu0 0
      %1800 = vmatprep.subr.bf16.mxu0 0
      %1801 = vmatpush1.bf16.msra.mxu0 0
      %1802 = vmatprep.subr.bf16.mxu0 0
      %1803 = vmatpush1.bf16.msra.mxu0 0
      %1804 = vmatprep.subr.bf16.mxu0 0
      %1805 = vmatpush1.bf16.msra.mxu0 0
      %1806 = vmatprep.subr.bf16.mxu0 0
      %1807 = vmatpush1.bf16.msra.mxu0 0
      %1808 = vmatprep.subr.bf16.mxu0 0
      %1809 = vmatpush1.bf16.msra.mxu0 0
      %1810 = vmatprep.mubr.bf16.mxu0 0
      %1811 = vmatmul.mubr.bf16.gmra.mrb[0].mxu0 %v1774
      %v1812 = vpop.f32.mrb[0].mxu0
      %v1813 = vadd.f32 0.0, %v1812
      %v1814 = vpop.f32.mrb[0].mxu0
      %v1815 = vpop.f32.mrb[0].mxu0
      %v1816 = vadd.f32 0.0, %v1815
      %v1817 = vpop.f32.mrb[0].mxu0
      %1818 = vmatprep.mubr.bf16.mxu0 0
      %1819 = vmatmul.mubr.bf16.gmra.mrb[0].mxu0 %v1775
      %v1820 = vpop.f32.mrb[0].mxu0
      %v1821 = vadd.f32 0.0, %v1820
      %v1822 = vpop.f32.mrb[0].mxu0
      %v1823 = vpop.f32.mrb[0].mxu0
      %v1824 = vadd.f32 0.0, %v1823
      %v1825 = vpop.f32.mrb[0].mxu0
      %1826 = vmatprep.mubr.bf16.mxu0 0
      %1827 = vmatmul.mubr.bf16.gmra.mrb[0].mxu0 %v1776
      %v1828 = vpop.f32.mrb[0].mxu0
      %v1829 = vadd.f32 0.0, %v1828
      %v1830 = vpop.f32.mrb[0].mxu0
      %v1831 = vpop.f32.mrb[0].mxu0
      %v1832 = vadd.f32 0.0, %v1831
      %v1833 = vpop.f32.mrb[0].mxu0
      %1834 = vmatprep.mubr.bf16.mxu0 0
      %1835 = vmatmul.mubr.bf16.gmra.mrb[0].mxu0 %v1777
      %v1836 = vpop.f32.mrb[0].mxu0
      %v1837 = vadd.f32 0.0, %v1836
      %v1838 = vpop.f32.mrb[0].mxu0
      %v1839 = vpop.f32.mrb[0].mxu0
      %v1840 = vadd.f32 0.0, %v1839
      %v1841 = vpop.f32.mrb[0].mxu0
      %1842 = vdwg.mxu0
      %v1843 = vpack.c.bf16 %v1816, %v1813
      %v1844 = vpack.c.bf16 %v1824, %v1821
      %v1845 = vpack.c.bf16 %v1832, %v1829
      %v1846 = vpack.c.bf16 %v1840, %v1837
      %1851 = vrot.lane.b32.xlu0 %v1843, 88
      %v1852 = vpop.permute.xlu0 %1851
      %1853 = vrot.lane.b32.xlu0 %v1844, 88
      %v1854 = vpop.permute.xlu0 %1853
      %1855 = vrot.lane.b32.xlu0 %v1845, 88
      %v1856 = vpop.permute.xlu0 %1855
      %1857 = vrot.lane.b32.xlu0 %v1846, 88
      %v1858 = vpop.permute.xlu0 %1857
      %vm1863 = vcmask 786112
      %1864 = vst.msk [vmem:[#allocation2] sm:$0xff] %vm1863, %v1852
      %1865 = vst.msk [vmem:[#allocation2 + $0x10] sm:$0xff] %vm1863, %v1854
      %1866 = vst.msk [vmem:[#allocation2 + $0x20] sm:$0xff] %vm1863, %v1856
      %1867 = vst.msk [vmem:[#allocation2 + $0x30] sm:$0xff] %vm1863, %v1858
      %1868 = vset.pattern.permute.xlu0 12
      %1869 = vperm.xlu0 %1868, %v218
      %v1870 = vpop.permute.xlu0 %1869
      %1871 = vset.pattern.permute.xlu0 12
      %1872 = vperm.xlu0 %1871, %v219
      %v1873 = vpop.permute.xlu0 %1872
      %1874 = vset.pattern.permute.xlu0 12
      %1875 = vperm.xlu0 %1874, %v220
      %v1876 = vpop.permute.xlu0 %1875
      %1877 = vset.pattern.permute.xlu0 12
      %1878 = vperm.xlu0 %1877, %v221
      %v1879 = vpop.permute.xlu0 %1878
      %1880 = vset.pattern.permute.xlu0 12
      %1881 = vperm.xlu0 %1880, %v222
      %v1882 = vpop.permute.xlu0 %1881
      %1883 = vset.pattern.permute.xlu0 12
      %1884 = vperm.xlu0 %1883, %v223
      %v1885 = vpop.permute.xlu0 %1884
      %1886 = vset.pattern.permute.xlu0 12
      %1887 = vperm.xlu0 %1886, %v224
      %v1888 = vpop.permute.xlu0 %1887
      %1889 = vset.pattern.permute.xlu0 12
      %1890 = vperm.xlu0 %1889, %v225
      %v1891 = vpop.permute.xlu0 %1890
      %vm1892 = vcmp.eq.s32.totalorder %v1870, %v227
      %vm1893 = vcmp.eq.s32.totalorder %v1873, %v227
      %vm1894 = vcmp.eq.s32.totalorder %v1876, %v227
      %vm1895 = vcmp.eq.s32.totalorder %v1879, %v227
      %vm1896 = vcmp.eq.s32.totalorder %v1882, %v227
      %vm1897 = vcmp.eq.s32.totalorder %v1885, %v227
      %vm1898 = vcmp.eq.s32.totalorder %v1888, %v227
      %vm1899 = vcmp.eq.s32.totalorder %v1891, %v227
      %v1900 = vsel %vm1892, 1.0, 0.0
      %v1901 = vsel %vm1893, 1.0, 0.0
      %v1902 = vsel %vm1894, 1.0, 0.0
      %v1903 = vsel %vm1895, 1.0, 0.0
      %v1904 = vsel %vm1896, 1.0, 0.0
      %v1905 = vsel %vm1897, 1.0, 0.0
      %v1906 = vsel %vm1898, 1.0, 0.0
      %v1907 = vsel %vm1899, 1.0, 0.0
      %v1908 = vpack.c.bf16 %v1901, %v1900
      %v1909 = vpack.c.bf16 %v1903, %v1902
      %v1910 = vpack.c.bf16 %v1905, %v1904
      %v1911 = vpack.c.bf16 %v1907, %v1906
      %1912 = vmatprep.subr.bf16.mxu0 0
      %1913 = vmatpush1.bf16.msra.mxu0 %v304
      %1914 = vmatprep.subr.bf16.mxu0 0
      %1915 = vmatpush1.bf16.msra.mxu0 %v305
      %1916 = vmatprep.subr.bf16.mxu0 0
      %1917 = vmatpush1.bf16.msra.mxu0 %v306
      %1918 = vmatprep.subr.bf16.mxu0 0
      %1919 = vmatpush1.bf16.msra.mxu0 %v307
      %1920 = vmatprep.subr.bf16.mxu0 0
      %1921 = vmatpush1.bf16.msra.mxu0 %v308
      %1922 = vmatprep.subr.bf16.mxu0 0
      %1923 = vmatpush1.bf16.msra.mxu0 %v309
      %1924 = vmatprep.subr.bf16.mxu0 0
      %1925 = vmatpush1.bf16.msra.mxu0 %v310
      %1926 = vmatprep.subr.bf16.mxu0 0
      %1927 = vmatpush1.bf16.msra.mxu0 %v311
      %1928 = vmatprep.subr.bf16.mxu0 0
      %1929 = vmatpush1.bf16.msra.mxu0 0
      %1930 = vmatprep.subr.bf16.mxu0 0
      %1931 = vmatpush1.bf16.msra.mxu0 0
      %1932 = vmatprep.subr.bf16.mxu0 0
      %1933 = vmatpush1.bf16.msra.mxu0 0
      %1934 = vmatprep.subr.bf16.mxu0 0
      %1935 = vmatpush1.bf16.msra.mxu0 0
      %1936 = vmatprep.subr.bf16.mxu0 0
      %1937 = vmatpush1.bf16.msra.mxu0 0
      %1938 = vmatprep.subr.bf16.mxu0 0
      %1939 = vmatpush1.bf16.msra.mxu0 0
      %1940 = vmatprep.subr.bf16.mxu0 0
      %1941 = vmatpush1.bf16.msra.mxu0 0
      %1942 = vmatprep.subr.bf16.mxu0 0
      %1943 = vmatpush1.bf16.msra.mxu0 0
      %1944 = vmatprep.mubr.bf16.mxu0 0
      %1945 = vmatmul.mubr.bf16.gmra.mrb[0].mxu0 %v1908
      %v1946 = vpop.f32.mrb[0].mxu0
      %v1947 = vadd.f32 0.0, %v1946
      %v1948 = vpop.f32.mrb[0].mxu0
      %v1949 = vpop.f32.mrb[0].mxu0
      %v1950 = vadd.f32 0.0, %v1949
      %v1951 = vpop.f32.mrb[0].mxu0
      %1952 = vmatprep.mubr.bf16.mxu0 0
      %1953 = vmatmul.mubr.bf16.gmra.mrb[0].mxu0 %v1909
      %v1954 = vpop.f32.mrb[0].mxu0
      %v1955 = vadd.f32 0.0, %v1954
      %v1956 = vpop.f32.mrb[0].mxu0
      %v1957 = vpop.f32.mrb[0].mxu0
      %v1958 = vadd.f32 0.0, %v1957
      %v1959 = vpop.f32.mrb[0].mxu0
      %1960 = vmatprep.mubr.bf16.mxu0 0
      %1961 = vmatmul.mubr.bf16.gmra.mrb[0].mxu0 %v1910
      %v1962 = vpop.f32.mrb[0].mxu0
      %v1963 = vadd.f32 0.0, %v1962
      %v1964 = vpop.f32.mrb[0].mxu0
      %v1965 = vpop.f32.mrb[0].mxu0
      %v1966 = vadd.f32 0.0, %v1965
      %v1967 = vpop.f32.mrb[0].mxu0
      %1968 = vmatprep.mubr.bf16.mxu0 0
      %1969 = vmatmul.mubr.bf16.gmra.mrb[0].mxu0 %v1911
      %v1970 = vpop.f32.mrb[0].mxu0
      %v1971 = vadd.f32 0.0, %v1970
      %v1972 = vpop.f32.mrb[0].mxu0
      %v1973 = vpop.f32.mrb[0].mxu0
      %v1974 = vadd.f32 0.0, %v1973
      %v1975 = vpop.f32.mrb[0].mxu0
      %1976 = vdwg.mxu0
      %v1977 = vpack.c.bf16 %v1950, %v1947
      %v1978 = vpack.c.bf16 %v1958, %v1955
      %v1979 = vpack.c.bf16 %v1966, %v1963
      %v1980 = vpack.c.bf16 %v1974, %v1971
      %1985 = vrot.lane.b32.xlu0 %v1977, 96
      %v1986 = vpop.permute.xlu0 %1985
      %1987 = vrot.lane.b32.xlu0 %v1978, 96
      %v1988 = vpop.permute.xlu0 %1987
      %1989 = vrot.lane.b32.xlu0 %v1979, 96
      %v1990 = vpop.permute.xlu0 %1989
      %1991 = vrot.lane.b32.xlu0 %v1980, 96
      %v1992 = vpop.permute.xlu0 %1991
      %vm1997 = vcmask 851712
      %1998 = vst.msk [vmem:[#allocation2] sm:$0xff] %vm1997, %v1986
      %1999 = vst.msk [vmem:[#allocation2 + $0x10] sm:$0xff] %vm1997, %v1988
      %2000 = vst.msk [vmem:[#allocation2 + $0x20] sm:$0xff] %vm1997, %v1990
      %2001 = vst.msk [vmem:[#allocation2 + $0x30] sm:$0xff] %vm1997, %v1992
      %2002 = vset.pattern.permute.xlu0 13
      %2003 = vperm.xlu0 %2002, %v218
      %v2004 = vpop.permute.xlu0 %2003
      %2005 = vset.pattern.permute.xlu0 13
      %2006 = vperm.xlu0 %2005, %v219
      %v2007 = vpop.permute.xlu0 %2006
      %2008 = vset.pattern.permute.xlu0 13
      %2009 = vperm.xlu0 %2008, %v220
      %v2010 = vpop.permute.xlu0 %2009
      %2011 = vset.pattern.permute.xlu0 13
      %2012 = vperm.xlu0 %2011, %v221
      %v2013 = vpop.permute.xlu0 %2012
      %2014 = vset.pattern.permute.xlu0 13
      %2015 = vperm.xlu0 %2014, %v222
      %v2016 = vpop.permute.xlu0 %2015
      %2017 = vset.pattern.permute.xlu0 13
      %2018 = vperm.xlu0 %2017, %v223
      %v2019 = vpop.permute.xlu0 %2018
      %2020 = vset.pattern.permute.xlu0 13
      %2021 = vperm.xlu0 %2020, %v224
      %v2022 = vpop.permute.xlu0 %2021
      %2023 = vset.pattern.permute.xlu0 13
      %2024 = vperm.xlu0 %2023, %v225
      %v2025 = vpop.permute.xlu0 %2024
      %vm2026 = vcmp.eq.s32.totalorder %v2004, %v227
      %vm2027 = vcmp.eq.s32.totalorder %v2007, %v227
      %vm2028 = vcmp.eq.s32.totalorder %v2010, %v227
      %vm2029 = vcmp.eq.s32.totalorder %v2013, %v227
      %vm2030 = vcmp.eq.s32.totalorder %v2016, %v227
      %vm2031 = vcmp.eq.s32.totalorder %v2019, %v227
      %vm2032 = vcmp.eq.s32.totalorder %v2022, %v227
      %vm2033 = vcmp.eq.s32.totalorder %v2025, %v227
      %v2034 = vsel %vm2026, 1.0, 0.0
      %v2035 = vsel %vm2027, 1.0, 0.0
      %v2036 = vsel %vm2028, 1.0, 0.0
      %v2037 = vsel %vm2029, 1.0, 0.0
      %v2038 = vsel %vm2030, 1.0, 0.0
      %v2039 = vsel %vm2031, 1.0, 0.0
      %v2040 = vsel %vm2032, 1.0, 0.0
      %v2041 = vsel %vm2033, 1.0, 0.0
      %v2042 = vpack.c.bf16 %v2035, %v2034
      %v2043 = vpack.c.bf16 %v2037, %v2036
      %v2044 = vpack.c.bf16 %v2039, %v2038
      %v2045 = vpack.c.bf16 %v2041, %v2040
      %2046 = vmatprep.subr.bf16.mxu0 0
      %2047 = vmatpush1.bf16.msra.mxu0 %v304
      %2048 = vmatprep.subr.bf16.mxu0 0
      %2049 = vmatpush1.bf16.msra.mxu0 %v305
      %2050 = vmatprep.subr.bf16.mxu0 0
      %2051 = vmatpush1.bf16.msra.mxu0 %v306
      %2052 = vmatprep.subr.bf16.mxu0 0
      %2053 = vmatpush1.bf16.msra.mxu0 %v307
      %2054 = vmatprep.subr.bf16.mxu0 0
      %2055 = vmatpush1.bf16.msra.mxu0 %v308
      %2056 = vmatprep.subr.bf16.mxu0 0
      %2057 = vmatpush1.bf16.msra.mxu0 %v309
      %2058 = vmatprep.subr.bf16.mxu0 0
      %2059 = vmatpush1.bf16.msra.mxu0 %v310
      %2060 = vmatprep.subr.bf16.mxu0 0
      %2061 = vmatpush1.bf16.msra.mxu0 %v311
      %2062 = vmatprep.subr.bf16.mxu0 0
      %2063 = vmatpush1.bf16.msra.mxu0 0
      %2064 = vmatprep.subr.bf16.mxu0 0
      %2065 = vmatpush1.bf16.msra.mxu0 0
      %2066 = vmatprep.subr.bf16.mxu0 0
      %2067 = vmatpush1.bf16.msra.mxu0 0
      %2068 = vmatprep.subr.bf16.mxu0 0
      %2069 = vmatpush1.bf16.msra.mxu0 0
      %2070 = vmatprep.subr.bf16.mxu0 0
      %2071 = vmatpush1.bf16.msra.mxu0 0
      %2072 = vmatprep.subr.bf16.mxu0 0
      %2073 = vmatpush1.bf16.msra.mxu0 0
      %2074 = vmatprep.subr.bf16.mxu0 0
      %2075 = vmatpush1.bf16.msra.mxu0 0
      %2076 = vmatprep.subr.bf16.mxu0 0
      %2077 = vmatpush1.bf16.msra.mxu0 0
      %2078 = vmatprep.mubr.bf16.mxu0 0
      %2079 = vmatmul.mubr.bf16.gmra.mrb[0].mxu0 %v2042
      %v2080 = vpop.f32.mrb[0].mxu0
      %v2081 = vadd.f32 0.0, %v2080
      %v2082 = vpop.f32.mrb[0].mxu0
      %v2083 = vpop.f32.mrb[0].mxu0
      %v2084 = vadd.f32 0.0, %v2083
      %v2085 = vpop.f32.mrb[0].mxu0
      %2086 = vmatprep.mubr.bf16.mxu0 0
      %2087 = vmatmul.mubr.bf16.gmra.mrb[0].mxu0 %v2043
      %v2088 = vpop.f32.mrb[0].mxu0
      %v2089 = vadd.f32 0.0, %v2088
      %v2090 = vpop.f32.mrb[0].mxu0
      %v2091 = vpop.f32.mrb[0].mxu0
      %v2092 = vadd.f32 0.0, %v2091
      %v2093 = vpop.f32.mrb[0].mxu0
      %2094 = vmatprep.mubr.bf16.mxu0 0
      %2095 = vmatmul.mubr.bf16.gmra.mrb[0].mxu0 %v2044
      %v2096 = vpop.f32.mrb[0].mxu0
      %v2097 = vadd.f32 0.0, %v2096
      %v2098 = vpop.f32.mrb[0].mxu0
      %v2099 = vpop.f32.mrb[0].mxu0
      %v2100 = vadd.f32 0.0, %v2099
      %v2101 = vpop.f32.mrb[0].mxu0
      %2102 = vmatprep.mubr.bf16.mxu0 0
      %2103 = vmatmul.mubr.bf16.gmra.mrb[0].mxu0 %v2045
      %v2104 = vpop.f32.mrb[0].mxu0
      %v2105 = vadd.f32 0.0, %v2104
      %v2106 = vpop.f32.mrb[0].mxu0
      %v2107 = vpop.f32.mrb[0].mxu0
      %v2108 = vadd.f32 0.0, %v2107
      %v2109 = vpop.f32.mrb[0].mxu0
      %2110 = vdwg.mxu0
      %v2111 = vpack.c.bf16 %v2084, %v2081
      %v2112 = vpack.c.bf16 %v2092, %v2089
      %v2113 = vpack.c.bf16 %v2100, %v2097
      %v2114 = vpack.c.bf16 %v2108, %v2105
      %2119 = vrot.lane.b32.xlu0 %v2111, 104
      %v2120 = vpop.permute.xlu0 %2119
      %2121 = vrot.lane.b32.xlu0 %v2112, 104
      %v2122 = vpop.permute.xlu0 %2121
      %2123 = vrot.lane.b32.xlu0 %v2113, 104
      %v2124 = vpop.permute.xlu0 %2123
      %2125 = vrot.lane.b32.xlu0 %v2114, 104
      %v2126 = vpop.permute.xlu0 %2125
      %vm2131 = vcmask 917312
      %2132 = vst.msk [vmem:[#allocation2] sm:$0xff] %vm2131, %v2120
      %2133 = vst.msk [vmem:[#allocation2 + $0x10] sm:$0xff] %vm2131, %v2122
      %2134 = vst.msk [vmem:[#allocation2 + $0x20] sm:$0xff] %vm2131, %v2124
      %2135 = vst.msk [vmem:[#allocation2 + $0x30] sm:$0xff] %vm2131, %v2126
      %2136 = vset.pattern.permute.xlu0 14
      %2137 = vperm.xlu0 %2136, %v218
      %v2138 = vpop.permute.xlu0 %2137
      %2139 = vset.pattern.permute.xlu0 14
      %2140 = vperm.xlu0 %2139, %v219
      %v2141 = vpop.permute.xlu0 %2140
      %2142 = vset.pattern.permute.xlu0 14
      %2143 = vperm.xlu0 %2142, %v220
      %v2144 = vpop.permute.xlu0 %2143
      %2145 = vset.pattern.permute.xlu0 14
      %2146 = vperm.xlu0 %2145, %v221
      %v2147 = vpop.permute.xlu0 %2146
      %2148 = vset.pattern.permute.xlu0 14
      %2149 = vperm.xlu0 %2148, %v222
      %v2150 = vpop.permute.xlu0 %2149
      %2151 = vset.pattern.permute.xlu0 14
      %2152 = vperm.xlu0 %2151, %v223
      %v2153 = vpop.permute.xlu0 %2152
      %2154 = vset.pattern.permute.xlu0 14
      %2155 = vperm.xlu0 %2154, %v224
      %v2156 = vpop.permute.xlu0 %2155
      %2157 = vset.pattern.permute.xlu0 14
      %2158 = vperm.xlu0 %2157, %v225
      %v2159 = vpop.permute.xlu0 %2158
      %vm2160 = vcmp.eq.s32.totalorder %v2138, %v227
      %vm2161 = vcmp.eq.s32.totalorder %v2141, %v227
      %vm2162 = vcmp.eq.s32.totalorder %v2144, %v227
      %vm2163 = vcmp.eq.s32.totalorder %v2147, %v227
      %vm2164 = vcmp.eq.s32.totalorder %v2150, %v227
      %vm2165 = vcmp.eq.s32.totalorder %v2153, %v227
      %vm2166 = vcmp.eq.s32.totalorder %v2156, %v227
      %vm2167 = vcmp.eq.s32.totalorder %v2159, %v227
      %v2168 = vsel %vm2160, 1.0, 0.0
      %v2169 = vsel %vm2161, 1.0, 0.0
      %v2170 = vsel %vm2162, 1.0, 0.0
      %v2171 = vsel %vm2163, 1.0, 0.0
      %v2172 = vsel %vm2164, 1.0, 0.0
      %v2173 = vsel %vm2165, 1.0, 0.0
      %v2174 = vsel %vm2166, 1.0, 0.0
      %v2175 = vsel %vm2167, 1.0, 0.0
      %v2176 = vpack.c.bf16 %v2169, %v2168
      %v2177 = vpack.c.bf16 %v2171, %v2170
      %v2178 = vpack.c.bf16 %v2173, %v2172
      %v2179 = vpack.c.bf16 %v2175, %v2174
      %2180 = vmatprep.subr.bf16.mxu0 0
      %2181 = vmatpush1.bf16.msra.mxu0 %v304
      %2182 = vmatprep.subr.bf16.mxu0 0
      %2183 = vmatpush1.bf16.msra.mxu0 %v305
      %2184 = vmatprep.subr.bf16.mxu0 0
      %2185 = vmatpush1.bf16.msra.mxu0 %v306
      %2186 = vmatprep.subr.bf16.mxu0 0
      %2187 = vmatpush1.bf16.msra.mxu0 %v307
      %2188 = vmatprep.subr.bf16.mxu0 0
      %2189 = vmatpush1.bf16.msra.mxu0 %v308
      %2190 = vmatprep.subr.bf16.mxu0 0
      %2191 = vmatpush1.bf16.msra.mxu0 %v309
      %2192 = vmatprep.subr.bf16.mxu0 0
      %2193 = vmatpush1.bf16.msra.mxu0 %v310
      %2194 = vmatprep.subr.bf16.mxu0 0
      %2195 = vmatpush1.bf16.msra.mxu0 %v311
      %2196 = vmatprep.subr.bf16.mxu0 0
      %2197 = vmatpush1.bf16.msra.mxu0 0
      %2198 = vmatprep.subr.bf16.mxu0 0
      %2199 = vmatpush1.bf16.msra.mxu0 0
      %2200 = vmatprep.subr.bf16.mxu0 0
      %2201 = vmatpush1.bf16.msra.mxu0 0
      %2202 = vmatprep.subr.bf16.mxu0 0
      %2203 = vmatpush1.bf16.msra.mxu0 0
      %2204 = vmatprep.subr.bf16.mxu0 0
      %2205 = vmatpush1.bf16.msra.mxu0 0
      %2206 = vmatprep.subr.bf16.mxu0 0
      %2207 = vmatpush1.bf16.msra.mxu0 0
      %2208 = vmatprep.subr.bf16.mxu0 0
      %2209 = vmatpush1.bf16.msra.mxu0 0
      %2210 = vmatprep.subr.bf16.mxu0 0
      %2211 = vmatpush1.bf16.msra.mxu0 0
      %2212 = vmatprep.mubr.bf16.mxu0 0
      %2213 = vmatmul.mubr.bf16.gmra.mrb[0].mxu0 %v2176
      %v2214 = vpop.f32.mrb[0].mxu0
      %v2215 = vadd.f32 0.0, %v2214
      %v2216 = vpop.f32.mrb[0].mxu0
      %v2217 = vpop.f32.mrb[0].mxu0
      %v2218 = vadd.f32 0.0, %v2217
      %v2219 = vpop.f32.mrb[0].mxu0
      %2220 = vmatprep.mubr.bf16.mxu0 0
      %2221 = vmatmul.mubr.bf16.gmra.mrb[0].mxu0 %v2177
      %v2222 = vpop.f32.mrb[0].mxu0
      %v2223 = vadd.f32 0.0, %v2222
      %v2224 = vpop.f32.mrb[0].mxu0
      %v2225 = vpop.f32.mrb[0].mxu0
      %v2226 = vadd.f32 0.0, %v2225
      %v2227 = vpop.f32.mrb[0].mxu0
      %2228 = vmatprep.mubr.bf16.mxu0 0
      %2229 = vmatmul.mubr.bf16.gmra.mrb[0].mxu0 %v2178
      %v2230 = vpop.f32.mrb[0].mxu0
      %v2231 = vadd.f32 0.0, %v2230
      %v2232 = vpop.f32.mrb[0].mxu0
      %v2233 = vpop.f32.mrb[0].mxu0
      %v2234 = vadd.f32 0.0, %v2233
      %v2235 = vpop.f32.mrb[0].mxu0
      %2236 = vmatprep.mubr.bf16.mxu0 0
      %2237 = vmatmul.mubr.bf16.gmra.mrb[0].mxu0 %v2179
      %v2238 = vpop.f32.mrb[0].mxu0
      %v2239 = vadd.f32 0.0, %v2238
      %v2240 = vpop.f32.mrb[0].mxu0
      %v2241 = vpop.f32.mrb[0].mxu0
      %v2242 = vadd.f32 0.0, %v2241
      %v2243 = vpop.f32.mrb[0].mxu0
      %2244 = vdwg.mxu0
      %v2245 = vpack.c.bf16 %v2218, %v2215
      %v2246 = vpack.c.bf16 %v2226, %v2223
      %v2247 = vpack.c.bf16 %v2234, %v2231
      %v2248 = vpack.c.bf16 %v2242, %v2239
      %2253 = vrot.lane.b32.xlu0 %v2245, 112
      %v2254 = vpop.permute.xlu0 %2253
      %2255 = vrot.lane.b32.xlu0 %v2246, 112
      %v2256 = vpop.permute.xlu0 %2255
      %2257 = vrot.lane.b32.xlu0 %v2247, 112
      %v2258 = vpop.permute.xlu0 %2257
      %2259 = vrot.lane.b32.xlu0 %v2248, 112
      %v2260 = vpop.permute.xlu0 %2259
      %vm2265 = vcmask 982912
      %2266 = vst.msk [vmem:[#allocation2] sm:$0xff] %vm2265, %v2254
      %2267 = vst.msk [vmem:[#allocation2 + $0x10] sm:$0xff] %vm2265, %v2256
      %2268 = vst.msk [vmem:[#allocation2 + $0x20] sm:$0xff] %vm2265, %v2258
      %2269 = vst.msk [vmem:[#allocation2 + $0x30] sm:$0xff] %vm2265, %v2260
      %2270 = vset.pattern.permute.xlu0 15
      %2271 = vperm.xlu0 %2270, %v218
      %v2272 = vpop.permute.xlu0 %2271
      %2273 = vset.pattern.permute.xlu0 15
      %2274 = vperm.xlu0 %2273, %v219
      %v2275 = vpop.permute.xlu0 %2274
      %2276 = vset.pattern.permute.xlu0 15
      %2277 = vperm.xlu0 %2276, %v220
      %v2278 = vpop.permute.xlu0 %2277
      %2279 = vset.pattern.permute.xlu0 15
      %2280 = vperm.xlu0 %2279, %v221
      %v2281 = vpop.permute.xlu0 %2280
      %2282 = vset.pattern.permute.xlu0 15
      %2283 = vperm.xlu0 %2282, %v222
      %v2284 = vpop.permute.xlu0 %2283
      %2285 = vset.pattern.permute.xlu0 15
      %2286 = vperm.xlu0 %2285, %v223
      %v2287 = vpop.permute.xlu0 %2286
      %2288 = vset.pattern.permute.xlu0 15
      %2289 = vperm.xlu0 %2288, %v224
      %v2290 = vpop.permute.xlu0 %2289
      %2291 = vset.pattern.permute.xlu0 15
      %2292 = vperm.xlu0 %2291, %v225
      %v2293 = vpop.permute.xlu0 %2292
      %vm2294 = vcmp.eq.s32.totalorder %v2272, %v227
      %vm2295 = vcmp.eq.s32.totalorder %v2275, %v227
      %vm2296 = vcmp.eq.s32.totalorder %v2278, %v227
      %vm2297 = vcmp.eq.s32.totalorder %v2281, %v227
      %vm2298 = vcmp.eq.s32.totalorder %v2284, %v227
      %vm2299 = vcmp.eq.s32.totalorder %v2287, %v227
      %vm2300 = vcmp.eq.s32.totalorder %v2290, %v227
      %vm2301 = vcmp.eq.s32.totalorder %v2293, %v227
      %v2302 = vsel %vm2294, 1.0, 0.0
      %v2303 = vsel %vm2295, 1.0, 0.0
      %v2304 = vsel %vm2296, 1.0, 0.0
      %v2305 = vsel %vm2297, 1.0, 0.0
      %v2306 = vsel %vm2298, 1.0, 0.0
      %v2307 = vsel %vm2299, 1.0, 0.0
      %v2308 = vsel %vm2300, 1.0, 0.0
      %v2309 = vsel %vm2301, 1.0, 0.0
      %v2310 = vpack.c.bf16 %v2303, %v2302
      %v2311 = vpack.c.bf16 %v2305, %v2304
      %v2312 = vpack.c.bf16 %v2307, %v2306
      %v2313 = vpack.c.bf16 %v2309, %v2308
      %2314 = vmatprep.subr.bf16.mxu0 0
      %2315 = vmatpush1.bf16.msra.mxu0 %v304
      %2316 = vmatprep.subr.bf16.mxu0 0
      %2317 = vmatpush1.bf16.msra.mxu0 %v305
      %2318 = vmatprep.subr.bf16.mxu0 0
      %2319 = vmatpush1.bf16.msra.mxu0 %v306
      %2320 = vmatprep.subr.bf16.mxu0 0
      %2321 = vmatpush1.bf16.msra.mxu0 %v307
      %2322 = vmatprep.subr.bf16.mxu0 0
      %2323 = vmatpush1.bf16.msra.mxu0 %v308
      %2324 = vmatprep.subr.bf16.mxu0 0
      %2325 = vmatpush1.bf16.msra.mxu0 %v309
      %2326 = vmatprep.subr.bf16.mxu0 0
      %2327 = vmatpush1.bf16.msra.mxu0 %v310
      %2328 = vmatprep.subr.bf16.mxu0 0
      %2329 = vmatpush1.bf16.msra.mxu0 %v311
      %2330 = vmatprep.subr.bf16.mxu0 0
      %2331 = vmatpush1.bf16.msra.mxu0 0
      %2332 = vmatprep.subr.bf16.mxu0 0
      %2333 = vmatpush1.bf16.msra.mxu0 0
      %2334 = vmatprep.subr.bf16.mxu0 0
      %2335 = vmatpush1.bf16.msra.mxu0 0
      %2336 = vmatprep.subr.bf16.mxu0 0
      %2337 = vmatpush1.bf16.msra.mxu0 0
      %2338 = vmatprep.subr.bf16.mxu0 0
      %2339 = vmatpush1.bf16.msra.mxu0 0
      %2340 = vmatprep.subr.bf16.mxu0 0
      %2341 = vmatpush1.bf16.msra.mxu0 0
      %2342 = vmatprep.subr.bf16.mxu0 0
      %2343 = vmatpush1.bf16.msra.mxu0 0
      %2344 = vmatprep.subr.bf16.mxu0 0
      %2345 = vmatpush1.bf16.msra.mxu0 0
      %2346 = vmatprep.mubr.bf16.mxu0 0
      %2347 = vmatmul.mubr.bf16.gmra.mrb[0].mxu0 %v2310
      %v2348 = vpop.f32.mrb[0].mxu0
      %v2349 = vadd.f32 0.0, %v2348
      %v2350 = vpop.f32.mrb[0].mxu0
      %v2351 = vpop.f32.mrb[0].mxu0
      %v2352 = vadd.f32 0.0, %v2351
      %v2353 = vpop.f32.mrb[0].mxu0
      %2354 = vmatprep.mubr.bf16.mxu0 0
      %2355 = vmatmul.mubr.bf16.gmra.mrb[0].mxu0 %v2311
      %v2356 = vpop.f32.mrb[0].mxu0
      %v2357 = vadd.f32 0.0, %v2356
      %v2358 = vpop.f32.mrb[0].mxu0
      %v2359 = vpop.f32.mrb[0].mxu0
      %v2360 = vadd.f32 0.0, %v2359
      %v2361 = vpop.f32.mrb[0].mxu0
      %2362 = vmatprep.mubr.bf16.mxu0 0
      %2363 = vmatmul.mubr.bf16.gmra.mrb[0].mxu0 %v2312
      %v2364 = vpop.f32.mrb[0].mxu0
      %v2365 = vadd.f32 0.0, %v2364
      %v2366 = vpop.f32.mrb[0].mxu0
      %v2367 = vpop.f32.mrb[0].mxu0
      %v2368 = vadd.f32 0.0, %v2367
      %v2369 = vpop.f32.mrb[0].mxu0
      %2370 = vmatprep.mubr.bf16.mxu0 0
      %2371 = vmatmul.mubr.bf16.gmra.mrb[0].mxu0 %v2313
      %v2372 = vpop.f32.mrb[0].mxu0
      %v2373 = vadd.f32 0.0, %v2372
      %v2374 = vpop.f32.mrb[0].mxu0
      %v2375 = vpop.f32.mrb[0].mxu0
      %v2376 = vadd.f32 0.0, %v2375
      %v2377 = vpop.f32.mrb[0].mxu0
      %2378 = vdwg.mxu0
      %v2379 = vpack.c.bf16 %v2352, %v2349
      %v2380 = vpack.c.bf16 %v2360, %v2357
      %v2381 = vpack.c.bf16 %v2368, %v2365
      %v2382 = vpack.c.bf16 %v2376, %v2373
      %2387 = vrot.lane.b32.xlu0 %v2379, 120
      %v2388 = vpop.permute.xlu0 %2387
      %2389 = vrot.lane.b32.xlu0 %v2380, 120
      %v2390 = vpop.permute.xlu0 %2389
      %2391 = vrot.lane.b32.xlu0 %v2381, 120
      %v2392 = vpop.permute.xlu0 %2391
      %2393 = vrot.lane.b32.xlu0 %v2382, 120
      %v2394 = vpop.permute.xlu0 %2393
      %vm2399 = vcmask 1048512
      %2400 = vst.msk [vmem:[#allocation2] sm:$0xff] %vm2399, %v2388
      %2401 = vst.msk [vmem:[#allocation2 + $0x10] sm:$0xff] %vm2399, %v2390
      %2402 = vst.msk [vmem:[#allocation2 + $0x20] sm:$0xff] %vm2399, %v2392
      %2403 = vst.msk [vmem:[#allocation2 + $0x30] sm:$0xff] %vm2399, %v2394
      %2404 = vset.pattern.permute.xlu0 16
      %2405 = vperm.xlu0 %2404, %v218
      %v2406 = vpop.permute.xlu0 %2405
      %2407 = vset.pattern.permute.xlu0 16
      %2408 = vperm.xlu0 %2407, %v219
      %v2409 = vpop.permute.xlu0 %2408
      %2410 = vset.pattern.permute.xlu0 16
      %2411 = vperm.xlu0 %2410, %v220
      %v2412 = vpop.permute.xlu0 %2411
      %2413 = vset.pattern.permute.xlu0 16
      %2414 = vperm.xlu0 %2413, %v221
      %v2415 = vpop.permute.xlu0 %2414
      %2416 = vset.pattern.permute.xlu0 16
      %2417 = vperm.xlu0 %2416, %v222
      %v2418 = vpop.permute.xlu0 %2417
      %2419 = vset.pattern.permute.xlu0 16
      %2420 = vperm.xlu0 %2419, %v223
      %v2421 = vpop.permute.xlu0 %2420
      %2422 = vset.pattern.permute.xlu0 16
      %2423 = vperm.xlu0 %2422, %v224
      %v2424 = vpop.permute.xlu0 %2423
      %2425 = vset.pattern.permute.xlu0 16
      %2426 = vperm.xlu0 %2425, %v225
      %v2427 = vpop.permute.xlu0 %2426
      %vm2428 = vcmp.eq.s32.totalorder %v2406, %v227
      %vm2429 = vcmp.eq.s32.totalorder %v2409, %v227
      %vm2430 = vcmp.eq.s32.totalorder %v2412, %v227
      %vm2431 = vcmp.eq.s32.totalorder %v2415, %v227
      %vm2432 = vcmp.eq.s32.totalorder %v2418, %v227
      %vm2433 = vcmp.eq.s32.totalorder %v2421, %v227
      %vm2434 = vcmp.eq.s32.totalorder %v2424, %v227
      %vm2435 = vcmp.eq.s32.totalorder %v2427, %v227
      %v2436 = vsel %vm2428, 1.0, 0.0
      %v2437 = vsel %vm2429, 1.0, 0.0
      %v2438 = vsel %vm2430, 1.0, 0.0
      %v2439 = vsel %vm2431, 1.0, 0.0
      %v2440 = vsel %vm2432, 1.0, 0.0
      %v2441 = vsel %vm2433, 1.0, 0.0
      %v2442 = vsel %vm2434, 1.0, 0.0
      %v2443 = vsel %vm2435, 1.0, 0.0
      %v2444 = vpack.c.bf16 %v2437, %v2436
      %v2445 = vpack.c.bf16 %v2439, %v2438
      %v2446 = vpack.c.bf16 %v2441, %v2440
      %v2447 = vpack.c.bf16 %v2443, %v2442
      %2448 = vmatprep.subr.bf16.mxu0 0
      %2449 = vmatpush1.bf16.msra.mxu0 %v304
      %2450 = vmatprep.subr.bf16.mxu0 0
      %2451 = vmatpush1.bf16.msra.mxu0 %v305
      %2452 = vmatprep.subr.bf16.mxu0 0
      %2453 = vmatpush1.bf16.msra.mxu0 %v306
      %2454 = vmatprep.subr.bf16.mxu0 0
      %2455 = vmatpush1.bf16.msra.mxu0 %v307
      %2456 = vmatprep.subr.bf16.mxu0 0
      %2457 = vmatpush1.bf16.msra.mxu0 %v308
      %2458 = vmatprep.subr.bf16.mxu0 0
      %2459 = vmatpush1.bf16.msra.mxu0 %v309
      %2460 = vmatprep.subr.bf16.mxu0 0
      %2461 = vmatpush1.bf16.msra.mxu0 %v310
      %2462 = vmatprep.subr.bf16.mxu0 0
      %2463 = vmatpush1.bf16.msra.mxu0 %v311
      %2464 = vmatprep.subr.bf16.mxu0 0
      %2465 = vmatpush1.bf16.msra.mxu0 0
      %2466 = vmatprep.subr.bf16.mxu0 0
      %2467 = vmatpush1.bf16.msra.mxu0 0
      %2468 = vmatprep.subr.bf16.mxu0 0
      %2469 = vmatpush1.bf16.msra.mxu0 0
      %2470 = vmatprep.subr.bf16.mxu0 0
      %2471 = vmatpush1.bf16.msra.mxu0 0
      %2472 = vmatprep.subr.bf16.mxu0 0
      %2473 = vmatpush1.bf16.msra.mxu0 0
      %2474 = vmatprep.subr.bf16.mxu0 0
      %2475 = vmatpush1.bf16.msra.mxu0 0
      %2476 = vmatprep.subr.bf16.mxu0 0
      %2477 = vmatpush1.bf16.msra.mxu0 0
      %2478 = vmatprep.subr.bf16.mxu0 0
      %2479 = vmatpush1.bf16.msra.mxu0 0
      %2480 = vmatprep.mubr.bf16.mxu0 0
      %2481 = vmatmul.mubr.bf16.gmra.mrb[0].mxu0 %v2444
      %v2482 = vpop.f32.mrb[0].mxu0
      %v2483 = vadd.f32 0.0, %v2482
      %v2484 = vpop.f32.mrb[0].mxu0
      %v2485 = vpop.f32.mrb[0].mxu0
      %v2486 = vadd.f32 0.0, %v2485
      %v2487 = vpop.f32.mrb[0].mxu0
      %2488 = vmatprep.mubr.bf16.mxu0 0
      %2489 = vmatmul.mubr.bf16.gmra.mrb[0].mxu0 %v2445
      %v2490 = vpop.f32.mrb[0].mxu0
      %v2491 = vadd.f32 0.0, %v2490
      %v2492 = vpop.f32.mrb[0].mxu0
      %v2493 = vpop.f32.mrb[0].mxu0
      %v2494 = vadd.f32 0.0, %v2493
      %v2495 = vpop.f32.mrb[0].mxu0
      %2496 = vmatprep.mubr.bf16.mxu0 0
      %2497 = vmatmul.mubr.bf16.gmra.mrb[0].mxu0 %v2446
      %v2498 = vpop.f32.mrb[0].mxu0
      %v2499 = vadd.f32 0.0, %v2498
      %v2500 = vpop.f32.mrb[0].mxu0
      %v2501 = vpop.f32.mrb[0].mxu0
      %v2502 = vadd.f32 0.0, %v2501
      %v2503 = vpop.f32.mrb[0].mxu0
      %2504 = vmatprep.mubr.bf16.mxu0 0
      %2505 = vmatmul.mubr.bf16.gmra.mrb[0].mxu0 %v2447
      %v2506 = vpop.f32.mrb[0].mxu0
      %v2507 = vadd.f32 0.0, %v2506
      %v2508 = vpop.f32.mrb[0].mxu0
      %v2509 = vpop.f32.mrb[0].mxu0
      %v2510 = vadd.f32 0.0, %v2509
      %v2511 = vpop.f32.mrb[0].mxu0
      %2512 = vdwg.mxu0
      %v2513 = vpack.c.bf16 %v2486, %v2483
      %v2514 = vpack.c.bf16 %v2494, %v2491
      %v2515 = vpack.c.bf16 %v2502, %v2499
      %v2516 = vpack.c.bf16 %v2510, %v2507
      %2517 = vst.msk [vmem:[#allocation2 + $0x8] sm:$0xff] %vm389, %v2513
      %2518 = vst.msk [vmem:[#allocation2 + $0x18] sm:$0xff] %vm389, %v2514
      %2519 = vst.msk [vmem:[#allocation2 + $0x28] sm:$0xff] %vm389, %v2515
      %2520 = vst.msk [vmem:[#allocation2 + $0x38] sm:$0xff] %vm389, %v2516
      %2521 = vset.pattern.permute.xlu0 17
      %2522 = vperm.xlu0 %2521, %v218
      %v2523 = vpop.permute.xlu0 %2522
      %2524 = vset.pattern.permute.xlu0 17
      %2525 = vperm.xlu0 %2524, %v219
      %v2526 = vpop.permute.xlu0 %2525
      %2527 = vset.pattern.permute.xlu0 17
      %2528 = vperm.xlu0 %2527, %v220
      %v2529 = vpop.permute.xlu0 %2528
      %2530 = vset.pattern.permute.xlu0 17
      %2531 = vperm.xlu0 %2530, %v221
      %v2532 = vpop.permute.xlu0 %2531
      %2533 = vset.pattern.permute.xlu0 17
      %2534 = vperm.xlu0 %2533, %v222
      %v2535 = vpop.permute.xlu0 %2534
      %2536 = vset.pattern.permute.xlu0 17
      %2537 = vperm.xlu0 %2536, %v223
      %v2538 = vpop.permute.xlu0 %2537
      %2539 = vset.pattern.permute.xlu0 17
      %2540 = vperm.xlu0 %2539, %v224
      %v2541 = vpop.permute.xlu0 %2540
      %2542 = vset.pattern.permute.xlu0 17
      %2543 = vperm.xlu0 %2542, %v225
      %v2544 = vpop.permute.xlu0 %2543
      %vm2545 = vcmp.eq.s32.totalorder %v2523, %v227
      %vm2546 = vcmp.eq.s32.totalorder %v2526, %v227
      %vm2547 = vcmp.eq.s32.totalorder %v2529, %v227
      %vm2548 = vcmp.eq.s32.totalorder %v2532, %v227
      %vm2549 = vcmp.eq.s32.totalorder %v2535, %v227
      %vm2550 = vcmp.eq.s32.totalorder %v2538, %v227
      %vm2551 = vcmp.eq.s32.totalorder %v2541, %v227
      %vm2552 = vcmp.eq.s32.totalorder %v2544, %v227
      %v2553 = vsel %vm2545, 1.0, 0.0
      %v2554 = vsel %vm2546, 1.0, 0.0
      %v2555 = vsel %vm2547, 1.0, 0.0
      %v2556 = vsel %vm2548, 1.0, 0.0
      %v2557 = vsel %vm2549, 1.0, 0.0
      %v2558 = vsel %vm2550, 1.0, 0.0
      %v2559 = vsel %vm2551, 1.0, 0.0
      %v2560 = vsel %vm2552, 1.0, 0.0
      %v2561 = vpack.c.bf16 %v2554, %v2553
      %v2562 = vpack.c.bf16 %v2556, %v2555
      %v2563 = vpack.c.bf16 %v2558, %v2557
      %v2564 = vpack.c.bf16 %v2560, %v2559
      %2565 = vmatprep.subr.bf16.mxu0 0
      %2566 = vmatpush1.bf16.msra.mxu0 %v304
      %2567 = vmatprep.subr.bf16.mxu0 0
      %2568 = vmatpush1.bf16.msra.mxu0 %v305
      %2569 = vmatprep.subr.bf16.mxu0 0
      %2570 = vmatpush1.bf16.msra.mxu0 %v306
      %2571 = vmatprep.subr.bf16.mxu0 0
      %2572 = vmatpush1.bf16.msra.mxu0 %v307
      %2573 = vmatprep.subr.bf16.mxu0 0
      %2574 = vmatpush1.bf16.msra.mxu0 %v308
      %2575 = vmatprep.subr.bf16.mxu0 0
      %2576 = vmatpush1.bf16.msra.mxu0 %v309
      %2577 = vmatprep.subr.bf16.mxu0 0
      %2578 = vmatpush1.bf16.msra.mxu0 %v310
      %2579 = vmatprep.subr.bf16.mxu0 0
      %2580 = vmatpush1.bf16.msra.mxu0 %v311
      %2581 = vmatprep.subr.bf16.mxu0 0
      %2582 = vmatpush1.bf16.msra.mxu0 0
      %2583 = vmatprep.subr.bf16.mxu0 0
      %2584 = vmatpush1.bf16.msra.mxu0 0
      %2585 = vmatprep.subr.bf16.mxu0 0
      %2586 = vmatpush1.bf16.msra.mxu0 0
      %2587 = vmatprep.subr.bf16.mxu0 0
      %2588 = vmatpush1.bf16.msra.mxu0 0
      %2589 = vmatprep.subr.bf16.mxu0 0
      %2590 = vmatpush1.bf16.msra.mxu0 0
      %2591 = vmatprep.subr.bf16.mxu0 0
      %2592 = vmatpush1.bf16.msra.mxu0 0
      %2593 = vmatprep.subr.bf16.mxu0 0
      %2594 = vmatpush1.bf16.msra.mxu0 0
      %2595 = vmatprep.subr.bf16.mxu0 0
      %2596 = vmatpush1.bf16.msra.mxu0 0
      %2597 = vmatprep.mubr.bf16.mxu0 0
      %2598 = vmatmul.mubr.bf16.gmra.mrb[0].mxu0 %v2561
      %v2599 = vpop.f32.mrb[0].mxu0
      %v2600 = vadd.f32 0.0, %v2599
      %v2601 = vpop.f32.mrb[0].mxu0
      %v2602 = vpop.f32.mrb[0].mxu0
      %v2603 = vadd.f32 0.0, %v2602
      %v2604 = vpop.f32.mrb[0].mxu0
      %2605 = vmatprep.mubr.bf16.mxu0 0
      %2606 = vmatmul.mubr.bf16.gmra.mrb[0].mxu0 %v2562
      %v2607 = vpop.f32.mrb[0].mxu0
      %v2608 = vadd.f32 0.0, %v2607
      %v2609 = vpop.f32.mrb[0].mxu0
      %v2610 = vpop.f32.mrb[0].mxu0
      %v2611 = vadd.f32 0.0, %v2610
      %v2612 = vpop.f32.mrb[0].mxu0
      %2613 = vmatprep.mubr.bf16.mxu0 0
      %2614 = vmatmul.mubr.bf16.gmra.mrb[0].mxu0 %v2563
      %v2615 = vpop.f32.mrb[0].mxu0
      %v2616 = vadd.f32 0.0, %v2615
      %v2617 = vpop.f32.mrb[0].mxu0
      %v2618 = vpop.f32.mrb[0].mxu0
      %v2619 = vadd.f32 0.0, %v2618
      %v2620 = vpop.f32.mrb[0].mxu0
      %2621 = vmatprep.mubr.bf16.mxu0 0
      %2622 = vmatmul.mubr.bf16.gmra.mrb[0].mxu0 %v2564
      %v2623 = vpop.f32.mrb[0].mxu0
      %v2624 = vadd.f32 0.0, %v2623
      %v2625 = vpop.f32.mrb[0].mxu0
      %v2626 = vpop.f32.mrb[0].mxu0
      %v2627 = vadd.f32 0.0, %v2626
      %v2628 = vpop.f32.mrb[0].mxu0
      %2629 = vdwg.mxu0
      %v2630 = vpack.c.bf16 %v2603, %v2600
      %v2631 = vpack.c.bf16 %v2611, %v2608
      %v2632 = vpack.c.bf16 %v2619, %v2616
      %v2633 = vpack.c.bf16 %v2627, %v2624
      %2638 = vrot.lane.b32.xlu0 %v2630, 8
      %v2639 = vpop.permute.xlu0 %2638
      %2640 = vrot.lane.b32.xlu0 %v2631, 8
      %v2641 = vpop.permute.xlu0 %2640
      %2642 = vrot.lane.b32.xlu0 %v2632, 8
      %v2643 = vpop.permute.xlu0 %2642
      %2644 = vrot.lane.b32.xlu0 %v2633, 8
      %v2645 = vpop.permute.xlu0 %2644
      %2650 = vst.msk [vmem:[#allocation2 + $0x8] sm:$0xff] %vm523, %v2639
      %2651 = vst.msk [vmem:[#allocation2 + $0x18] sm:$0xff] %vm523, %v2641
      %2652 = vst.msk [vmem:[#allocation2 + $0x28] sm:$0xff] %vm523, %v2643
      %2653 = vst.msk [vmem:[#allocation2 + $0x38] sm:$0xff] %vm523, %v2645
      %2654 = vset.pattern.permute.xlu0 18
      %2655 = vperm.xlu0 %2654, %v218
      %v2656 = vpop.permute.xlu0 %2655
      %2657 = vset.pattern.permute.xlu0 18
      %2658 = vperm.xlu0 %2657, %v219
      %v2659 = vpop.permute.xlu0 %2658
      %2660 = vset.pattern.permute.xlu0 18
      %2661 = vperm.xlu0 %2660, %v220
      %v2662 = vpop.permute.xlu0 %2661
      %2663 = vset.pattern.permute.xlu0 18
      %2664 = vperm.xlu0 %2663, %v221
      %v2665 = vpop.permute.xlu0 %2664
      %2666 = vset.pattern.permute.xlu0 18
      %2667 = vperm.xlu0 %2666, %v222
      %v2668 = vpop.permute.xlu0 %2667
      %2669 = vset.pattern.permute.xlu0 18
      %2670 = vperm.xlu0 %2669, %v223
      %v2671 = vpop.permute.xlu0 %2670
      %2672 = vset.pattern.permute.xlu0 18
      %2673 = vperm.xlu0 %2672, %v224
      %v2674 = vpop.permute.xlu0 %2673
      %2675 = vset.pattern.permute.xlu0 18
      %2676 = vperm.xlu0 %2675, %v225
      %v2677 = vpop.permute.xlu0 %2676
      %vm2678 = vcmp.eq.s32.totalorder %v2656, %v227
      %vm2679 = vcmp.eq.s32.totalorder %v2659, %v227
      %vm2680 = vcmp.eq.s32.totalorder %v2662, %v227
      %vm2681 = vcmp.eq.s32.totalorder %v2665, %v227
      %vm2682 = vcmp.eq.s32.totalorder %v2668, %v227
      %vm2683 = vcmp.eq.s32.totalorder %v2671, %v227
      %vm2684 = vcmp.eq.s32.totalorder %v2674, %v227
      %vm2685 = vcmp.eq.s32.totalorder %v2677, %v227
      %v2686 = vsel %vm2678, 1.0, 0.0
      %v2687 = vsel %vm2679, 1.0, 0.0
      %v2688 = vsel %vm2680, 1.0, 0.0
      %v2689 = vsel %vm2681, 1.0, 0.0
      %v2690 = vsel %vm2682, 1.0, 0.0
      %v2691 = vsel %vm2683, 1.0, 0.0
      %v2692 = vsel %vm2684, 1.0, 0.0
      %v2693 = vsel %vm2685, 1.0, 0.0
      %v2694 = vpack.c.bf16 %v2687, %v2686
      %v2695 = vpack.c.bf16 %v2689, %v2688
      %v2696 = vpack.c.bf16 %v2691, %v2690
      %v2697 = vpack.c.bf16 %v2693, %v2692
      %2698 = vmatprep.subr.bf16.mxu0 0
      %2699 = vmatpush1.bf16.msra.mxu0 %v304
      %2700 = vmatprep.subr.bf16.mxu0 0
      %2701 = vmatpush1.bf16.msra.mxu0 %v305
      %2702 = vmatprep.subr.bf16.mxu0 0
      %2703 = vmatpush1.bf16.msra.mxu0 %v306
      %2704 = vmatprep.subr.bf16.mxu0 0
      %2705 = vmatpush1.bf16.msra.mxu0 %v307
      %2706 = vmatprep.subr.bf16.mxu0 0
      %2707 = vmatpush1.bf16.msra.mxu0 %v308
      %2708 = vmatprep.subr.bf16.mxu0 0
      %2709 = vmatpush1.bf16.msra.mxu0 %v309
      %2710 = vmatprep.subr.bf16.mxu0 0
      %2711 = vmatpush1.bf16.msra.mxu0 %v310
      %2712 = vmatprep.subr.bf16.mxu0 0
      %2713 = vmatpush1.bf16.msra.mxu0 %v311
      %2714 = vmatprep.subr.bf16.mxu0 0
      %2715 = vmatpush1.bf16.msra.mxu0 0
      %2716 = vmatprep.subr.bf16.mxu0 0
      %2717 = vmatpush1.bf16.msra.mxu0 0
      %2718 = vmatprep.subr.bf16.mxu0 0
      %2719 = vmatpush1.bf16.msra.mxu0 0
      %2720 = vmatprep.subr.bf16.mxu0 0
      %2721 = vmatpush1.bf16.msra.mxu0 0
      %2722 = vmatprep.subr.bf16.mxu0 0
      %2723 = vmatpush1.bf16.msra.mxu0 0
      %2724 = vmatprep.subr.bf16.mxu0 0
      %2725 = vmatpush1.bf16.msra.mxu0 0
      %2726 = vmatprep.subr.bf16.mxu0 0
      %2727 = vmatpush1.bf16.msra.mxu0 0
      %2728 = vmatprep.subr.bf16.mxu0 0
      %2729 = vmatpush1.bf16.msra.mxu0 0
      %2730 = vmatprep.mubr.bf16.mxu0 0
      %2731 = vmatmul.mubr.bf16.gmra.mrb[0].mxu0 %v2694
      %v2732 = vpop.f32.mrb[0].mxu0
      %v2733 = vadd.f32 0.0, %v2732
      %v2734 = vpop.f32.mrb[0].mxu0
      %v2735 = vpop.f32.mrb[0].mxu0
      %v2736 = vadd.f32 0.0, %v2735
      %v2737 = vpop.f32.mrb[0].mxu0
      %2738 = vmatprep.mubr.bf16.mxu0 0
      %2739 = vmatmul.mubr.bf16.gmra.mrb[0].mxu0 %v2695
      %v2740 = vpop.f32.mrb[0].mxu0
      %v2741 = vadd.f32 0.0, %v2740
      %v2742 = vpop.f32.mrb[0].mxu0
      %v2743 = vpop.f32.mrb[0].mxu0
      %v2744 = vadd.f32 0.0, %v2743
      %v2745 = vpop.f32.mrb[0].mxu0
      %2746 = vmatprep.mubr.bf16.mxu0 0
      %2747 = vmatmul.mubr.bf16.gmra.mrb[0].mxu0 %v2696
      %v2748 = vpop.f32.mrb[0].mxu0
      %v2749 = vadd.f32 0.0, %v2748
      %v2750 = vpop.f32.mrb[0].mxu0
      %v2751 = vpop.f32.mrb[0].mxu0
      %v2752 = vadd.f32 0.0, %v2751
      %v2753 = vpop.f32.mrb[0].mxu0
      %2754 = vmatprep.mubr.bf16.mxu0 0
      %2755 = vmatmul.mubr.bf16.gmra.mrb[0].mxu0 %v2697
      %v2756 = vpop.f32.mrb[0].mxu0
      %v2757 = vadd.f32 0.0, %v2756
      %v2758 = vpop.f32.mrb[0].mxu0
      %v2759 = vpop.f32.mrb[0].mxu0
      %v2760 = vadd.f32 0.0, %v2759
      %v2761 = vpop.f32.mrb[0].mxu0
      %2762 = vdwg.mxu0
      %v2763 = vpack.c.bf16 %v2736, %v2733
      %v2764 = vpack.c.bf16 %v2744, %v2741
      %v2765 = vpack.c.bf16 %v2752, %v2749
      %v2766 = vpack.c.bf16 %v2760, %v2757
      %2771 = vrot.lane.b32.xlu0 %v2763, 16
      %v2772 = vpop.permute.xlu0 %2771
      %2773 = vrot.lane.b32.xlu0 %v2764, 16
      %v2774 = vpop.permute.xlu0 %2773
      %2775 = vrot.lane.b32.xlu0 %v2765, 16
      %v2776 = vpop.permute.xlu0 %2775
      %2777 = vrot.lane.b32.xlu0 %v2766, 16
      %v2778 = vpop.permute.xlu0 %2777
      %2783 = vst.msk [vmem:[#allocation2 + $0x8] sm:$0xff] %vm657, %v2772
      %2784 = vst.msk [vmem:[#allocation2 + $0x18] sm:$0xff] %vm657, %v2774
      %2785 = vst.msk [vmem:[#allocation2 + $0x28] sm:$0xff] %vm657, %v2776
      %2786 = vst.msk [vmem:[#allocation2 + $0x38] sm:$0xff] %vm657, %v2778
      %2787 = vset.pattern.permute.xlu0 19
      %2788 = vperm.xlu0 %2787, %v218
      %v2789 = vpop.permute.xlu0 %2788
      %2790 = vset.pattern.permute.xlu0 19
      %2791 = vperm.xlu0 %2790, %v219
      %v2792 = vpop.permute.xlu0 %2791
      %2793 = vset.pattern.permute.xlu0 19
      %2794 = vperm.xlu0 %2793, %v220
      %v2795 = vpop.permute.xlu0 %2794
      %2796 = vset.pattern.permute.xlu0 19
      %2797 = vperm.xlu0 %2796, %v221
      %v2798 = vpop.permute.xlu0 %2797
      %2799 = vset.pattern.permute.xlu0 19
      %2800 = vperm.xlu0 %2799, %v222
      %v2801 = vpop.permute.xlu0 %2800
      %2802 = vset.pattern.permute.xlu0 19
      %2803 = vperm.xlu0 %2802, %v223
      %v2804 = vpop.permute.xlu0 %2803
      %2805 = vset.pattern.permute.xlu0 19
      %2806 = vperm.xlu0 %2805, %v224
      %v2807 = vpop.permute.xlu0 %2806
      %2808 = vset.pattern.permute.xlu0 19
      %2809 = vperm.xlu0 %2808, %v225
      %v2810 = vpop.permute.xlu0 %2809
      %vm2811 = vcmp.eq.s32.totalorder %v2789, %v227
      %vm2812 = vcmp.eq.s32.totalorder %v2792, %v227
      %vm2813 = vcmp.eq.s32.totalorder %v2795, %v227
      %vm2814 = vcmp.eq.s32.totalorder %v2798, %v227
      %vm2815 = vcmp.eq.s32.totalorder %v2801, %v227
      %vm2816 = vcmp.eq.s32.totalorder %v2804, %v227
      %vm2817 = vcmp.eq.s32.totalorder %v2807, %v227
      %vm2818 = vcmp.eq.s32.totalorder %v2810, %v227
      %v2819 = vsel %vm2811, 1.0, 0.0
      %v2820 = vsel %vm2812, 1.0, 0.0
      %v2821 = vsel %vm2813, 1.0, 0.0
      %v2822 = vsel %vm2814, 1.0, 0.0
      %v2823 = vsel %vm2815, 1.0, 0.0
      %v2824 = vsel %vm2816, 1.0, 0.0
      %v2825 = vsel %vm2817, 1.0, 0.0
      %v2826 = vsel %vm2818, 1.0, 0.0
      %v2827 = vpack.c.bf16 %v2820, %v2819
      %v2828 = vpack.c.bf16 %v2822, %v2821
      %v2829 = vpack.c.bf16 %v2824, %v2823
      %v2830 = vpack.c.bf16 %v2826, %v2825
      %2831 = vmatprep.subr.bf16.mxu0 0
      %2832 = vmatpush1.bf16.msra.mxu0 %v304
      %2833 = vmatprep.subr.bf16.mxu0 0
      %2834 = vmatpush1.bf16.msra.mxu0 %v305
      %2835 = vmatprep.subr.bf16.mxu0 0
      %2836 = vmatpush1.bf16.msra.mxu0 %v306
      %2837 = vmatprep.subr.bf16.mxu0 0
      %2838 = vmatpush1.bf16.msra.mxu0 %v307
      %2839 = vmatprep.subr.bf16.mxu0 0
      %2840 = vmatpush1.bf16.msra.mxu0 %v308
      %2841 = vmatprep.subr.bf16.mxu0 0
      %2842 = vmatpush1.bf16.msra.mxu0 %v309
      %2843 = vmatprep.subr.bf16.mxu0 0
      %2844 = vmatpush1.bf16.msra.mxu0 %v310
      %2845 = vmatprep.subr.bf16.mxu0 0
      %2846 = vmatpush1.bf16.msra.mxu0 %v311
      %2847 = vmatprep.subr.bf16.mxu0 0
      %2848 = vmatpush1.bf16.msra.mxu0 0
      %2849 = vmatprep.subr.bf16.mxu0 0
      %2850 = vmatpush1.bf16.msra.mxu0 0
      %2851 = vmatprep.subr.bf16.mxu0 0
      %2852 = vmatpush1.bf16.msra.mxu0 0
      %2853 = vmatprep.subr.bf16.mxu0 0
      %2854 = vmatpush1.bf16.msra.mxu0 0
      %2855 = vmatprep.subr.bf16.mxu0 0
      %2856 = vmatpush1.bf16.msra.mxu0 0
      %2857 = vmatprep.subr.bf16.mxu0 0
      %2858 = vmatpush1.bf16.msra.mxu0 0
      %2859 = vmatprep.subr.bf16.mxu0 0
      %2860 = vmatpush1.bf16.msra.mxu0 0
      %2861 = vmatprep.subr.bf16.mxu0 0
      %2862 = vmatpush1.bf16.msra.mxu0 0
      %2863 = vmatprep.mubr.bf16.mxu0 0
      %2864 = vmatmul.mubr.bf16.gmra.mrb[0].mxu0 %v2827
      %v2865 = vpop.f32.mrb[0].mxu0
      %v2866 = vadd.f32 0.0, %v2865
      %v2867 = vpop.f32.mrb[0].mxu0
      %v2868 = vpop.f32.mrb[0].mxu0
      %v2869 = vadd.f32 0.0, %v2868
      %v2870 = vpop.f32.mrb[0].mxu0
      %2871 = vmatprep.mubr.bf16.mxu0 0
      %2872 = vmatmul.mubr.bf16.gmra.mrb[0].mxu0 %v2828
      %v2873 = vpop.f32.mrb[0].mxu0
      %v2874 = vadd.f32 0.0, %v2873
      %v2875 = vpop.f32.mrb[0].mxu0
      %v2876 = vpop.f32.mrb[0].mxu0
      %v2877 = vadd.f32 0.0, %v2876
      %v2878 = vpop.f32.mrb[0].mxu0
      %2879 = vmatprep.mubr.bf16.mxu0 0
      %2880 = vmatmul.mubr.bf16.gmra.mrb[0].mxu0 %v2829
      %v2881 = vpop.f32.mrb[0].mxu0
      %v2882 = vadd.f32 0.0, %v2881
      %v2883 = vpop.f32.mrb[0].mxu0
      %v2884 = vpop.f32.mrb[0].mxu0
      %v2885 = vadd.f32 0.0, %v2884
      %v2886 = vpop.f32.mrb[0].mxu0
      %2887 = vmatprep.mubr.bf16.mxu0 0
      %2888 = vmatmul.mubr.bf16.gmra.mrb[0].mxu0 %v2830
      %v2889 = vpop.f32.mrb[0].mxu0
      %v2890 = vadd.f32 0.0, %v2889
      %v2891 = vpop.f32.mrb[0].mxu0
      %v2892 = vpop.f32.mrb[0].mxu0
      %v2893 = vadd.f32 0.0, %v2892
      %v2894 = vpop.f32.mrb[0].mxu0
      %2895 = vdwg.mxu0
      %v2896 = vpack.c.bf16 %v2869, %v2866
      %v2897 = vpack.c.bf16 %v2877, %v2874
      %v2898 = vpack.c.bf16 %v2885, %v2882
      %v2899 = vpack.c.bf16 %v2893, %v2890
      %2904 = vrot.lane.b32.xlu0 %v2896, 24
      %v2905 = vpop.permute.xlu0 %2904
      %2906 = vrot.lane.b32.xlu0 %v2897, 24
      %v2907 = vpop.permute.xlu0 %2906
      %2908 = vrot.lane.b32.xlu0 %v2898, 24
      %v2909 = vpop.permute.xlu0 %2908
      %2910 = vrot.lane.b32.xlu0 %v2899, 24
      %v2911 = vpop.permute.xlu0 %2910
      %2916 = vst.msk [vmem:[#allocation2 + $0x8] sm:$0xff] %vm791, %v2905
      %2917 = vst.msk [vmem:[#allocation2 + $0x18] sm:$0xff] %vm791, %v2907
      %2918 = vst.msk [vmem:[#allocation2 + $0x28] sm:$0xff] %vm791, %v2909
      %2919 = vst.msk [vmem:[#allocation2 + $0x38] sm:$0xff] %vm791, %v2911
      %2920 = vset.pattern.permute.xlu0 20
      %2921 = vperm.xlu0 %2920, %v218
      %v2922 = vpop.permute.xlu0 %2921
      %2923 = vset.pattern.permute.xlu0 20
      %2924 = vperm.xlu0 %2923, %v219
      %v2925 = vpop.permute.xlu0 %2924
      %2926 = vset.pattern.permute.xlu0 20
      %2927 = vperm.xlu0 %2926, %v220
      %v2928 = vpop.permute.xlu0 %2927
      %2929 = vset.pattern.permute.xlu0 20
      %2930 = vperm.xlu0 %2929, %v221
      %v2931 = vpop.permute.xlu0 %2930
      %2932 = vset.pattern.permute.xlu0 20
      %2933 = vperm.xlu0 %2932, %v222
      %v2934 = vpop.permute.xlu0 %2933
      %2935 = vset.pattern.permute.xlu0 20
      %2936 = vperm.xlu0 %2935, %v223
      %v2937 = vpop.permute.xlu0 %2936
      %2938 = vset.pattern.permute.xlu0 20
      %2939 = vperm.xlu0 %2938, %v224
      %v2940 = vpop.permute.xlu0 %2939
      %2941 = vset.pattern.permute.xlu0 20
      %2942 = vperm.xlu0 %2941, %v225
      %v2943 = vpop.permute.xlu0 %2942
      %vm2944 = vcmp.eq.s32.totalorder %v2922, %v227
      %vm2945 = vcmp.eq.s32.totalorder %v2925, %v227
      %vm2946 = vcmp.eq.s32.totalorder %v2928, %v227
      %vm2947 = vcmp.eq.s32.totalorder %v2931, %v227
      %vm2948 = vcmp.eq.s32.totalorder %v2934, %v227
      %vm2949 = vcmp.eq.s32.totalorder %v2937, %v227
      %vm2950 = vcmp.eq.s32.totalorder %v2940, %v227
      %vm2951 = vcmp.eq.s32.totalorder %v2943, %v227
      %v2952 = vsel %vm2944, 1.0, 0.0
      %v2953 = vsel %vm2945, 1.0, 0.0
      %v2954 = vsel %vm2946, 1.0, 0.0
      %v2955 = vsel %vm2947, 1.0, 0.0
      %v2956 = vsel %vm2948, 1.0, 0.0
      %v2957 = vsel %vm2949, 1.0, 0.0
      %v2958 = vsel %vm2950, 1.0, 0.0
      %v2959 = vsel %vm2951, 1.0, 0.0
      %v2960 = vpack.c.bf16 %v2953, %v2952
      %v2961 = vpack.c.bf16 %v2955, %v2954
      %v2962 = vpack.c.bf16 %v2957, %v2956
      %v2963 = vpack.c.bf16 %v2959, %v2958
      %2964 = vmatprep.subr.bf16.mxu0 0
      %2965 = vmatpush1.bf16.msra.mxu0 %v304
      %2966 = vmatprep.subr.bf16.mxu0 0
      %2967 = vmatpush1.bf16.msra.mxu0 %v305
      %2968 = vmatprep.subr.bf16.mxu0 0
      %2969 = vmatpush1.bf16.msra.mxu0 %v306
      %2970 = vmatprep.subr.bf16.mxu0 0
      %2971 = vmatpush1.bf16.msra.mxu0 %v307
      %2972 = vmatprep.subr.bf16.mxu0 0
      %2973 = vmatpush1.bf16.msra.mxu0 %v308
      %2974 = vmatprep.subr.bf16.mxu0 0
      %2975 = vmatpush1.bf16.msra.mxu0 %v309
      %2976 = vmatprep.subr.bf16.mxu0 0
      %2977 = vmatpush1.bf16.msra.mxu0 %v310
      %2978 = vmatprep.subr.bf16.mxu0 0
      %2979 = vmatpush1.bf16.msra.mxu0 %v311
      %2980 = vmatprep.subr.bf16.mxu0 0
      %2981 = vmatpush1.bf16.msra.mxu0 0
      %2982 = vmatprep.subr.bf16.mxu0 0
      %2983 = vmatpush1.bf16.msra.mxu0 0
      %2984 = vmatprep.subr.bf16.mxu0 0
      %2985 = vmatpush1.bf16.msra.mxu0 0
      %2986 = vmatprep.subr.bf16.mxu0 0
      %2987 = vmatpush1.bf16.msra.mxu0 0
      %2988 = vmatprep.subr.bf16.mxu0 0
      %2989 = vmatpush1.bf16.msra.mxu0 0
      %2990 = vmatprep.subr.bf16.mxu0 0
      %2991 = vmatpush1.bf16.msra.mxu0 0
      %2992 = vmatprep.subr.bf16.mxu0 0
      %2993 = vmatpush1.bf16.msra.mxu0 0
      %2994 = vmatprep.subr.bf16.mxu0 0
      %2995 = vmatpush1.bf16.msra.mxu0 0
      %2996 = vmatprep.mubr.bf16.mxu0 0
      %2997 = vmatmul.mubr.bf16.gmra.mrb[0].mxu0 %v2960
      %v2998 = vpop.f32.mrb[0].mxu0
      %v2999 = vadd.f32 0.0, %v2998
      %v3000 = vpop.f32.mrb[0].mxu0
      %v3001 = vpop.f32.mrb[0].mxu0
      %v3002 = vadd.f32 0.0, %v3001
      %v3003 = vpop.f32.mrb[0].mxu0
      %3004 = vmatprep.mubr.bf16.mxu0 0
      %3005 = vmatmul.mubr.bf16.gmra.mrb[0].mxu0 %v2961
      %v3006 = vpop.f32.mrb[0].mxu0
      %v3007 = vadd.f32 0.0, %v3006
      %v3008 = vpop.f32.mrb[0].mxu0
      %v3009 = vpop.f32.mrb[0].mxu0
      %v3010 = vadd.f32 0.0, %v3009
      %v3011 = vpop.f32.mrb[0].mxu0
      %3012 = vmatprep.mubr.bf16.mxu0 0
      %3013 = vmatmul.mubr.bf16.gmra.mrb[0].mxu0 %v2962
      %v3014 = vpop.f32.mrb[0].mxu0
      %v3015 = vadd.f32 0.0, %v3014
      %v3016 = vpop.f32.mrb[0].mxu0
      %v3017 = vpop.f32.mrb[0].mxu0
      %v3018 = vadd.f32 0.0, %v3017
      %v3019 = vpop.f32.mrb[0].mxu0
      %3020 = vmatprep.mubr.bf16.mxu0 0
      %3021 = vmatmul.mubr.bf16.gmra.mrb[0].mxu0 %v2963
      %v3022 = vpop.f32.mrb[0].mxu0
      %v3023 = vadd.f32 0.0, %v3022
      %v3024 = vpop.f32.mrb[0].mxu0
      %v3025 = vpop.f32.mrb[0].mxu0
      %v3026 = vadd.f32 0.0, %v3025
      %v3027 = vpop.f32.mrb[0].mxu0
      %3028 = vdwg.mxu0
      %v3029 = vpack.c.bf16 %v3002, %v2999
      %v3030 = vpack.c.bf16 %v3010, %v3007
      %v3031 = vpack.c.bf16 %v3018, %v3015
      %v3032 = vpack.c.bf16 %v3026, %v3023
      %3037 = vrot.lane.b32.xlu0 %v3029, 32
      %v3038 = vpop.permute.xlu0 %3037
      %3039 = vrot.lane.b32.xlu0 %v3030, 32
      %v3040 = vpop.permute.xlu0 %3039
      %3041 = vrot.lane.b32.xlu0 %v3031, 32
      %v3042 = vpop.permute.xlu0 %3041
      %3043 = vrot.lane.b32.xlu0 %v3032, 32
      %v3044 = vpop.permute.xlu0 %3043
      %3049 = vst.msk [vmem:[#allocation2 + $0x8] sm:$0xff] %vm925, %v3038
      %3050 = vst.msk [vmem:[#allocation2 + $0x18] sm:$0xff] %vm925, %v3040
      %3051 = vst.msk [vmem:[#allocation2 + $0x28] sm:$0xff] %vm925, %v3042
      %3052 = vst.msk [vmem:[#allocation2 + $0x38] sm:$0xff] %vm925, %v3044
      %3053 = vset.pattern.permute.xlu0 21
      %3054 = vperm.xlu0 %3053, %v218
      %v3055 = vpop.permute.xlu0 %3054
      %3056 = vset.pattern.permute.xlu0 21
      %3057 = vperm.xlu0 %3056, %v219
      %v3058 = vpop.permute.xlu0 %3057
      %3059 = vset.pattern.permute.xlu0 21
      %3060 = vperm.xlu0 %3059, %v220
      %v3061 = vpop.permute.xlu0 %3060
      %3062 = vset.pattern.permute.xlu0 21
      %3063 = vperm.xlu0 %3062, %v221
      %v3064 = vpop.permute.xlu0 %3063
      %3065 = vset.pattern.permute.xlu0 21
      %3066 = vperm.xlu0 %3065, %v222
      %v3067 = vpop.permute.xlu0 %3066
      %3068 = vset.pattern.permute.xlu0 21
      %3069 = vperm.xlu0 %3068, %v223
      %v3070 = vpop.permute.xlu0 %3069
      %3071 = vset.pattern.permute.xlu0 21
      %3072 = vperm.xlu0 %3071, %v224
      %v3073 = vpop.permute.xlu0 %3072
      %3074 = vset.pattern.permute.xlu0 21
      %3075 = vperm.xlu0 %3074, %v225
      %v3076 = vpop.permute.xlu0 %3075
      %vm3077 = vcmp.eq.s32.totalorder %v3055, %v227
      %vm3078 = vcmp.eq.s32.totalorder %v3058, %v227
      %vm3079 = vcmp.eq.s32.totalorder %v3061, %v227
      %vm3080 = vcmp.eq.s32.totalorder %v3064, %v227
      %vm3081 = vcmp.eq.s32.totalorder %v3067, %v227
      %vm3082 = vcmp.eq.s32.totalorder %v3070, %v227
      %vm3083 = vcmp.eq.s32.totalorder %v3073, %v227
      %vm3084 = vcmp.eq.s32.totalorder %v3076, %v227
      %v3085 = vsel %vm3077, 1.0, 0.0
      %v3086 = vsel %vm3078, 1.0, 0.0
      %v3087 = vsel %vm3079, 1.0, 0.0
      %v3088 = vsel %vm3080, 1.0, 0.0
      %v3089 = vsel %vm3081, 1.0, 0.0
      %v3090 = vsel %vm3082, 1.0, 0.0
      %v3091 = vsel %vm3083, 1.0, 0.0
      %v3092 = vsel %vm3084, 1.0, 0.0
      %v3093 = vpack.c.bf16 %v3086, %v3085
      %v3094 = vpack.c.bf16 %v3088, %v3087
      %v3095 = vpack.c.bf16 %v3090, %v3089
      %v3096 = vpack.c.bf16 %v3092, %v3091
      %3097 = vmatprep.subr.bf16.mxu0 0
      %3098 = vmatpush1.bf16.msra.mxu0 %v304
      %3099 = vmatprep.subr.bf16.mxu0 0
      %3100 = vmatpush1.bf16.msra.mxu0 %v305
      %3101 = vmatprep.subr.bf16.mxu0 0
      %3102 = vmatpush1.bf16.msra.mxu0 %v306
      %3103 = vmatprep.subr.bf16.mxu0 0
      %3104 = vmatpush1.bf16.msra.mxu0 %v307
      %3105 = vmatprep.subr.bf16.mxu0 0
      %3106 = vmatpush1.bf16.msra.mxu0 %v308
      %3107 = vmatprep.subr.bf16.mxu0 0
      %3108 = vmatpush1.bf16.msra.mxu0 %v309
      %3109 = vmatprep.subr.bf16.mxu0 0
      %3110 = vmatpush1.bf16.msra.mxu0 %v310
      %3111 = vmatprep.subr.bf16.mxu0 0
      %3112 = vmatpush1.bf16.msra.mxu0 %v311
      %3113 = vmatprep.subr.bf16.mxu0 0
      %3114 = vmatpush1.bf16.msra.mxu0 0
      %3115 = vmatprep.subr.bf16.mxu0 0
      %3116 = vmatpush1.bf16.msra.mxu0 0
      %3117 = vmatprep.subr.bf16.mxu0 0
      %3118 = vmatpush1.bf16.msra.mxu0 0
      %3119 = vmatprep.subr.bf16.mxu0 0
      %3120 = vmatpush1.bf16.msra.mxu0 0
      %3121 = vmatprep.subr.bf16.mxu0 0
      %3122 = vmatpush1.bf16.msra.mxu0 0
      %3123 = vmatprep.subr.bf16.mxu0 0
      %3124 = vmatpush1.bf16.msra.mxu0 0
      %3125 = vmatprep.subr.bf16.mxu0 0
      %3126 = vmatpush1.bf16.msra.mxu0 0
      %3127 = vmatprep.subr.bf16.mxu0 0
      %3128 = vmatpush1.bf16.msra.mxu0 0
      %3129 = vmatprep.mubr.bf16.mxu0 0
      %3130 = vmatmul.mubr.bf16.gmra.mrb[0].mxu0 %v3093
      %v3131 = vpop.f32.mrb[0].mxu0
      %v3132 = vadd.f32 0.0, %v3131
      %v3133 = vpop.f32.mrb[0].mxu0
      %v3134 = vpop.f32.mrb[0].mxu0
      %v3135 = vadd.f32 0.0, %v3134
      %v3136 = vpop.f32.mrb[0].mxu0
      %3137 = vmatprep.mubr.bf16.mxu0 0
      %3138 = vmatmul.mubr.bf16.gmra.mrb[0].mxu0 %v3094
      %v3139 = vpop.f32.mrb[0].mxu0
      %v3140 = vadd.f32 0.0, %v3139
      %v3141 = vpop.f32.mrb[0].mxu0
      %v3142 = vpop.f32.mrb[0].mxu0
      %v3143 = vadd.f32 0.0, %v3142
      %v3144 = vpop.f32.mrb[0].mxu0
      %3145 = vmatprep.mubr.bf16.mxu0 0
      %3146 = vmatmul.mubr.bf16.gmra.mrb[0].mxu0 %v3095
      %v3147 = vpop.f32.mrb[0].mxu0
      %v3148 = vadd.f32 0.0, %v3147
      %v3149 = vpop.f32.mrb[0].mxu0
      %v3150 = vpop.f32.mrb[0].mxu0
      %v3151 = vadd.f32 0.0, %v3150
      %v3152 = vpop.f32.mrb[0].mxu0
      %3153 = vmatprep.mubr.bf16.mxu0 0
      %3154 = vmatmul.mubr.bf16.gmra.mrb[0].mxu0 %v3096
      %v3155 = vpop.f32.mrb[0].mxu0
      %v3156 = vadd.f32 0.0, %v3155
      %v3157 = vpop.f32.mrb[0].mxu0
      %v3158 = vpop.f32.mrb[0].mxu0
      %v3159 = vadd.f32 0.0, %v3158
      %v3160 = vpop.f32.mrb[0].mxu0
      %3161 = vdwg.mxu0
      %v3162 = vpack.c.bf16 %v3135, %v3132
      %v3163 = vpack.c.bf16 %v3143, %v3140
      %v3164 = vpack.c.bf16 %v3151, %v3148
      %v3165 = vpack.c.bf16 %v3159, %v3156
      %3170 = vrot.lane.b32.xlu0 %v3162, 40
      %v3171 = vpop.permute.xlu0 %3170
      %3172 = vrot.lane.b32.xlu0 %v3163, 40
      %v3173 = vpop.permute.xlu0 %3172
      %3174 = vrot.lane.b32.xlu0 %v3164, 40
      %v3175 = vpop.permute.xlu0 %3174
      %3176 = vrot.lane.b32.xlu0 %v3165, 40
      %v3177 = vpop.permute.xlu0 %3176
      %3182 = vst.msk [vmem:[#allocation2 + $0x8] sm:$0xff] %vm1059, %v3171
      %3183 = vst.msk [vmem:[#allocation2 + $0x18] sm:$0xff] %vm1059, %v3173
      %3184 = vst.msk [vmem:[#allocation2 + $0x28] sm:$0xff] %vm1059, %v3175
      %3185 = vst.msk [vmem:[#allocation2 + $0x38] sm:$0xff] %vm1059, %v3177
      %3186 = vset.pattern.permute.xlu0 22
      %3187 = vperm.xlu0 %3186, %v218
      %v3188 = vpop.permute.xlu0 %3187
      %3189 = vset.pattern.permute.xlu0 22
      %3190 = vperm.xlu0 %3189, %v219
      %v3191 = vpop.permute.xlu0 %3190
      %3192 = vset.pattern.permute.xlu0 22
      %3193 = vperm.xlu0 %3192, %v220
      %v3194 = vpop.permute.xlu0 %3193
      %3195 = vset.pattern.permute.xlu0 22
      %3196 = vperm.xlu0 %3195, %v221
      %v3197 = vpop.permute.xlu0 %3196
      %3198 = vset.pattern.permute.xlu0 22
      %3199 = vperm.xlu0 %3198, %v222
      %v3200 = vpop.permute.xlu0 %3199
      %3201 = vset.pattern.permute.xlu0 22
      %3202 = vperm.xlu0 %3201, %v223
      %v3203 = vpop.permute.xlu0 %3202
      %3204 = vset.pattern.permute.xlu0 22
      %3205 = vperm.xlu0 %3204, %v224
      %v3206 = vpop.permute.xlu0 %3205
      %3207 = vset.pattern.permute.xlu0 22
      %3208 = vperm.xlu0 %3207, %v225
      %v3209 = vpop.permute.xlu0 %3208
      %vm3210 = vcmp.eq.s32.totalorder %v3188, %v227
      %vm3211 = vcmp.eq.s32.totalorder %v3191, %v227
      %vm3212 = vcmp.eq.s32.totalorder %v3194, %v227
      %vm3213 = vcmp.eq.s32.totalorder %v3197, %v227
      %vm3214 = vcmp.eq.s32.totalorder %v3200, %v227
      %vm3215 = vcmp.eq.s32.totalorder %v3203, %v227
      %vm3216 = vcmp.eq.s32.totalorder %v3206, %v227
      %vm3217 = vcmp.eq.s32.totalorder %v3209, %v227
      %v3218 = vsel %vm3210, 1.0, 0.0
      %v3219 = vsel %vm3211, 1.0, 0.0
      %v3220 = vsel %vm3212, 1.0, 0.0
      %v3221 = vsel %vm3213, 1.0, 0.0
      %v3222 = vsel %vm3214, 1.0, 0.0
      %v3223 = vsel %vm3215, 1.0, 0.0
      %v3224 = vsel %vm3216, 1.0, 0.0
      %v3225 = vsel %vm3217, 1.0, 0.0
      %v3226 = vpack.c.bf16 %v3219, %v3218
      %v3227 = vpack.c.bf16 %v3221, %v3220
      %v3228 = vpack.c.bf16 %v3223, %v3222
      %v3229 = vpack.c.bf16 %v3225, %v3224
      %3230 = vmatprep.subr.bf16.mxu0 0
      %3231 = vmatpush1.bf16.msra.mxu0 %v304
      %3232 = vmatprep.subr.bf16.mxu0 0
      %3233 = vmatpush1.bf16.msra.mxu0 %v305
      %3234 = vmatprep.subr.bf16.mxu0 0
      %3235 = vmatpush1.bf16.msra.mxu0 %v306
      %3236 = vmatprep.subr.bf16.mxu0 0
      %3237 = vmatpush1.bf16.msra.mxu0 %v307
      %3238 = vmatprep.subr.bf16.mxu0 0
      %3239 = vmatpush1.bf16.msra.mxu0 %v308
      %3240 = vmatprep.subr.bf16.mxu0 0
      %3241 = vmatpush1.bf16.msra.mxu0 %v309
      %3242 = vmatprep.subr.bf16.mxu0 0
      %3243 = vmatpush1.bf16.msra.mxu0 %v310
      %3244 = vmatprep.subr.bf16.mxu0 0
      %3245 = vmatpush1.bf16.msra.mxu0 %v311
      %3246 = vmatprep.subr.bf16.mxu0 0
      %3247 = vmatpush1.bf16.msra.mxu0 0
      %3248 = vmatprep.subr.bf16.mxu0 0
      %3249 = vmatpush1.bf16.msra.mxu0 0
      %3250 = vmatprep.subr.bf16.mxu0 0
      %3251 = vmatpush1.bf16.msra.mxu0 0
      %3252 = vmatprep.subr.bf16.mxu0 0
      %3253 = vmatpush1.bf16.msra.mxu0 0
      %3254 = vmatprep.subr.bf16.mxu0 0
      %3255 = vmatpush1.bf16.msra.mxu0 0
      %3256 = vmatprep.subr.bf16.mxu0 0
      %3257 = vmatpush1.bf16.msra.mxu0 0
      %3258 = vmatprep.subr.bf16.mxu0 0
      %3259 = vmatpush1.bf16.msra.mxu0 0
      %3260 = vmatprep.subr.bf16.mxu0 0
      %3261 = vmatpush1.bf16.msra.mxu0 0
      %3262 = vmatprep.mubr.bf16.mxu0 0
      %3263 = vmatmul.mubr.bf16.gmra.mrb[0].mxu0 %v3226
      %v3264 = vpop.f32.mrb[0].mxu0
      %v3265 = vadd.f32 0.0, %v3264
      %v3266 = vpop.f32.mrb[0].mxu0
      %v3267 = vpop.f32.mrb[0].mxu0
      %v3268 = vadd.f32 0.0, %v3267
      %v3269 = vpop.f32.mrb[0].mxu0
      %3270 = vmatprep.mubr.bf16.mxu0 0
      %3271 = vmatmul.mubr.bf16.gmra.mrb[0].mxu0 %v3227
      %v3272 = vpop.f32.mrb[0].mxu0
      %v3273 = vadd.f32 0.0, %v3272
      %v3274 = vpop.f32.mrb[0].mxu0
      %v3275 = vpop.f32.mrb[0].mxu0
      %v3276 = vadd.f32 0.0, %v3275
      %v3277 = vpop.f32.mrb[0].mxu0
      %3278 = vmatprep.mubr.bf16.mxu0 0
      %3279 = vmatmul.mubr.bf16.gmra.mrb[0].mxu0 %v3228
      %v3280 = vpop.f32.mrb[0].mxu0
      %v3281 = vadd.f32 0.0, %v3280
      %v3282 = vpop.f32.mrb[0].mxu0
      %v3283 = vpop.f32.mrb[0].mxu0
      %v3284 = vadd.f32 0.0, %v3283
      %v3285 = vpop.f32.mrb[0].mxu0
      %3286 = vmatprep.mubr.bf16.mxu0 0
      %3287 = vmatmul.mubr.bf16.gmra.mrb[0].mxu0 %v3229
      %v3288 = vpop.f32.mrb[0].mxu0
      %v3289 = vadd.f32 0.0, %v3288
      %v3290 = vpop.f32.mrb[0].mxu0
      %v3291 = vpop.f32.mrb[0].mxu0
      %v3292 = vadd.f32 0.0, %v3291
      %v3293 = vpop.f32.mrb[0].mxu0
      %3294 = vdwg.mxu0
      %v3295 = vpack.c.bf16 %v3268, %v3265
      %v3296 = vpack.c.bf16 %v3276, %v3273
      %v3297 = vpack.c.bf16 %v3284, %v3281
      %v3298 = vpack.c.bf16 %v3292, %v3289
      %3303 = vrot.lane.b32.xlu0 %v3295, 48
      %v3304 = vpop.permute.xlu0 %3303
      %3305 = vrot.lane.b32.xlu0 %v3296, 48
      %v3306 = vpop.permute.xlu0 %3305
      %3307 = vrot.lane.b32.xlu0 %v3297, 48
      %v3308 = vpop.permute.xlu0 %3307
      %3309 = vrot.lane.b32.xlu0 %v3298, 48
      %v3310 = vpop.permute.xlu0 %3309
      %3315 = vst.msk [vmem:[#allocation2 + $0x8] sm:$0xff] %vm1193, %v3304
      %3316 = vst.msk [vmem:[#allocation2 + $0x18] sm:$0xff] %vm1193, %v3306
      %3317 = vst.msk [vmem:[#allocation2 + $0x28] sm:$0xff] %vm1193, %v3308
      %3318 = vst.msk [vmem:[#allocation2 + $0x38] sm:$0xff] %vm1193, %v3310
      %3319 = vset.pattern.permute.xlu0 23
      %3320 = vperm.xlu0 %3319, %v218
      %v3321 = vpop.permute.xlu0 %3320
      %3322 = vset.pattern.permute.xlu0 23
      %3323 = vperm.xlu0 %3322, %v219
      %v3324 = vpop.permute.xlu0 %3323
      %3325 = vset.pattern.permute.xlu0 23
      %3326 = vperm.xlu0 %3325, %v220
      %v3327 = vpop.permute.xlu0 %3326
      %3328 = vset.pattern.permute.xlu0 23
      %3329 = vperm.xlu0 %3328, %v221
      %v3330 = vpop.permute.xlu0 %3329
      %3331 = vset.pattern.permute.xlu0 23
      %3332 = vperm.xlu0 %3331, %v222
      %v3333 = vpop.permute.xlu0 %3332
      %3334 = vset.pattern.permute.xlu0 23
      %3335 = vperm.xlu0 %3334, %v223
      %v3336 = vpop.permute.xlu0 %3335
      %3337 = vset.pattern.permute.xlu0 23
      %3338 = vperm.xlu0 %3337, %v224
      %v3339 = vpop.permute.xlu0 %3338
      %3340 = vset.pattern.permute.xlu0 23
      %3341 = vperm.xlu0 %3340, %v225
      %v3342 = vpop.permute.xlu0 %3341
      %vm3343 = vcmp.eq.s32.totalorder %v3321, %v227
      %vm3344 = vcmp.eq.s32.totalorder %v3324, %v227
      %vm3345 = vcmp.eq.s32.totalorder %v3327, %v227
      %vm3346 = vcmp.eq.s32.totalorder %v3330, %v227
      %vm3347 = vcmp.eq.s32.totalorder %v3333, %v227
      %vm3348 = vcmp.eq.s32.totalorder %v3336, %v227
      %vm3349 = vcmp.eq.s32.totalorder %v3339, %v227
      %vm3350 = vcmp.eq.s32.totalorder %v3342, %v227
      %v3351 = vsel %vm3343, 1.0, 0.0
      %v3352 = vsel %vm3344, 1.0, 0.0
      %v3353 = vsel %vm3345, 1.0, 0.0
      %v3354 = vsel %vm3346, 1.0, 0.0
      %v3355 = vsel %vm3347, 1.0, 0.0
      %v3356 = vsel %vm3348, 1.0, 0.0
      %v3357 = vsel %vm3349, 1.0, 0.0
      %v3358 = vsel %vm3350, 1.0, 0.0
      %v3359 = vpack.c.bf16 %v3352, %v3351
      %v3360 = vpack.c.bf16 %v3354, %v3353
      %v3361 = vpack.c.bf16 %v3356, %v3355
      %v3362 = vpack.c.bf16 %v3358, %v3357
      %3363 = vmatprep.subr.bf16.mxu0 0
      %3364 = vmatpush1.bf16.msra.mxu0 %v304
      %3365 = vmatprep.subr.bf16.mxu0 0
      %3366 = vmatpush1.bf16.msra.mxu0 %v305
      %3367 = vmatprep.subr.bf16.mxu0 0
      %3368 = vmatpush1.bf16.msra.mxu0 %v306
      %3369 = vmatprep.subr.bf16.mxu0 0
      %3370 = vmatpush1.bf16.msra.mxu0 %v307
      %3371 = vmatprep.subr.bf16.mxu0 0
      %3372 = vmatpush1.bf16.msra.mxu0 %v308
      %3373 = vmatprep.subr.bf16.mxu0 0
      %3374 = vmatpush1.bf16.msra.mxu0 %v309
      %3375 = vmatprep.subr.bf16.mxu0 0
      %3376 = vmatpush1.bf16.msra.mxu0 %v310
      %3377 = vmatprep.subr.bf16.mxu0 0
      %3378 = vmatpush1.bf16.msra.mxu0 %v311
      %3379 = vmatprep.subr.bf16.mxu0 0
      %3380 = vmatpush1.bf16.msra.mxu0 0
      %3381 = vmatprep.subr.bf16.mxu0 0
      %3382 = vmatpush1.bf16.msra.mxu0 0
      %3383 = vmatprep.subr.bf16.mxu0 0
      %3384 = vmatpush1.bf16.msra.mxu0 0
      %3385 = vmatprep.subr.bf16.mxu0 0
      %3386 = vmatpush1.bf16.msra.mxu0 0
      %3387 = vmatprep.subr.bf16.mxu0 0
      %3388 = vmatpush1.bf16.msra.mxu0 0
      %3389 = vmatprep.subr.bf16.mxu0 0
      %3390 = vmatpush1.bf16.msra.mxu0 0
      %3391 = vmatprep.subr.bf16.mxu0 0
      %3392 = vmatpush1.bf16.msra.mxu0 0
      %3393 = vmatprep.subr.bf16.mxu0 0
      %3394 = vmatpush1.bf16.msra.mxu0 0
      %3395 = vmatprep.mubr.bf16.mxu0 0
      %3396 = vmatmul.mubr.bf16.gmra.mrb[0].mxu0 %v3359
      %v3397 = vpop.f32.mrb[0].mxu0
      %v3398 = vadd.f32 0.0, %v3397
      %v3399 = vpop.f32.mrb[0].mxu0
      %v3400 = vpop.f32.mrb[0].mxu0
      %v3401 = vadd.f32 0.0, %v3400
      %v3402 = vpop.f32.mrb[0].mxu0
      %3403 = vmatprep.mubr.bf16.mxu0 0
      %3404 = vmatmul.mubr.bf16.gmra.mrb[0].mxu0 %v3360
      %v3405 = vpop.f32.mrb[0].mxu0
      %v3406 = vadd.f32 0.0, %v3405
      %v3407 = vpop.f32.mrb[0].mxu0
      %v3408 = vpop.f32.mrb[0].mxu0
      %v3409 = vadd.f32 0.0, %v3408
      %v3410 = vpop.f32.mrb[0].mxu0
      %3411 = vmatprep.mubr.bf16.mxu0 0
      %3412 = vmatmul.mubr.bf16.gmra.mrb[0].mxu0 %v3361
      %v3413 = vpop.f32.mrb[0].mxu0
      %v3414 = vadd.f32 0.0, %v3413
      %v3415 = vpop.f32.mrb[0].mxu0
      %v3416 = vpop.f32.mrb[0].mxu0
      %v3417 = vadd.f32 0.0, %v3416
      %v3418 = vpop.f32.mrb[0].mxu0
      %3419 = vmatprep.mubr.bf16.mxu0 0
      %3420 = vmatmul.mubr.bf16.gmra.mrb[0].mxu0 %v3362
      %v3421 = vpop.f32.mrb[0].mxu0
      %v3422 = vadd.f32 0.0, %v3421
      %v3423 = vpop.f32.mrb[0].mxu0
      %v3424 = vpop.f32.mrb[0].mxu0
      %v3425 = vadd.f32 0.0, %v3424
      %v3426 = vpop.f32.mrb[0].mxu0
      %3427 = vdwg.mxu0
      %v3428 = vpack.c.bf16 %v3401, %v3398
      %v3429 = vpack.c.bf16 %v3409, %v3406
      %v3430 = vpack.c.bf16 %v3417, %v3414
      %v3431 = vpack.c.bf16 %v3425, %v3422
      %3436 = vrot.lane.b32.xlu0 %v3428, 56
      %v3437 = vpop.permute.xlu0 %3436
      %3438 = vrot.lane.b32.xlu0 %v3429, 56
      %v3439 = vpop.permute.xlu0 %3438
      %3440 = vrot.lane.b32.xlu0 %v3430, 56
      %v3441 = vpop.permute.xlu0 %3440
      %3442 = vrot.lane.b32.xlu0 %v3431, 56
      %v3443 = vpop.permute.xlu0 %3442
      %3448 = vst.msk [vmem:[#allocation2 + $0x8] sm:$0xff] %vm1327, %v3437
      %3449 = vst.msk [vmem:[#allocation2 + $0x18] sm:$0xff] %vm1327, %v3439
      %3450 = vst.msk [vmem:[#allocation2 + $0x28] sm:$0xff] %vm1327, %v3441
      %3451 = vst.msk [vmem:[#allocation2 + $0x38] sm:$0xff] %vm1327, %v3443
      %3452 = vset.pattern.permute.xlu0 24
      %3453 = vperm.xlu0 %3452, %v218
      %v3454 = vpop.permute.xlu0 %3453
      %3455 = vset.pattern.permute.xlu0 24
      %3456 = vperm.xlu0 %3455, %v219
      %v3457 = vpop.permute.xlu0 %3456
      %3458 = vset.pattern.permute.xlu0 24
      %3459 = vperm.xlu0 %3458, %v220
      %v3460 = vpop.permute.xlu0 %3459
      %3461 = vset.pattern.permute.xlu0 24
      %3462 = vperm.xlu0 %3461, %v221
      %v3463 = vpop.permute.xlu0 %3462
      %3464 = vset.pattern.permute.xlu0 24
      %3465 = vperm.xlu0 %3464, %v222
      %v3466 = vpop.permute.xlu0 %3465
      %3467 = vset.pattern.permute.xlu0 24
      %3468 = vperm.xlu0 %3467, %v223
      %v3469 = vpop.permute.xlu0 %3468
      %3470 = vset.pattern.permute.xlu0 24
      %3471 = vperm.xlu0 %3470, %v224
      %v3472 = vpop.permute.xlu0 %3471
      %3473 = vset.pattern.permute.xlu0 24
      %3474 = vperm.xlu0 %3473, %v225
      %v3475 = vpop.permute.xlu0 %3474
      %vm3476 = vcmp.eq.s32.totalorder %v3454, %v227
      %vm3477 = vcmp.eq.s32.totalorder %v3457, %v227
      %vm3478 = vcmp.eq.s32.totalorder %v3460, %v227
      %vm3479 = vcmp.eq.s32.totalorder %v3463, %v227
      %vm3480 = vcmp.eq.s32.totalorder %v3466, %v227
      %vm3481 = vcmp.eq.s32.totalorder %v3469, %v227
      %vm3482 = vcmp.eq.s32.totalorder %v3472, %v227
      %vm3483 = vcmp.eq.s32.totalorder %v3475, %v227
      %v3484 = vsel %vm3476, 1.0, 0.0
      %v3485 = vsel %vm3477, 1.0, 0.0
      %v3486 = vsel %vm3478, 1.0, 0.0
      %v3487 = vsel %vm3479, 1.0, 0.0
      %v3488 = vsel %vm3480, 1.0, 0.0
      %v3489 = vsel %vm3481, 1.0, 0.0
      %v3490 = vsel %vm3482, 1.0, 0.0
      %v3491 = vsel %vm3483, 1.0, 0.0
      %v3492 = vpack.c.bf16 %v3485, %v3484
      %v3493 = vpack.c.bf16 %v3487, %v3486
      %v3494 = vpack.c.bf16 %v3489, %v3488
      %v3495 = vpack.c.bf16 %v3491, %v3490
      %3496 = vmatprep.subr.bf16.mxu0 0
      %3497 = vmatpush1.bf16.msra.mxu0 %v304
      %3498 = vmatprep.subr.bf16.mxu0 0
      %3499 = vmatpush1.bf16.msra.mxu0 %v305
      %3500 = vmatprep.subr.bf16.mxu0 0
      %3501 = vmatpush1.bf16.msra.mxu0 %v306
      %3502 = vmatprep.subr.bf16.mxu0 0
      %3503 = vmatpush1.bf16.msra.mxu0 %v307
      %3504 = vmatprep.subr.bf16.mxu0 0
      %3505 = vmatpush1.bf16.msra.mxu0 %v308
      %3506 = vmatprep.subr.bf16.mxu0 0
      %3507 = vmatpush1.bf16.msra.mxu0 %v309
      %3508 = vmatprep.subr.bf16.mxu0 0
      %3509 = vmatpush1.bf16.msra.mxu0 %v310
      %3510 = vmatprep.subr.bf16.mxu0 0
      %3511 = vmatpush1.bf16.msra.mxu0 %v311
      %3512 = vmatprep.subr.bf16.mxu0 0
      %3513 = vmatpush1.bf16.msra.mxu0 0
      %3514 = vmatprep.subr.bf16.mxu0 0
      %3515 = vmatpush1.bf16.msra.mxu0 0
      %3516 = vmatprep.subr.bf16.mxu0 0
      %3517 = vmatpush1.bf16.msra.mxu0 0
      %3518 = vmatprep.subr.bf16.mxu0 0
      %3519 = vmatpush1.bf16.msra.mxu0 0
      %3520 = vmatprep.subr.bf16.mxu0 0
      %3521 = vmatpush1.bf16.msra.mxu0 0
      %3522 = vmatprep.subr.bf16.mxu0 0
      %3523 = vmatpush1.bf16.msra.mxu0 0
      %3524 = vmatprep.subr.bf16.mxu0 0
      %3525 = vmatpush1.bf16.msra.mxu0 0
      %3526 = vmatprep.subr.bf16.mxu0 0
      %3527 = vmatpush1.bf16.msra.mxu0 0
      %3528 = vmatprep.mubr.bf16.mxu0 0
      %3529 = vmatmul.mubr.bf16.gmra.mrb[0].mxu0 %v3492
      %v3530 = vpop.f32.mrb[0].mxu0
      %v3531 = vadd.f32 0.0, %v3530
      %v3532 = vpop.f32.mrb[0].mxu0
      %v3533 = vpop.f32.mrb[0].mxu0
      %v3534 = vadd.f32 0.0, %v3533
      %v3535 = vpop.f32.mrb[0].mxu0
      %3536 = vmatprep.mubr.bf16.mxu0 0
      %3537 = vmatmul.mubr.bf16.gmra.mrb[0].mxu0 %v3493
      %v3538 = vpop.f32.mrb[0].mxu0
      %v3539 = vadd.f32 0.0, %v3538
      %v3540 = vpop.f32.mrb[0].mxu0
      %v3541 = vpop.f32.mrb[0].mxu0
      %v3542 = vadd.f32 0.0, %v3541
      %v3543 = vpop.f32.mrb[0].mxu0
      %3544 = vmatprep.mubr.bf16.mxu0 0
      %3545 = vmatmul.mubr.bf16.gmra.mrb[0].mxu0 %v3494
      %v3546 = vpop.f32.mrb[0].mxu0
      %v3547 = vadd.f32 0.0, %v3546
      %v3548 = vpop.f32.mrb[0].mxu0
      %v3549 = vpop.f32.mrb[0].mxu0
      %v3550 = vadd.f32 0.0, %v3549
      %v3551 = vpop.f32.mrb[0].mxu0
      %3552 = vmatprep.mubr.bf16.mxu0 0
      %3553 = vmatmul.mubr.bf16.gmra.mrb[0].mxu0 %v3495
      %v3554 = vpop.f32.mrb[0].mxu0
      %v3555 = vadd.f32 0.0, %v3554
      %v3556 = vpop.f32.mrb[0].mxu0
      %v3557 = vpop.f32.mrb[0].mxu0
      %v3558 = vadd.f32 0.0, %v3557
      %v3559 = vpop.f32.mrb[0].mxu0
      %3560 = vdwg.mxu0
      %v3561 = vpack.c.bf16 %v3534, %v3531
      %v3562 = vpack.c.bf16 %v3542, %v3539
      %v3563 = vpack.c.bf16 %v3550, %v3547
      %v3564 = vpack.c.bf16 %v3558, %v3555
      %3569 = vrot.lane.b32.xlu0 %v3561, 64
      %v3570 = vpop.permute.xlu0 %3569
      %3571 = vrot.lane.b32.xlu0 %v3562, 64
      %v3572 = vpop.permute.xlu0 %3571
      %3573 = vrot.lane.b32.xlu0 %v3563, 64
      %v3574 = vpop.permute.xlu0 %3573
      %3575 = vrot.lane.b32.xlu0 %v3564, 64
      %v3576 = vpop.permute.xlu0 %3575
      %3581 = vst.msk [vmem:[#allocation2 + $0x8] sm:$0xff] %vm1461, %v3570
      %3582 = vst.msk [vmem:[#allocation2 + $0x18] sm:$0xff] %vm1461, %v3572
      %3583 = vst.msk [vmem:[#allocation2 + $0x28] sm:$0xff] %vm1461, %v3574
      %3584 = vst.msk [vmem:[#allocation2 + $0x38] sm:$0xff] %vm1461, %v3576
      %3585 = vset.pattern.permute.xlu0 25
      %3586 = vperm.xlu0 %3585, %v218
      %v3587 = vpop.permute.xlu0 %3586
      %3588 = vset.pattern.permute.xlu0 25
      %3589 = vperm.xlu0 %3588, %v219
      %v3590 = vpop.permute.xlu0 %3589
      %3591 = vset.pattern.permute.xlu0 25
      %3592 = vperm.xlu0 %3591, %v220
      %v3593 = vpop.permute.xlu0 %3592
      %3594 = vset.pattern.permute.xlu0 25
      %3595 = vperm.xlu0 %3594, %v221
      %v3596 = vpop.permute.xlu0 %3595
      %3597 = vset.pattern.permute.xlu0 25
      %3598 = vperm.xlu0 %3597, %v222
      %v3599 = vpop.permute.xlu0 %3598
      %3600 = vset.pattern.permute.xlu0 25
      %3601 = vperm.xlu0 %3600, %v223
      %v3602 = vpop.permute.xlu0 %3601
      %3603 = vset.pattern.permute.xlu0 25
      %3604 = vperm.xlu0 %3603, %v224
      %v3605 = vpop.permute.xlu0 %3604
      %3606 = vset.pattern.permute.xlu0 25
      %3607 = vperm.xlu0 %3606, %v225
      %v3608 = vpop.permute.xlu0 %3607
      %vm3609 = vcmp.eq.s32.totalorder %v3587, %v227
      %vm3610 = vcmp.eq.s32.totalorder %v3590, %v227
      %vm3611 = vcmp.eq.s32.totalorder %v3593, %v227
      %vm3612 = vcmp.eq.s32.totalorder %v3596, %v227
      %vm3613 = vcmp.eq.s32.totalorder %v3599, %v227
      %vm3614 = vcmp.eq.s32.totalorder %v3602, %v227
      %vm3615 = vcmp.eq.s32.totalorder %v3605, %v227
      %vm3616 = vcmp.eq.s32.totalorder %v3608, %v227
      %v3617 = vsel %vm3609, 1.0, 0.0
      %v3618 = vsel %vm3610, 1.0, 0.0
      %v3619 = vsel %vm3611, 1.0, 0.0
      %v3620 = vsel %vm3612, 1.0, 0.0
      %v3621 = vsel %vm3613, 1.0, 0.0
      %v3622 = vsel %vm3614, 1.0, 0.0
      %v3623 = vsel %vm3615, 1.0, 0.0
      %v3624 = vsel %vm3616, 1.0, 0.0
      %v3625 = vpack.c.bf16 %v3618, %v3617
      %v3626 = vpack.c.bf16 %v3620, %v3619
      %v3627 = vpack.c.bf16 %v3622, %v3621
      %v3628 = vpack.c.bf16 %v3624, %v3623
      %3629 = vmatprep.subr.bf16.mxu0 0
      %3630 = vmatpush1.bf16.msra.mxu0 %v304
      %3631 = vmatprep.subr.bf16.mxu0 0
      %3632 = vmatpush1.bf16.msra.mxu0 %v305
      %3633 = vmatprep.subr.bf16.mxu0 0
      %3634 = vmatpush1.bf16.msra.mxu0 %v306
      %3635 = vmatprep.subr.bf16.mxu0 0
      %3636 = vmatpush1.bf16.msra.mxu0 %v307
      %3637 = vmatprep.subr.bf16.mxu0 0
      %3638 = vmatpush1.bf16.msra.mxu0 %v308
      %3639 = vmatprep.subr.bf16.mxu0 0
      %3640 = vmatpush1.bf16.msra.mxu0 %v309
      %3641 = vmatprep.subr.bf16.mxu0 0
      %3642 = vmatpush1.bf16.msra.mxu0 %v310
      %3643 = vmatprep.subr.bf16.mxu0 0
      %3644 = vmatpush1.bf16.msra.mxu0 %v311
      %3645 = vmatprep.subr.bf16.mxu0 0
      %3646 = vmatpush1.bf16.msra.mxu0 0
      %3647 = vmatprep.subr.bf16.mxu0 0
      %3648 = vmatpush1.bf16.msra.mxu0 0
      %3649 = vmatprep.subr.bf16.mxu0 0
      %3650 = vmatpush1.bf16.msra.mxu0 0
      %3651 = vmatprep.subr.bf16.mxu0 0
      %3652 = vmatpush1.bf16.msra.mxu0 0
      %3653 = vmatprep.subr.bf16.mxu0 0
      %3654 = vmatpush1.bf16.msra.mxu0 0
      %3655 = vmatprep.subr.bf16.mxu0 0
      %3656 = vmatpush1.bf16.msra.mxu0 0
      %3657 = vmatprep.subr.bf16.mxu0 0
      %3658 = vmatpush1.bf16.msra.mxu0 0
      %3659 = vmatprep.subr.bf16.mxu0 0
      %3660 = vmatpush1.bf16.msra.mxu0 0
      %3661 = vmatprep.mubr.bf16.mxu0 0
      %3662 = vmatmul.mubr.bf16.gmra.mrb[0].mxu0 %v3625
      %v3663 = vpop.f32.mrb[0].mxu0
      %v3664 = vadd.f32 0.0, %v3663
      %v3665 = vpop.f32.mrb[0].mxu0
      %v3666 = vpop.f32.mrb[0].mxu0
      %v3667 = vadd.f32 0.0, %v3666
      %v3668 = vpop.f32.mrb[0].mxu0
      %3669 = vmatprep.mubr.bf16.mxu0 0
      %3670 = vmatmul.mubr.bf16.gmra.mrb[0].mxu0 %v3626
      %v3671 = vpop.f32.mrb[0].mxu0
      %v3672 = vadd.f32 0.0, %v3671
      %v3673 = vpop.f32.mrb[0].mxu0
      %v3674 = vpop.f32.mrb[0].mxu0
      %v3675 = vadd.f32 0.0, %v3674
      %v3676 = vpop.f32.mrb[0].mxu0
      %3677 = vmatprep.mubr.bf16.mxu0 0
      %3678 = vmatmul.mubr.bf16.gmra.mrb[0].mxu0 %v3627
      %v3679 = vpop.f32.mrb[0].mxu0
      %v3680 = vadd.f32 0.0, %v3679
      %v3681 = vpop.f32.mrb[0].mxu0
      %v3682 = vpop.f32.mrb[0].mxu0
      %v3683 = vadd.f32 0.0, %v3682
      %v3684 = vpop.f32.mrb[0].mxu0
      %3685 = vmatprep.mubr.bf16.mxu0 0
      %3686 = vmatmul.mubr.bf16.gmra.mrb[0].mxu0 %v3628
      %v3687 = vpop.f32.mrb[0].mxu0
      %v3688 = vadd.f32 0.0, %v3687
      %v3689 = vpop.f32.mrb[0].mxu0
      %v3690 = vpop.f32.mrb[0].mxu0
      %v3691 = vadd.f32 0.0, %v3690
      %v3692 = vpop.f32.mrb[0].mxu0
      %3693 = vdwg.mxu0
      %v3694 = vpack.c.bf16 %v3667, %v3664
      %v3695 = vpack.c.bf16 %v3675, %v3672
      %v3696 = vpack.c.bf16 %v3683, %v3680
      %v3697 = vpack.c.bf16 %v3691, %v3688
      %3702 = vrot.lane.b32.xlu0 %v3694, 72
      %v3703 = vpop.permute.xlu0 %3702
      %3704 = vrot.lane.b32.xlu0 %v3695, 72
      %v3705 = vpop.permute.xlu0 %3704
      %3706 = vrot.lane.b32.xlu0 %v3696, 72
      %v3707 = vpop.permute.xlu0 %3706
      %3708 = vrot.lane.b32.xlu0 %v3697, 72
      %v3709 = vpop.permute.xlu0 %3708
      %3714 = vst.msk [vmem:[#allocation2 + $0x8] sm:$0xff] %vm1595, %v3703
      %3715 = vst.msk [vmem:[#allocation2 + $0x18] sm:$0xff] %vm1595, %v3705
      %3716 = vst.msk [vmem:[#allocation2 + $0x28] sm:$0xff] %vm1595, %v3707
      %3717 = vst.msk [vmem:[#allocation2 + $0x38] sm:$0xff] %vm1595, %v3709
      %3718 = vset.pattern.permute.xlu0 26
      %3719 = vperm.xlu0 %3718, %v218
      %v3720 = vpop.permute.xlu0 %3719
      %3721 = vset.pattern.permute.xlu0 26
      %3722 = vperm.xlu0 %3721, %v219
      %v3723 = vpop.permute.xlu0 %3722
      %3724 = vset.pattern.permute.xlu0 26
      %3725 = vperm.xlu0 %3724, %v220
      %v3726 = vpop.permute.xlu0 %3725
      %3727 = vset.pattern.permute.xlu0 26
      %3728 = vperm.xlu0 %3727, %v221
      %v3729 = vpop.permute.xlu0 %3728
      %3730 = vset.pattern.permute.xlu0 26
      %3731 = vperm.xlu0 %3730, %v222
      %v3732 = vpop.permute.xlu0 %3731
      %3733 = vset.pattern.permute.xlu0 26
      %3734 = vperm.xlu0 %3733, %v223
      %v3735 = vpop.permute.xlu0 %3734
      %3736 = vset.pattern.permute.xlu0 26
      %3737 = vperm.xlu0 %3736, %v224
      %v3738 = vpop.permute.xlu0 %3737
      %3739 = vset.pattern.permute.xlu0 26
      %3740 = vperm.xlu0 %3739, %v225
      %v3741 = vpop.permute.xlu0 %3740
      %vm3742 = vcmp.eq.s32.totalorder %v3720, %v227
      %vm3743 = vcmp.eq.s32.totalorder %v3723, %v227
      %vm3744 = vcmp.eq.s32.totalorder %v3726, %v227
      %vm3745 = vcmp.eq.s32.totalorder %v3729, %v227
      %vm3746 = vcmp.eq.s32.totalorder %v3732, %v227
      %vm3747 = vcmp.eq.s32.totalorder %v3735, %v227
      %vm3748 = vcmp.eq.s32.totalorder %v3738, %v227
      %vm3749 = vcmp.eq.s32.totalorder %v3741, %v227
      %v3750 = vsel %vm3742, 1.0, 0.0
      %v3751 = vsel %vm3743, 1.0, 0.0
      %v3752 = vsel %vm3744, 1.0, 0.0
      %v3753 = vsel %vm3745, 1.0, 0.0
      %v3754 = vsel %vm3746, 1.0, 0.0
      %v3755 = vsel %vm3747, 1.0, 0.0
      %v3756 = vsel %vm3748, 1.0, 0.0
      %v3757 = vsel %vm3749, 1.0, 0.0
      %v3758 = vpack.c.bf16 %v3751, %v3750
      %v3759 = vpack.c.bf16 %v3753, %v3752
      %v3760 = vpack.c.bf16 %v3755, %v3754
      %v3761 = vpack.c.bf16 %v3757, %v3756
      %3762 = vmatprep.subr.bf16.mxu0 0
      %3763 = vmatpush1.bf16.msra.mxu0 %v304
      %3764 = vmatprep.subr.bf16.mxu0 0
      %3765 = vmatpush1.bf16.msra.mxu0 %v305
      %3766 = vmatprep.subr.bf16.mxu0 0
      %3767 = vmatpush1.bf16.msra.mxu0 %v306
      %3768 = vmatprep.subr.bf16.mxu0 0
      %3769 = vmatpush1.bf16.msra.mxu0 %v307
      %3770 = vmatprep.subr.bf16.mxu0 0
      %3771 = vmatpush1.bf16.msra.mxu0 %v308
      %3772 = vmatprep.subr.bf16.mxu0 0
      %3773 = vmatpush1.bf16.msra.mxu0 %v309
      %3774 = vmatprep.subr.bf16.mxu0 0
      %3775 = vmatpush1.bf16.msra.mxu0 %v310
      %3776 = vmatprep.subr.bf16.mxu0 0
      %3777 = vmatpush1.bf16.msra.mxu0 %v311
      %3778 = vmatprep.subr.bf16.mxu0 0
      %3779 = vmatpush1.bf16.msra.mxu0 0
      %3780 = vmatprep.subr.bf16.mxu0 0
      %3781 = vmatpush1.bf16.msra.mxu0 0
      %3782 = vmatprep.subr.bf16.mxu0 0
      %3783 = vmatpush1.bf16.msra.mxu0 0
      %3784 = vmatprep.subr.bf16.mxu0 0
      %3785 = vmatpush1.bf16.msra.mxu0 0
      %3786 = vmatprep.subr.bf16.mxu0 0
      %3787 = vmatpush1.bf16.msra.mxu0 0
      %3788 = vmatprep.subr.bf16.mxu0 0
      %3789 = vmatpush1.bf16.msra.mxu0 0
      %3790 = vmatprep.subr.bf16.mxu0 0
      %3791 = vmatpush1.bf16.msra.mxu0 0
      %3792 = vmatprep.subr.bf16.mxu0 0
      %3793 = vmatpush1.bf16.msra.mxu0 0
      %3794 = vmatprep.mubr.bf16.mxu0 0
      %3795 = vmatmul.mubr.bf16.gmra.mrb[0].mxu0 %v3758
      %v3796 = vpop.f32.mrb[0].mxu0
      %v3797 = vadd.f32 0.0, %v3796
      %v3798 = vpop.f32.mrb[0].mxu0
      %v3799 = vpop.f32.mrb[0].mxu0
      %v3800 = vadd.f32 0.0, %v3799
      %v3801 = vpop.f32.mrb[0].mxu0
      %3802 = vmatprep.mubr.bf16.mxu0 0
      %3803 = vmatmul.mubr.bf16.gmra.mrb[0].mxu0 %v3759
      %v3804 = vpop.f32.mrb[0].mxu0
      %v3805 = vadd.f32 0.0, %v3804
      %v3806 = vpop.f32.mrb[0].mxu0
      %v3807 = vpop.f32.mrb[0].mxu0
      %v3808 = vadd.f32 0.0, %v3807
      %v3809 = vpop.f32.mrb[0].mxu0
      %3810 = vmatprep.mubr.bf16.mxu0 0
      %3811 = vmatmul.mubr.bf16.gmra.mrb[0].mxu0 %v3760
      %v3812 = vpop.f32.mrb[0].mxu0
      %v3813 = vadd.f32 0.0, %v3812
      %v3814 = vpop.f32.mrb[0].mxu0
      %v3815 = vpop.f32.mrb[0].mxu0
      %v3816 = vadd.f32 0.0, %v3815
      %v3817 = vpop.f32.mrb[0].mxu0
      %3818 = vmatprep.mubr.bf16.mxu0 0
      %3819 = vmatmul.mubr.bf16.gmra.mrb[0].mxu0 %v3761
      %v3820 = vpop.f32.mrb[0].mxu0
      %v3821 = vadd.f32 0.0, %v3820
      %v3822 = vpop.f32.mrb[0].mxu0
      %v3823 = vpop.f32.mrb[0].mxu0
      %v3824 = vadd.f32 0.0, %v3823
      %v3825 = vpop.f32.mrb[0].mxu0
      %3826 = vdwg.mxu0
      %v3827 = vpack.c.bf16 %v3800, %v3797
      %v3828 = vpack.c.bf16 %v3808, %v3805
      %v3829 = vpack.c.bf16 %v3816, %v3813
      %v3830 = vpack.c.bf16 %v3824, %v3821
      %3835 = vrot.lane.b32.xlu0 %v3827, 80
      %v3836 = vpop.permute.xlu0 %3835
      %3837 = vrot.lane.b32.xlu0 %v3828, 80
      %v3838 = vpop.permute.xlu0 %3837
      %3839 = vrot.lane.b32.xlu0 %v3829, 80
      %v3840 = vpop.permute.xlu0 %3839
      %3841 = vrot.lane.b32.xlu0 %v3830, 80
      %v3842 = vpop.permute.xlu0 %3841
      %3847 = vst.msk [vmem:[#allocation2 + $0x8] sm:$0xff] %vm1729, %v3836
      %3848 = vst.msk [vmem:[#allocation2 + $0x18] sm:$0xff] %vm1729, %v3838
      %3849 = vst.msk [vmem:[#allocation2 + $0x28] sm:$0xff] %vm1729, %v3840
      %3850 = vst.msk [vmem:[#allocation2 + $0x38] sm:$0xff] %vm1729, %v3842
      %v3851 = vld [vmem:[#allocation2] sm:$0xff]
      %v3852 = vld [vmem:[#allocation2 + $0x8] sm:$0xff]
      %v3853 = vld [vmem:[#allocation2 + $0x10] sm:$0xff]
      %v3854 = vld [vmem:[#allocation2 + $0x18] sm:$0xff]
      %v3855 = vld [vmem:[#allocation2 + $0x20] sm:$0xff]
      %v3856 = vld [vmem:[#allocation2 + $0x28] sm:$0xff]
      %v3857 = vld [vmem:[#allocation2 + $0x30] sm:$0xff]
      %v3858 = vld [vmem:[#allocation2 + $0x38] sm:$0xff]
      %v3859 = vld [vmem:[%s2] sm:$0xf]
      %v3860 = vld [vmem:[%s2 + $0x4] sm:$0xf]
      %v3861 = vld [vmem:[%s2 + $0x8] sm:$0xf]
      %v3862 = vld [vmem:[%s2 + $0xc] sm:$0xf]
      %v3863 = vld [vmem:[%s2 + $0x10] sm:$0xf]
      %v3864 = vld [vmem:[%s2 + $0x14] sm:$0xf]
      %v3865 = vld [vmem:[%s2 + $0x18] sm:$0xf]
      %v3866 = vld [vmem:[%s2 + $0x1c] sm:$0xf]
      %v3867 = vld [vmem:[%s2 + $0x20] sm:$0xf]
      %v3868 = vld [vmem:[%s2 + $0x24] sm:$0xf]
      %v3869 = vld [vmem:[%s2 + $0x28] sm:$0xf]
      %v3870 = vld [vmem:[%s2 + $0x2c] sm:$0xf]
      %v3871 = vld [vmem:[%s2 + $0x30] sm:$0xf]
      %v3872 = vld [vmem:[%s2 + $0x34] sm:$0xf]
      %v3873 = vld [vmem:[%s2 + $0x38] sm:$0xf]
      %v3874 = vld [vmem:[%s2 + $0x3c] sm:$0xf]
      %v3875 = vld [vmem:[%s2 + $0x40] sm:$0xf]
      %v3876 = vld [vmem:[%s2 + $0x44] sm:$0xf]
      %v3877 = vld [vmem:[%s2 + $0x48] sm:$0xf]
      %v3878 = vld [vmem:[%s2 + $0x4c] sm:$0xf]
      %v3879 = vld [vmem:[%s2 + $0x50] sm:$0xf]
      %v3880 = vld [vmem:[%s2 + $0x54] sm:$0xf]
      %v3881 = vld [vmem:[%s2 + $0x58] sm:$0xf]
      %v3882 = vld [vmem:[%s2 + $0x5c] sm:$0xf]
      %v3883 = vld [vmem:[%s2 + $0x60] sm:$0xf]
      %v3884 = vld [vmem:[%s2 + $0x64] sm:$0xf]
      %v3885 = vld [vmem:[%s2 + $0x68] sm:$0xf]
      %v3886 = vld [vmem:[%s3] sm:$0x1]
      %v3888 = vlaneseq
      %v3889 = vshrl.u32 %v3888, 7
      %v3890 = vsub.s32 0, %v3889
      %v3891 = vrot.slane %v3886, %v3890
      %v3920 = vunpack.c.l.b16 %v3859
      %v3921 = vunpack.c.l.b16 %v3860
      %v3922 = vunpack.c.l.b16 %v3861
      %v3923 = vunpack.c.l.b16 %v3862
      %v3924 = vunpack.c.l.b16 %v3863
      %v3925 = vunpack.c.l.b16 %v3864
      %v3926 = vunpack.c.l.b16 %v3865
      %v3927 = vunpack.c.l.b16 %v3866
      %v3928 = vunpack.c.l.b16 %v3867
      %v3929 = vunpack.c.l.b16 %v3868
      %v3930 = vunpack.c.l.b16 %v3869
      %v3931 = vunpack.c.l.b16 %v3870
      %v3932 = vunpack.c.l.b16 %v3871
      %v3933 = vunpack.c.l.b16 %v3872
      %v3934 = vunpack.c.l.b16 %v3873
      %v3935 = vunpack.c.l.b16 %v3874
      %v3936 = vunpack.c.l.b16 %v3875
      %v3937 = vunpack.c.l.b16 %v3876
      %v3938 = vunpack.c.l.b16 %v3877
      %v3939 = vunpack.c.l.b16 %v3878
      %v3940 = vunpack.c.l.b16 %v3879
      %v3941 = vunpack.c.l.b16 %v3880
      %v3942 = vunpack.c.l.b16 %v3881
      %v3943 = vunpack.c.l.b16 %v3882
      %v3944 = vunpack.c.l.b16 %v3883
      %v3945 = vunpack.c.l.b16 %v3884
      %v3946 = vunpack.c.l.b16 %v3885
      %v3947 = vpack.c.b16 %v3921, %v3920
      %v3948 = vpack.c.b16 %v3923, %v3922
      %v3949 = vpack.c.b16 %v3925, %v3924
      %v3950 = vpack.c.b16 %v3927, %v3926
      %v3951 = vpack.c.b16 %v3929, %v3928
      %v3952 = vpack.c.b16 %v3931, %v3930
      %v3953 = vpack.c.b16 %v3933, %v3932
      %v3954 = vpack.c.b16 %v3935, %v3934
      %v3955 = vpack.c.b16 %v3937, %v3936
      %v3956 = vpack.c.b16 %v3939, %v3938
      %v3957 = vpack.c.b16 %v3941, %v3940
      %v3958 = vpack.c.b16 %v3943, %v3942
      %v3959 = vpack.c.b16 %v3945, %v3944
      %v3960 = vpack.c.b16 %v3946, %v3946
      %vm3974 = vcmask 719872
      %v3976 = vsel %vm3974, %v3852, 0
      %v3979 = vsel %vm3974, %v3854, 0
      %v3982 = vsel %vm3974, %v3856, 0
      %v3985 = vsel %vm3974, %v3858, 0
      %vm3987 = vcmask 1043456
      %v3989 = vsel %vm3987, %v3960, 0
      %3991 = vmatprep.subr.bf16.mxu0 0
      %3992 = vmatpush1.bf16.msra.mxu0 %v3947
      %3993 = vmatprep.subr.bf16.mxu0 0
      %3994 = vmatpush1.bf16.msra.mxu0 %v3948
      %3995 = vmatprep.subr.bf16.mxu0 0
      %3996 = vmatpush1.bf16.msra.mxu0 %v3949
      %3997 = vmatprep.subr.bf16.mxu0 0
      %3998 = vmatpush1.bf16.msra.mxu0 %v3950
      %3999 = vmatprep.subr.bf16.mxu0 0
      %4000 = vmatpush1.bf16.msra.mxu0 %v3951
      %4001 = vmatprep.subr.bf16.mxu0 0
      %4002 = vmatpush1.bf16.msra.mxu0 %v3952
      %4003 = vmatprep.subr.bf16.mxu0 0
      %4004 = vmatpush1.bf16.msra.mxu0 %v3953
      %4005 = vmatprep.subr.bf16.mxu0 0
      %4006 = vmatpush1.bf16.msra.mxu0 %v3954
      %4007 = vmatprep.subr.bf16.mxu0 0
      %4008 = vmatpush1.bf16.msra.mxu0 %v3955
      %4009 = vmatprep.subr.bf16.mxu0 0
      %4010 = vmatpush1.bf16.msra.mxu0 %v3956
      %4011 = vmatprep.subr.bf16.mxu0 0
      %4012 = vmatpush1.bf16.msra.mxu0 %v3957
      %4013 = vmatprep.subr.bf16.mxu0 0
      %4014 = vmatpush1.bf16.msra.mxu0 %v3958
      %4015 = vmatprep.subr.bf16.mxu0 0
      %4016 = vmatpush1.bf16.msra.mxu0 %v3959
      %4017 = vmatprep.subr.bf16.mxu0 0
      %4018 = vmatpush1.bf16.msra.mxu0 %v3989
      %4019 = vmatprep.subr.bf16.mxu0 0
      %4020 = vmatpush1.bf16.msra.mxu0 0
      %4021 = vmatprep.subr.bf16.mxu0 0
      %4022 = vmatpush1.bf16.msra.mxu0 0
      %4023 = vmatprep.mubr.bf16.mxu0 %v3976
      %4024 = vmatmul.mubr.bf16.gmra.mrb[0].mxu0 %v3851
      %v4025 = vpop.f32.mrb[0].mxu0
      %v4026 = vadd.f32 %v3891, %v4025
      %v4027 = vpop.f32.mrb[0].mxu0
      %v4028 = vpop.f32.mrb[0].mxu0
      %v4029 = vadd.f32 %v3891, %v4028
      %v4030 = vpop.f32.mrb[0].mxu0
      %4031 = vmatprep.mubr.bf16.mxu0 %v3979
      %4032 = vmatmul.mubr.bf16.gmra.mrb[0].mxu0 %v3853
      %v4033 = vpop.f32.mrb[0].mxu0
      %v4034 = vadd.f32 %v3891, %v4033
      %v4035 = vpop.f32.mrb[0].mxu0
      %v4036 = vpop.f32.mrb[0].mxu0
      %v4037 = vadd.f32 %v3891, %v4036
      %v4038 = vpop.f32.mrb[0].mxu0
      %4039 = vmatprep.mubr.bf16.mxu0 %v3982
      %4040 = vmatmul.mubr.bf16.gmra.mrb[0].mxu0 %v3855
      %v4041 = vpop.f32.mrb[0].mxu0
      %v4042 = vadd.f32 %v3891, %v4041
      %v4043 = vpop.f32.mrb[0].mxu0
      %v4044 = vpop.f32.mrb[0].mxu0
      %v4045 = vadd.f32 %v3891, %v4044
      %v4046 = vpop.f32.mrb[0].mxu0
      %4047 = vmatprep.mubr.bf16.mxu0 %v3985
      %4048 = vmatmul.mubr.bf16.gmra.mrb[0].mxu0 %v3857
      %v4049 = vpop.f32.mrb[0].mxu0
      %v4050 = vadd.f32 %v3891, %v4049
      %v4051 = vpop.f32.mrb[0].mxu0
      %v4052 = vpop.f32.mrb[0].mxu0
      %v4053 = vadd.f32 %v3891, %v4052
      %v4054 = vpop.f32.mrb[0].mxu0
      %4055 = vdwg.mxu0
      %v4056 = vmax.f32 %v4026, 0.0
      %v4057 = vmax.f32 %v4029, 0.0
      %v4058 = vmax.f32 %v4034, 0.0
      %v4059 = vmax.f32 %v4037, 0.0
      %v4060 = vmax.f32 %v4042, 0.0
      %v4061 = vmax.f32 %v4045, 0.0
      %v4062 = vmax.f32 %v4050, 0.0
      %v4063 = vmax.f32 %v4053, 0.0
      %v4064 = vpack.c.bf16 %v4057, %v4056
      %v4065 = vpack.c.bf16 %v4059, %v4058
      %v4066 = vpack.c.bf16 %v4061, %v4060
      %v4067 = vpack.c.bf16 %v4063, %v4062
      %v4072 = vunpack.c.l.b16 %v4064
      %v4073 = vunpack.c.h.b16 %v4064
      %v4074 = vunpack.c.l.b16 %v4065
      %v4075 = vunpack.c.h.b16 %v4065
      %v4076 = vunpack.c.l.b16 %v4066
      %v4077 = vunpack.c.h.b16 %v4066
      %v4078 = vunpack.c.l.b16 %v4067
      %v4079 = vunpack.c.h.b16 %v4067
      %v4080 = vpack.c.b16 %v4072, %v4072
      %v4081 = vpack.c.b16 %v4073, %v4073
      %v4082 = vpack.c.b16 %v4074, %v4074
      %v4083 = vpack.c.b16 %v4075, %v4075
      %v4084 = vpack.c.b16 %v4076, %v4076
      %v4085 = vpack.c.b16 %v4077, %v4077
      %v4086 = vpack.c.b16 %v4078, %v4078
      %v4087 = vpack.c.b16 %v4079, %v4079
      %vm4096 = vcmask 257024
      %4097 = vst.msk [vmem:[%s199] sm:$0xf] %vm4096, %v4080
      %4098 = vst.msk [vmem:[%s199 + $0x4] sm:$0xf] %vm4096, %v4081
      %4099 = vst.msk [vmem:[%s199 + $0x8] sm:$0xf] %vm4096, %v4082
      %4100 = vst.msk [vmem:[%s199 + $0xc] sm:$0xf] %vm4096, %v4083
      %4101 = vst.msk [vmem:[%s199 + $0x10] sm:$0xf] %vm4096, %v4084
      %4102 = vst.msk [vmem:[%s199 + $0x14] sm:$0xf] %vm4096, %v4085
      %4103 = vst.msk [vmem:[%s199 + $0x18] sm:$0xf] %vm4096, %v4086
      %4104 = vst.msk [vmem:[%s199 + $0x1c] sm:$0xf] %vm4096, %v4087
      %s4105 = smul.u32 8, %s15
      %p4106 = scmp.lt.s32.totalorder %s4105, 15
      %s4107 = scalar_select %p4106, %s4105, 15
      %s4108 = smul.addr %s4107, 4
      %s4109 = scalar_lea.vmem %s4, %s4108
      // Predicated region
      $region37: #{tpu_custom_call.1} parent=35 // pred_check
        %p4110 = pneg %p122
      $region38: #{tpu_custom_call.1} parent=35 // pred_check_branch
        %4112 = sbr.rel (%p4110) target = $region40
      $region39: #{tpu_custom_call.1} parent=35 // pred_region
        %s4113 = smul.u32 8, %s15
      $region40: #{tpu_custom_call.1} parent=35 // pred_fallthru
        _
    $region36: #{tpu_custom_call.1} parent=5 // pred_fallthru
      _
    %p4114 = scmp.le.s32.totalorder 2, %s10
    // Predicated region
    $region41: #{tpu_custom_call.1} parent=5 // pred_check
      %p4115 = pneg %p4114
    $region42: #{tpu_custom_call.1} parent=5 // pred_check_branch
      %4117 = sbr.rel (%p4115) target = $region44
    $region43: #{tpu_custom_call.1} parent=5 // pred_region
      %s4118 = ssub.s32 %s10, 2
      // Predicated region
      $region45: #{tpu_custom_call.1} parent=43 // pred_check
        %p4119 = pneg %p128
      $region46: #{tpu_custom_call.1} parent=43 // pred_check_branch
        %4121 = sbr.rel (%p4119) target = $region48
      $region47: #{tpu_custom_call.1} parent=43 // pred_region
        %s4122 = smul.u32 8, %s16
        %p4123 = scmp.lt.s32.totalorder %s4122, 15
        %s4124 = scalar_select %p4123, %s4122, 15
        %s4125 = smul.addr %s4124, 4
        %s4126 = scalar_lea.vmem %s4, %s4125
      $region48: #{tpu_custom_call.1} parent=43 // pred_fallthru
        _
    $region44: #{tpu_custom_call.1} parent=5 // pred_fallthru
      _
  $region6: #{tpu_custom_call.1} parent=0 // loop_footer
    %s14 = sadd.s32 1, %s10
  $region7: #{tpu_custom_call.1} parent=0 // loop_footer_branch
    %9 = sbr.rel target = $region3
  $region8: #{tpu_custom_call.1} parent=0 // loop_exit
    _

</llo_original>
